<compile_context>
chip_gen: v5e
topology: v5e:2x2
jax: 0.10.0
libtpu: 0.0.40
codegen_flags: <defaults>
</compile_context>

<pallas_src>
import functools

import jax
import jax.numpy as jnp
from jax.experimental import pallas as pl
from jax.experimental.pallas import tpu as pltpu


# Extra zero rows appended after the flattened padded image: the shifted
# partial-result slices of the bottom-right taps (kh=2, kw=1/2) peek up to 2
# rows past the last halo row, but only into positions that are discarded
# (padded-width columns of the last output row).
_TAIL = 2


def _pick_row_tile(H, W, B, target_rows=1024, min_blocks=4):
    """Row tile th: divisor of H, sublane-friendly (th % 8 == 0 or th == H),
    matmul M-dim th*(W+2) <= target_rows when possible, and enough grid blocks
    (B * H/th >= min_blocks) that both TensorCores get >= 2 pipelined steps."""
    divs = [d for d in range(1, H + 1)
            if H % d == 0 and (d % 8 == 0 or d == H)]
    fit = [d for d in divs if d * (W + 2) <= target_rows] or [min(divs)]
    pipelined = [d for d in fit if B * (H // d) >= min_blocks]
    return max(pipelined or fit)


def _convlstm_kernel(xp_ref, w_ref, b_ref, c_ref, h_ref, c_out_ref, *,
                     hid, th, W):
    # xp_ref   : ((H+2)*(W+2) + 2, cin)  bf16  flattened padded image (batch b)
    # w_ref    : (9, cin, 4*hid)         bf16  one (cin, 4*hid) matrix per tap
    # b_ref    : (1, 4*hid)              f32
    # c_ref    : (th, W*hid)             f32   lane-dense cell state block
    # h_ref    : (th, W*hid)             x.dtype
    # c_out_ref: (th, W*hid)             f32
    Wp = W + 2
    n_out = th * Wp                    # output rows incl. the 2 junk width cols
    n_in = (th + 2) * Wp + _TAIL       # operand rows incl. halo rows (+tail)
    row0 = pl.program_id(1) * th

    start = row0 * Wp
    if (th * Wp) % 8 == 0:             # static at trace time
        start = pl.multiple_of(start, 8)
    x = xp_ref[pl.ds(start, n_in), :]                     # (n_in, cin) bf16

    # 3x3 conv by linearity: 9 matmuls on the SAME unshifted operand.  Tap
    # (kh, kw) contributes P[m + kh*Wp + kw] to output position m, so shift the
    # f32 partial (static sublane slice) and accumulate.  No per-tap input
    # slab copies, and the bf16 operand is loaded once per row block.
    z = None
    for kh in range(3):
        for kw in range(3):
            wk = w_ref[kh * 3 + kw]                       # (cin, 4*hid)
            p = jnp.dot(x, wk, preferred_element_type=jnp.float32)
            d = kh * Wp + kw
            part = p[d:d + n_out, :]                      # (n_out, 4*hid)
            z = part if z is None else z + part
    z = z + b_ref[...]                                    # (n_out, 4*hid) f32

    # Drop the 2 padded-width columns once, then gate math on valid pixels.
    zv = z.reshape(th, Wp, 4 * hid)[:, :W, :]             # (th, W, 4*hid)

    def _sigmoid(v):                                      # 1 EUP push per gate
        return 0.5 * jnp.tanh(0.5 * v) + 0.5

    i = _sigmoid(zv[..., 0 * hid:1 * hid])
    f = _sigmoid(zv[..., 1 * hid:2 * hid])
    o = _sigmoid(zv[..., 2 * hid:3 * hid])
    g = jnp.tanh(zv[..., 3 * hid:4 * hid])

    c_prev = c_ref[...].reshape(th, W, hid)               # f32
    c_next = f * c_prev + i * g
    h_next = o * jnp.tanh(c_next)

    # Lane-dense stores (W*hid >= 128 lanes at the shipped config).
    h_ref[...] = h_next.reshape(th, W * hid).astype(h_ref.dtype)
    c_out_ref[...] = c_next.reshape(th, W * hid)


def conv_lstm_cell(x, h, c, weight, bias, hid_ch):
    """One ConvLSTM cell step.

    x:      [B, in_ch,  H, W]   (NCHW, like PyTorch)
    h, c:   [B, hid_ch, H, W]
    weight: [4*hid_ch, in_ch + hid_ch, 3, 3]  (PyTorch OIHW conv weight)
    bias:   [4*hid_ch]
    returns (h_next, c_next): h_next in x.dtype, c_next in float32.
    """
    B, in_ch, H, W = x.shape
    cin = in_ch + hid_ch
    Wp = W + 2
    th = _pick_row_tile(H, W, B)
    n_rb = H // th
    n_in = (th + 2) * Wp + _TAIL
    flat_rows = (H + 2) * Wp + _TAIL

    # ---- glue: NHWC, channel concat, single spatial zero-pad, bf16 ----
    xh = jnp.concatenate([jnp.transpose(x, (0, 2, 3, 1)),
                          jnp.transpose(h, (0, 2, 3, 1))], axis=-1)
    xh = xh.astype(jnp.bfloat16)
    xp = jnp.pad(xh, ((0, 0), (1, 1), (1, 1), (0, 0)))    # (B, H+2, Wp, cin)
    xp = xp.reshape(B, (H + 2) * Wp, cin)
    xp = jnp.pad(xp, ((0, 0), (0, _TAIL), (0, 0)))        # (B, flat_rows, cin)

    # PyTorch OIHW -> (kh*3+kw, cin, 4*hid) bf16
    w = jnp.transpose(weight, (2, 3, 1, 0)).reshape(9, cin, 4 * hid_ch)
    w = w.astype(jnp.bfloat16)
    b2 = bias.reshape(1, 4 * hid_ch).astype(jnp.float32)

    # Lane-dense f32 cell state: (B, H, W*hid).
    c_in = jnp.transpose(c, (0, 2, 3, 1)).astype(jnp.float32)
    c_in = c_in.reshape(B, H, W * hid_ch)

    kernel = functools.partial(_convlstm_kernel, hid=hid_ch, th=th, W=W)

    itemsize_h = jnp.dtype(x.dtype).itemsize
    flops = 2 * 9 * n_in * cin * 4 * hid_ch * B * n_rb
    transcendentals = 5 * B * H * W * hid_ch
    bytes_accessed = (B * flat_rows * cin * 2              # xp (bf16)
                      + 9 * cin * 4 * hid_ch * 2           # weights (bf16)
                      + 4 * hid_ch * 4                     # bias
                      + B * H * W * hid_ch * 4             # c in (f32)
                      + B * H * W * hid_ch * itemsize_h    # h out
                      + B * H * W * hid_ch * 4)            # c out (f32)

    # Explicit scoped-VMEM budget from the block footprint (double-buffered
    # blocks + f32 intermediates), capped at 64 MiB so the request is valid on
    # v7x (64 MiB physical) as well as v5e/v6e.
    blk_bytes = (flat_rows * cin * 2
                 + 9 * cin * 4 * hid_ch * 2
                 + 4 * hid_ch * 4
                 + th * W * hid_ch * 4
                 + th * W * hid_ch * itemsize_h
                 + th * W * hid_ch * 4)
    interm_bytes = 3 * n_in * 4 * hid_ch * 4
    vmem_limit = int(min(max(2 * blk_bytes + interm_bytes + (4 << 20),
                             32 << 20), 64 << 20))

    h_flat, c_flat = pl.pallas_call(
        kernel,
        out_shape=(jax.ShapeDtypeStruct((B, H, W * hid_ch), x.dtype),
                   jax.ShapeDtypeStruct((B, H, W * hid_ch), jnp.float32)),
        grid_spec=pltpu.PrefetchScalarGridSpec(
            num_scalar_prefetch=0,
            grid=(B, n_rb),
            in_specs=[
                # whole flattened padded image for batch b; constant block
                # index across the inner row axis -> fetched once per batch.
                pl.BlockSpec((None, flat_rows, cin), lambda b, r: (b, 0, 0)),
                pl.BlockSpec((9, cin, 4 * hid_ch), lambda b, r: (0, 0, 0)),
                pl.BlockSpec((1, 4 * hid_ch), lambda b, r: (0, 0)),
                pl.BlockSpec((None, th, W * hid_ch), lambda b, r: (b, r, 0)),
            ],
            out_specs=[
                pl.BlockSpec((None, th, W * hid_ch), lambda b, r: (b, r, 0)),
                pl.BlockSpec((None, th, W * hid_ch), lambda b, r: (b, r, 0)),
            ],
        ),
        compiler_params=pltpu.CompilerParams(
            dimension_semantics=("parallel", "parallel"),
            vmem_limit_bytes=vmem_limit),
        cost_estimate=pl.CostEstimate(flops=flops,
                                      transcendentals=transcendentals,
                                      bytes_accessed=bytes_accessed),
    )(xp, w, b2, c_in)

    h_next = jnp.transpose(h_flat.reshape(B, H, W, hid_ch), (0, 3, 1, 2))
    c_next = jnp.transpose(c_flat.reshape(B, H, W, hid_ch), (0, 3, 1, 2))
    return h_next, c_next


def _reference(x, h, c, weight, bias, hid_ch, quantize_operands=False):
    """Pure-JAX reference mimicking the PyTorch forward (NCHW conv).

    With quantize_operands=True it applies the same bf16 rounding to the conv
    operands that the kernel does (f32 accumulation), for a tight check."""
    xh = jnp.concatenate([x, h], axis=1)
    w = weight
    if quantize_operands:
        xh = xh.astype(jnp.bfloat16).astype(jnp.float32)
        w = w.astype(jnp.bfloat16).astype(jnp.float32)
    z = jax.lax.conv_general_dilated(
        xh, w, window_strides=(1, 1), padding="SAME",
        dimension_numbers=("NCHW", "OIHW", "NCHW"))
    z = z + bias.reshape(1, -1, 1, 1)
    i, f, o, g = jnp.split(z, 4, axis=1)
    i, f, o = jax.nn.sigmoid(i), jax.nn.sigmoid(f), jax.nn.sigmoid(o)
    g = jnp.tanh(g)
    c_next = f * c + i * g
    h_next = o * jnp.tanh(c_next)
    return h_next, c_next


if __name__ == "__main__":
    B, in_ch, hid_ch, H, W = 2, 4, 32, 16, 16

    key = jax.random.PRNGKey(0)
    kx, kh, kc, kw, kb = jax.random.split(key, 5)

    x = jax.random.normal(kx, (B, in_ch, H, W), dtype=jnp.float32)
    h0 = jax.random.normal(kh, (B, hid_ch, H, W), dtype=jnp.float32) * 0.1
    c0 = jax.random.normal(kc, (B, hid_ch, H, W), dtype=jnp.float32) * 0.1

    # Deterministic parameter init (Conv2d(in_ch+hid_ch, 4*hid_ch, 3, pad=1)).
    fan_in = (in_ch + hid_ch) * 3 * 3
    bound = 1.0 / (fan_in ** 0.5)
    weight = jax.random.uniform(kw, (4 * hid_ch, in_ch + hid_ch, 3, 3),
                                dtype=jnp.float32, minval=-bound, maxval=bound)
    bias = jax.random.uniform(kb, (4 * hid_ch,), dtype=jnp.float32,
                              minval=-bound, maxval=bound)

    h_next, c_next = conv_lstm_cell(x, h0, c0, weight, bias, hid_ch)
    jax.block_until_ready((h_next, c_next))

    # Tight check against a reference that uses the same bf16-rounded operands.
    h_rq, c_rq = _reference(x, h0, c0, weight, bias, hid_ch,
                            quantize_operands=True)
    assert jnp.allclose(h_next, h_rq, atol=2e-4, rtol=2e-4)
    assert jnp.allclose(c_next, c_rq, atol=2e-4, rtol=2e-4)

    # Looser sanity check against the full-f32 PyTorch-equivalent reference
    # (difference is only the bf16 operand quantization of the conv).
    h_rf, c_rf = _reference(x, h0, c0, weight, bias, hid_ch)
    assert jnp.allclose(h_next, h_rf, atol=2e-2, rtol=2e-2)
    assert jnp.allclose(c_next, c_rf, atol=2e-2, rtol=2e-2)

    print("KERNEL_OK")
</pallas_src>

<mosaic_0001>
module attributes {stable_mosaic.version = 11 : i64} {
  func.func @_convlstm_kernel(%arg0: i32, %arg1: i32, %arg2: memref<1x326x36xbf16, #tpu.memory_space<vmem>>, %arg3: memref<9x36x128xbf16, #tpu.memory_space<vmem>>, %arg4: memref<1x128xf32, #tpu.memory_space<vmem>>, %arg5: memref<1x8x512xf32, #tpu.memory_space<vmem>>, %arg6: memref<1x8x512xf32, #tpu.memory_space<vmem>>, %arg7: memref<1x8x512xf32, #tpu.memory_space<vmem>>) attributes {dimension_semantics = [#tpu.dimension_semantics<parallel>, #tpu.dimension_semantics<parallel>], iteration_bounds = array<i64: 2, 2>, scalar_prefetch = 0 : i64, scratch_operands = 0 : i64, tpu.core_type = #tpu.core_type<tc>, window_params = [{transform_indices = @transform_0, window_bounds = array<i64: 1, 326, 36>}, {pipeline_mode = #tpu.pipeline_mode<synchronous>, transform_indices = @transform_1, window_bounds = array<i64: 9, 36, 128>}, {pipeline_mode = #tpu.pipeline_mode<synchronous>, transform_indices = @transform_2, window_bounds = array<i64: 1, 128>}, {transform_indices = @transform_3, window_bounds = array<i64: 1, 8, 512>}, {transform_indices = @transform_4, window_bounds = array<i64: 1, 8, 512>}, {transform_indices = @transform_5, window_bounds = array<i64: 1, 8, 512>}]} {
    %c8_i32 = arith.constant 8 : i32
    %0 = arith.muli %arg1, %c8_i32 : i32
    %c18_i32 = arith.constant 18 : i32
    %1 = arith.muli %0, %c18_i32 : i32
    %2 = tpu.assume_multiple %1, 8 : i32
    %c0 = arith.constant 0 : index
    %3 = arith.index_cast %2 : i32 to index
    %c0_0 = arith.constant 0 : index
    %4 = vector.load %arg2[%c0, %3, %c0_0] : memref<1x326x36xbf16, #tpu.memory_space<vmem>>, vector<1x182x36xbf16>
    %5 = vector.shape_cast %4 : vector<1x182x36xbf16> to vector<182x36xbf16>
    %c0_1 = arith.constant 0 : index
    %c0_2 = arith.constant 0 : index
    %c0_3 = arith.constant 0 : index
    %6 = vector.load %arg3[%c0_1, %c0_2, %c0_3] : memref<9x36x128xbf16, #tpu.memory_space<vmem>>, vector<1x36x128xbf16>
    %7 = vector.shape_cast %6 : vector<1x36x128xbf16> to vector<36x128xbf16>
    %cst = arith.constant dense<0.000000e+00> : vector<182x128xf32>
    %8 = tpu.matmul %5, %7, %cst {dimension_numbers = #tpu.dot_dimension_numbers<[1], [0], [0], [1], [0, 0, 1, 1], [], []>} : vector<182x36xbf16>, vector<36x128xbf16>, vector<182x128xf32> -> vector<182x128xf32>
    %9 = vector.extract_strided_slice %8 {offsets = [0, 0], sizes = [144, 128], strides = [1, 1]} : vector<182x128xf32> to vector<144x128xf32>
    %c1 = arith.constant 1 : index
    %c0_4 = arith.constant 0 : index
    %c0_5 = arith.constant 0 : index
    %10 = vector.load %arg3[%c1, %c0_4, %c0_5] : memref<9x36x128xbf16, #tpu.memory_space<vmem>>, vector<1x36x128xbf16>
    %11 = vector.shape_cast %10 : vector<1x36x128xbf16> to vector<36x128xbf16>
    %cst_6 = arith.constant dense<0.000000e+00> : vector<182x128xf32>
    %12 = tpu.matmul %5, %11, %cst_6 {dimension_numbers = #tpu.dot_dimension_numbers<[1], [0], [0], [1], [0, 0, 1, 1], [], []>} : vector<182x36xbf16>, vector<36x128xbf16>, vector<182x128xf32> -> vector<182x128xf32>
    %13 = vector.extract_strided_slice %12 {offsets = [1, 0], sizes = [144, 128], strides = [1, 1]} : vector<182x128xf32> to vector<144x128xf32>
    %14 = arith.addf %9, %13 : vector<144x128xf32>
    %c2 = arith.constant 2 : index
    %c0_7 = arith.constant 0 : index
    %c0_8 = arith.constant 0 : index
    %15 = vector.load %arg3[%c2, %c0_7, %c0_8] : memref<9x36x128xbf16, #tpu.memory_space<vmem>>, vector<1x36x128xbf16>
    %16 = vector.shape_cast %15 : vector<1x36x128xbf16> to vector<36x128xbf16>
    %cst_9 = arith.constant dense<0.000000e+00> : vector<182x128xf32>
    %17 = tpu.matmul %5, %16, %cst_9 {dimension_numbers = #tpu.dot_dimension_numbers<[1], [0], [0], [1], [0, 0, 1, 1], [], []>} : vector<182x36xbf16>, vector<36x128xbf16>, vector<182x128xf32> -> vector<182x128xf32>
    %18 = vector.extract_strided_slice %17 {offsets = [2, 0], sizes = [144, 128], strides = [1, 1]} : vector<182x128xf32> to vector<144x128xf32>
    %19 = arith.addf %14, %18 : vector<144x128xf32>
    %c3 = arith.constant 3 : index
    %c0_10 = arith.constant 0 : index
    %c0_11 = arith.constant 0 : index
    %20 = vector.load %arg3[%c3, %c0_10, %c0_11] : memref<9x36x128xbf16, #tpu.memory_space<vmem>>, vector<1x36x128xbf16>
    %21 = vector.shape_cast %20 : vector<1x36x128xbf16> to vector<36x128xbf16>
    %cst_12 = arith.constant dense<0.000000e+00> : vector<182x128xf32>
    %22 = tpu.matmul %5, %21, %cst_12 {dimension_numbers = #tpu.dot_dimension_numbers<[1], [0], [0], [1], [0, 0, 1, 1], [], []>} : vector<182x36xbf16>, vector<36x128xbf16>, vector<182x128xf32> -> vector<182x128xf32>
    %23 = vector.extract_strided_slice %22 {offsets = [18, 0], sizes = [144, 128], strides = [1, 1]} : vector<182x128xf32> to vector<144x128xf32>
    %24 = arith.addf %19, %23 : vector<144x128xf32>
    %c4 = arith.constant 4 : index
    %c0_13 = arith.constant 0 : index
    %c0_14 = arith.constant 0 : index
    %25 = vector.load %arg3[%c4, %c0_13, %c0_14] : memref<9x36x128xbf16, #tpu.memory_space<vmem>>, vector<1x36x128xbf16>
    %26 = vector.shape_cast %25 : vector<1x36x128xbf16> to vector<36x128xbf16>
    %cst_15 = arith.constant dense<0.000000e+00> : vector<182x128xf32>
    %27 = tpu.matmul %5, %26, %cst_15 {dimension_numbers = #tpu.dot_dimension_numbers<[1], [0], [0], [1], [0, 0, 1, 1], [], []>} : vector<182x36xbf16>, vector<36x128xbf16>, vector<182x128xf32> -> vector<182x128xf32>
    %28 = vector.extract_strided_slice %27 {offsets = [19, 0], sizes = [144, 128], strides = [1, 1]} : vector<182x128xf32> to vector<144x128xf32>
    %29 = arith.addf %24, %28 : vector<144x128xf32>
    %c5 = arith.constant 5 : index
    %c0_16 = arith.constant 0 : index
    %c0_17 = arith.constant 0 : index
    %30 = vector.load %arg3[%c5, %c0_16, %c0_17] : memref<9x36x128xbf16, #tpu.memory_space<vmem>>, vector<1x36x128xbf16>
    %31 = vector.shape_cast %30 : vector<1x36x128xbf16> to vector<36x128xbf16>
    %cst_18 = arith.constant dense<0.000000e+00> : vector<182x128xf32>
    %32 = tpu.matmul %5, %31, %cst_18 {dimension_numbers = #tpu.dot_dimension_numbers<[1], [0], [0], [1], [0, 0, 1, 1], [], []>} : vector<182x36xbf16>, vector<36x128xbf16>, vector<182x128xf32> -> vector<182x128xf32>
    %33 = vector.extract_strided_slice %32 {offsets = [20, 0], sizes = [144, 128], strides = [1, 1]} : vector<182x128xf32> to vector<144x128xf32>
    %34 = arith.addf %29, %33 : vector<144x128xf32>
    %c6 = arith.constant 6 : index
    %c0_19 = arith.constant 0 : index
    %c0_20 = arith.constant 0 : index
    %35 = vector.load %arg3[%c6, %c0_19, %c0_20] : memref<9x36x128xbf16, #tpu.memory_space<vmem>>, vector<1x36x128xbf16>
    %36 = vector.shape_cast %35 : vector<1x36x128xbf16> to vector<36x128xbf16>
    %cst_21 = arith.constant dense<0.000000e+00> : vector<182x128xf32>
    %37 = tpu.matmul %5, %36, %cst_21 {dimension_numbers = #tpu.dot_dimension_numbers<[1], [0], [0], [1], [0, 0, 1, 1], [], []>} : vector<182x36xbf16>, vector<36x128xbf16>, vector<182x128xf32> -> vector<182x128xf32>
    %38 = vector.extract_strided_slice %37 {offsets = [36, 0], sizes = [144, 128], strides = [1, 1]} : vector<182x128xf32> to vector<144x128xf32>
    %39 = arith.addf %34, %38 : vector<144x128xf32>
    %c7 = arith.constant 7 : index
    %c0_22 = arith.constant 0 : index
    %c0_23 = arith.constant 0 : index
    %40 = vector.load %arg3[%c7, %c0_22, %c0_23] : memref<9x36x128xbf16, #tpu.memory_space<vmem>>, vector<1x36x128xbf16>
    %41 = vector.shape_cast %40 : vector<1x36x128xbf16> to vector<36x128xbf16>
    %cst_24 = arith.constant dense<0.000000e+00> : vector<182x128xf32>
    %42 = tpu.matmul %5, %41, %cst_24 {dimension_numbers = #tpu.dot_dimension_numbers<[1], [0], [0], [1], [0, 0, 1, 1], [], []>} : vector<182x36xbf16>, vector<36x128xbf16>, vector<182x128xf32> -> vector<182x128xf32>
    %43 = vector.extract_strided_slice %42 {offsets = [37, 0], sizes = [144, 128], strides = [1, 1]} : vector<182x128xf32> to vector<144x128xf32>
    %44 = arith.addf %39, %43 : vector<144x128xf32>
    %c8 = arith.constant 8 : index
    %c0_25 = arith.constant 0 : index
    %c0_26 = arith.constant 0 : index
    %45 = vector.load %arg3[%c8, %c0_25, %c0_26] : memref<9x36x128xbf16, #tpu.memory_space<vmem>>, vector<1x36x128xbf16>
    %46 = vector.shape_cast %45 : vector<1x36x128xbf16> to vector<36x128xbf16>
    %cst_27 = arith.constant dense<0.000000e+00> : vector<182x128xf32>
    %47 = tpu.matmul %5, %46, %cst_27 {dimension_numbers = #tpu.dot_dimension_numbers<[1], [0], [0], [1], [0, 0, 1, 1], [], []>} : vector<182x36xbf16>, vector<36x128xbf16>, vector<182x128xf32> -> vector<182x128xf32>
    %48 = vector.extract_strided_slice %47 {offsets = [38, 0], sizes = [144, 128], strides = [1, 1]} : vector<182x128xf32> to vector<144x128xf32>
    %49 = arith.addf %44, %48 : vector<144x128xf32>
    %c0_28 = arith.constant 0 : index
    %c0_29 = arith.constant 0 : index
    %50 = vector.load %arg4[%c0_28, %c0_29] : memref<1x128xf32, #tpu.memory_space<vmem>>, vector<1x128xf32>
    %51 = vector.broadcast %50 : vector<1x128xf32> to vector<144x128xf32>
    %52 = arith.addf %49, %51 : vector<144x128xf32>
    %53 = vector.shape_cast %52 : vector<144x128xf32> to vector<8x18x128xf32>
    %54 = vector.extract_strided_slice %53 {offsets = [0, 0, 0], sizes = [8, 16, 128], strides = [1, 1, 1]} : vector<8x18x128xf32> to vector<8x16x128xf32>
    %55 = vector.extract_strided_slice %54 {offsets = [0, 0, 0], sizes = [8, 16, 32], strides = [1, 1, 1]} : vector<8x16x128xf32> to vector<8x16x32xf32>
    %cst_30 = arith.constant 5.000000e-01 : f32
    %56 = vector.broadcast %cst_30 : f32 to vector<8x16x32xf32>
    %57 = arith.mulf %56, %55 : vector<8x16x32xf32>
    %58 = math.tanh %57 : vector<8x16x32xf32>
    %cst_31 = arith.constant 5.000000e-01 : f32
    %59 = vector.broadcast %cst_31 : f32 to vector<8x16x32xf32>
    %60 = arith.mulf %59, %58 : vector<8x16x32xf32>
    %cst_32 = arith.constant 5.000000e-01 : f32
    %61 = vector.broadcast %cst_32 : f32 to vector<8x16x32xf32>
    %62 = arith.addf %60, %61 : vector<8x16x32xf32>
    %63 = vector.extract_strided_slice %54 {offsets = [0, 0, 32], sizes = [8, 16, 32], strides = [1, 1, 1]} : vector<8x16x128xf32> to vector<8x16x32xf32>
    %cst_33 = arith.constant 5.000000e-01 : f32
    %64 = vector.broadcast %cst_33 : f32 to vector<8x16x32xf32>
    %65 = arith.mulf %64, %63 : vector<8x16x32xf32>
    %66 = math.tanh %65 : vector<8x16x32xf32>
    %cst_34 = arith.constant 5.000000e-01 : f32
    %67 = vector.broadcast %cst_34 : f32 to vector<8x16x32xf32>
    %68 = arith.mulf %67, %66 : vector<8x16x32xf32>
    %cst_35 = arith.constant 5.000000e-01 : f32
    %69 = vector.broadcast %cst_35 : f32 to vector<8x16x32xf32>
    %70 = arith.addf %68, %69 : vector<8x16x32xf32>
    %71 = vector.extract_strided_slice %54 {offsets = [0, 0, 64], sizes = [8, 16, 32], strides = [1, 1, 1]} : vector<8x16x128xf32> to vector<8x16x32xf32>
    %cst_36 = arith.constant 5.000000e-01 : f32
    %72 = vector.broadcast %cst_36 : f32 to vector<8x16x32xf32>
    %73 = arith.mulf %72, %71 : vector<8x16x32xf32>
    %74 = math.tanh %73 : vector<8x16x32xf32>
    %cst_37 = arith.constant 5.000000e-01 : f32
    %75 = vector.broadcast %cst_37 : f32 to vector<8x16x32xf32>
    %76 = arith.mulf %75, %74 : vector<8x16x32xf32>
    %cst_38 = arith.constant 5.000000e-01 : f32
    %77 = vector.broadcast %cst_38 : f32 to vector<8x16x32xf32>
    %78 = arith.addf %76, %77 : vector<8x16x32xf32>
    %79 = vector.extract_strided_slice %54 {offsets = [0, 0, 96], sizes = [8, 16, 32], strides = [1, 1, 1]} : vector<8x16x128xf32> to vector<8x16x32xf32>
    %80 = math.tanh %79 : vector<8x16x32xf32>
    %c0_39 = arith.constant 0 : index
    %c0_40 = arith.constant 0 : index
    %c0_41 = arith.constant 0 : index
    %81 = vector.load %arg5[%c0_39, %c0_40, %c0_41] : memref<1x8x512xf32, #tpu.memory_space<vmem>>, vector<1x8x512xf32>
    %82 = vector.shape_cast %81 : vector<1x8x512xf32> to vector<8x512xf32>
    %83 = vector.shape_cast %82 : vector<8x512xf32> to vector<8x16x32xf32>
    %84 = arith.mulf %70, %83 : vector<8x16x32xf32>
    %85 = arith.mulf %62, %80 : vector<8x16x32xf32>
    %86 = arith.addf %84, %85 : vector<8x16x32xf32>
    %87 = math.tanh %86 : vector<8x16x32xf32>
    %88 = arith.mulf %78, %87 : vector<8x16x32xf32>
    %89 = vector.shape_cast %88 : vector<8x16x32xf32> to vector<8x512xf32>
    %c0_42 = arith.constant 0 : index
    %c0_43 = arith.constant 0 : index
    %c0_44 = arith.constant 0 : index
    %90 = vector.load %arg6[%c0_42, %c0_43, %c0_44] : memref<1x8x512xf32, #tpu.memory_space<vmem>>, vector<1x8x512xf32>
    %91 = vector.shape_cast %90 : vector<1x8x512xf32> to vector<8x512xf32>
    %92 = vector.shape_cast %89 : vector<8x512xf32> to vector<1x8x512xf32>
    tpu.vector_store %arg6[%c0_42, %c0_43, %c0_44], %92 {strides = array<i32>} : memref<1x8x512xf32, #tpu.memory_space<vmem>>, vector<1x8x512xf32>,
    %93 = vector.shape_cast %86 : vector<8x16x32xf32> to vector<8x512xf32>
    %c0_45 = arith.constant 0 : index
    %c0_46 = arith.constant 0 : index
    %c0_47 = arith.constant 0 : index
    %94 = vector.load %arg7[%c0_45, %c0_46, %c0_47] : memref<1x8x512xf32, #tpu.memory_space<vmem>>, vector<1x8x512xf32>
    %95 = vector.shape_cast %94 : vector<1x8x512xf32> to vector<8x512xf32>
    %96 = vector.shape_cast %93 : vector<8x512xf32> to vector<1x8x512xf32>
    tpu.vector_store %arg7[%c0_45, %c0_46, %c0_47], %96 {strides = array<i32>} : memref<1x8x512xf32, #tpu.memory_space<vmem>>, vector<1x8x512xf32>,
    return
  }
  func.func @transform_0(%arg0: i32, %arg1: i32) -> (i32, i32, i32) {
    %c0_i32 = arith.constant 0 : i32
    %c0_i32_0 = arith.constant 0 : i32
    %c0_i32_1 = arith.constant 0 : i32
    return %arg0, %c0_i32, %c0_i32_0 : i32, i32, i32
  }
  func.func @transform_1(%arg0: i32, %arg1: i32) -> (i32, i32, i32) {
    %c0_i32 = arith.constant 0 : i32
    %c0_i32_0 = arith.constant 0 : i32
    %c0_i32_1 = arith.constant 0 : i32
    %c0_i32_2 = arith.constant 0 : i32
    return %c0_i32, %c0_i32_0, %c0_i32_1 : i32, i32, i32
  }
  func.func @transform_2(%arg0: i32, %arg1: i32) -> (i32, i32) {
    %c0_i32 = arith.constant 0 : i32
    %c0_i32_0 = arith.constant 0 : i32
    %c0_i32_1 = arith.constant 0 : i32
    return %c0_i32, %c0_i32_0 : i32, i32
  }
  func.func @transform_3(%arg0: i32, %arg1: i32) -> (i32, i32, i32) {
    %c0_i32 = arith.constant 0 : i32
    %c0_i32_0 = arith.constant 0 : i32
    return %arg0, %arg1, %c0_i32 : i32, i32, i32
  }
  func.func @transform_4(%arg0: i32, %arg1: i32) -> (i32, i32, i32) {
    %c0_i32 = arith.constant 0 : i32
    %c0_i32_0 = arith.constant 0 : i32
    return %arg0, %arg1, %c0_i32 : i32, i32, i32
  }
  func.func @transform_5(%arg0: i32, %arg1: i32) -> (i32, i32, i32) {
    %c0_i32 = arith.constant 0 : i32
    %c0_i32_0 = arith.constant 0 : i32
    return %arg0, %arg1, %c0_i32 : i32, i32, i32
  }
}

</mosaic_0001>

<llo_original>
// kernel: tpu_custom_call.1
$region0: #{tpu_custom_call.1}
  #allocation0 [shape = 'u32[]', space=smem, size = 0x4, offset = 0x4, fixed_abs, tag = 'smem constant byte address 0x4 - core index']
  #allocation1 [shape = 'u32[72,128]{1,0:T(1,128)}', space=vmem, size = 0x9000, scoped, tag = 'internal scratch']
  %s0 = inlined_call_operand.vmem [shape: bf16[2,326,36], index: 0, kind: input, shape index: {}]
  %s1 = inlined_call_operand.vmem [shape: bf16[9,36,128], index: 1, kind: input, shape index: {}]
  %s2 = inlined_call_operand.vmem [shape: f32[1,128], index: 2, kind: input, shape index: {}]
  %s3 = inlined_call_operand.vmem [shape: f32[2,16,512], index: 3, kind: input, shape index: {}]
  %s4 = inlined_call_operand.hbm [shape: f32[2,16,512], index: 4, kind: output, shape index: {0}]
  %s5 = inlined_call_operand.hbm [shape: f32[2,16,512], index: 5, kind: output, shape index: {1}]
  %6 = xla_tuple %s4, %s5
  %s7 = sld [smem:[#allocation0]]
  $region57: #{tpu_custom_call.1} parent=0
    _
  %s9 = ssub.s32 1, %s7
  %s10 = scalar_select 0, %s9, %s7
  $region1: #{tpu_custom_call.1} parent=0
    #allocation2 [shape = 'u8[32768]{0}', space=vmem, size = 0x8000, scoped, tag = 'output window, operand 0']
    #allocation3 [shape = 's32[2]{0}', space=sflag, size = 0x8, scoped, tag = 'scoped memory for tpu_custom_call.1']
    #allocation4 [shape = 'u8[32768]{0}', space=vmem, size = 0x8000, scoped, tag = 'output window, operand 1']
    #allocation5 [shape = 's32[2]{0}', space=sflag, size = 0x8, scoped, tag = 'scoped memory for tpu_custom_call.1']
    %11 = vsyncpa [#allocation3], 0
    %s12 = scalar_lea.sflag [#allocation3], 1
    %13 = vsyncpa %s12, 0
    %14 = vsyncpa [#allocation5], 0
    %s15 = scalar_lea.sflag [#allocation5], 1
    %16 = vsyncpa %s15, 0
    loop: start=0, step=1, limit=6
    $region2: #{tpu_custom_call.1} parent=1 // loop_pre_header
      _
    $region3: #{tpu_custom_call.1} parent=1 // loop_header
      %s18 = sphi 0, %s22
      %p19 = scmp.ge.s32.totalorder %s18, 6
      %s25 = sphi 0, %s37
      %s26 = sphi 0, %s33
      %s27 = sphi 0, %s25
      %s28 = sphi 0, %s26
      %s29 = sphi 0, %s27
      %s30 = sphi 0, %s28
      %s40 = sphi 0, %s42
      %s43 = sphi 0, %s40
      %s44 = sphi 0, %s43
      %s60 = sphi 0, %s44
      %s64 = sphi 0, %s64
      %s66 = sphi 0, %s64
      %s67 = sphi 0, %s66
      %s81 = sphi 0, %s67
      %s85 = sphi 0, %s85
      %s87 = sphi 0, %s85
      %s88 = sphi 0, %s87
      %s102 = sphi 0, %s88
      %s110 = sphi 0, %s112
      %s113 = sphi 0, %s110
      %s114 = sphi 0, %s113
      %s130 = sphi 0, %s114
      %s138 = sphi 0, %s140
      %s141 = sphi 0, %s138
      %s142 = sphi 0, %s141
      %s158 = sphi 0, %s142
      %s166 = sphi 0, %s168
      %s169 = sphi 0, %s166
      %s170 = sphi 0, %s169
      %s186 = sphi 0, %s170
    $region4: #{tpu_custom_call.1} parent=1 // loop_header_branch
      %21 = sbr.rel (%p19) target = $region8
    $region5: #{tpu_custom_call.1} parent=1 // loop_body
      %s23 = ssub.s32 %s18, 1
      %s24 = ssub.s32 %s18, 2
      %s31 = sadd.s32 1, %s26
      %p32 = scmp.ge.s32.totalorder %s31, 2
      %s33 = scalar_select %p32, 0, %s31
      %s34 = sadd.s32 1, %s25
      %s35 = scalar_select %p32, %s34, %s25
      %p36 = scmp.ge.s32.totalorder %s35, 2
      %s37 = scalar_select %p36, 0, %s35
      %s38 = ssub.s32 %s25, %s37
      %p39 = scmp.eq.s32.totalorder %s38, 0
      %s41 = sadd.s32 %s40, 1
      %s42 = scalar_select %p39, %s40, %s41
      %p45 = pneg %p39
      %p46 = scmp.eq.s32.totalorder %s18, 3
      %p47 = por %p45, %p46
      %p48 = scmp.ne.s32.totalorder %s40, %s43
      %p49 = scmp.eq.s32.totalorder %s18, 0
      %p50 = por %p48, %p49
      %p51 = scmp.ne.s32.totalorder %s40, %s43
      %p52 = scmp.eq.s32.totalorder %s23, 3
      %p53 = por %p51, %p52
      %p54 = scmp.ne.s32.totalorder %s43, %s44
      %p55 = scmp.eq.s32.totalorder %s23, 0
      %p56 = por %p54, %p55
      %p57 = scmp.ne.s32.totalorder %s43, %s44
      %p58 = scmp.eq.s32.totalorder %s24, 3
      %p59 = por %p57, %p58
      %p61 = scmp.ne.s32.totalorder %s44, %s60
      %p62 = scmp.eq.s32.totalorder %s24, 0
      %p63 = por %p61, %p62
      %s65 = sadd.s32 %s64, 1
      %p68 = scmp.eq.s32.totalorder %s18, 3
      %p69 = scmp.ne.s32.totalorder %s64, %s66
      %p70 = scmp.eq.s32.totalorder %s18, 0
      %p71 = por %p69, %p70
      %p72 = scmp.ne.s32.totalorder %s64, %s66
      %p73 = scmp.eq.s32.totalorder %s23, 3
      %p74 = por %p72, %p73
      %p75 = scmp.ne.s32.totalorder %s66, %s67
      %p76 = scmp.eq.s32.totalorder %s23, 0
      %p77 = por %p75, %p76
      %p78 = scmp.ne.s32.totalorder %s66, %s67
      %p79 = scmp.eq.s32.totalorder %s24, 3
      %p80 = por %p78, %p79
      %p82 = scmp.ne.s32.totalorder %s67, %s81
      %p83 = scmp.eq.s32.totalorder %s24, 0
      %p84 = por %p82, %p83
      %s86 = sadd.s32 %s85, 1
      %p89 = scmp.eq.s32.totalorder %s18, 3
      %p90 = scmp.ne.s32.totalorder %s85, %s87
      %p91 = scmp.eq.s32.totalorder %s18, 0
      %p92 = por %p90, %p91
      %p93 = scmp.ne.s32.totalorder %s85, %s87
      %p94 = scmp.eq.s32.totalorder %s23, 3
      %p95 = por %p93, %p94
      %p96 = scmp.ne.s32.totalorder %s87, %s88
      %p97 = scmp.eq.s32.totalorder %s23, 0
      %p98 = por %p96, %p97
      %p99 = scmp.ne.s32.totalorder %s87, %s88
      %p100 = scmp.eq.s32.totalorder %s24, 3
      %p101 = por %p99, %p100
      %p103 = scmp.ne.s32.totalorder %s88, %s102
      %p104 = scmp.eq.s32.totalorder %s24, 0
      %p105 = por %p103, %p104
      %s106 = ssub.s32 %s25, %s37
      %s107 = ssub.s32 %s26, %s33
      %s108 = sor.u32 %s106, %s107
      %p109 = scmp.eq.s32.totalorder %s108, 0
      %s111 = sadd.s32 %s110, 1
      %s112 = scalar_select %p109, %s110, %s111
      %p115 = pneg %p109
      %p116 = scmp.eq.s32.totalorder %s18, 3
      %p117 = por %p115, %p116
      %p118 = scmp.ne.s32.totalorder %s110, %s113
      %p119 = scmp.eq.s32.totalorder %s18, 0
      %p120 = por %p118, %p119
      %p121 = scmp.ne.s32.totalorder %s110, %s113
      %p122 = scmp.eq.s32.totalorder %s23, 3
      %p123 = por %p121, %p122
      %p124 = scmp.ne.s32.totalorder %s113, %s114
      %p125 = scmp.eq.s32.totalorder %s23, 0
      %p126 = por %p124, %p125
      %p127 = scmp.ne.s32.totalorder %s113, %s114
      %p128 = scmp.eq.s32.totalorder %s24, 3
      %p129 = por %p127, %p128
      %p131 = scmp.ne.s32.totalorder %s114, %s130
      %p132 = scmp.eq.s32.totalorder %s24, 0
      %p133 = por %p131, %p132
      %s134 = ssub.s32 %s25, %s37
      %s135 = ssub.s32 %s26, %s33
      %s136 = sor.u32 %s134, %s135
      %p137 = scmp.eq.s32.totalorder %s136, 0
      %s139 = sadd.s32 %s138, 1
      %s140 = scalar_select %p137, %s138, %s139
      %p143 = pneg %p137
      %p144 = scmp.eq.s32.totalorder %s18, 3
      %p145 = por %p143, %p144
      %p146 = scmp.ne.s32.totalorder %s138, %s141
      %p147 = scmp.eq.s32.totalorder %s18, 0
      %p148 = por %p146, %p147
      %p149 = scmp.ne.s32.totalorder %s138, %s141
      %p150 = scmp.eq.s32.totalorder %s23, 3
      %p151 = por %p149, %p150
      %p152 = scmp.ne.s32.totalorder %s141, %s142
      %p153 = scmp.eq.s32.totalorder %s23, 0
      %p154 = por %p152, %p153
      %p155 = scmp.ne.s32.totalorder %s141, %s142
      %p156 = scmp.eq.s32.totalorder %s24, 3
      %p157 = por %p155, %p156
      %p159 = scmp.ne.s32.totalorder %s142, %s158
      %p160 = scmp.eq.s32.totalorder %s24, 0
      %p161 = por %p159, %p160
      %s162 = ssub.s32 %s25, %s37
      %s163 = ssub.s32 %s26, %s33
      %s164 = sor.u32 %s162, %s163
      %p165 = scmp.eq.s32.totalorder %s164, 0
      %s167 = sadd.s32 %s166, 1
      %s168 = scalar_select %p165, %s166, %s167
      %p171 = pneg %p165
      %p172 = scmp.eq.s32.totalorder %s18, 3
      %p173 = por %p171, %p172
      %p174 = scmp.ne.s32.totalorder %s166, %s169
      %p175 = scmp.eq.s32.totalorder %s18, 0
      %p176 = por %p174, %p175
      %p177 = scmp.ne.s32.totalorder %s166, %s169
      %p178 = scmp.eq.s32.totalorder %s23, 3
      %p179 = por %p177, %p178
      %p180 = scmp.ne.s32.totalorder %s169, %s170
      %p181 = scmp.eq.s32.totalorder %s23, 0
      %p182 = por %p180, %p181
      %p183 = scmp.ne.s32.totalorder %s169, %s170
      %p184 = scmp.eq.s32.totalorder %s24, 3
      %p185 = por %p183, %p184
      %p187 = scmp.ne.s32.totalorder %s170, %s186
      %p188 = scmp.eq.s32.totalorder %s24, 0
      %p189 = por %p187, %p188
      %p190 = scmp.le.s32.totalorder 1, %s18
      %p191 = scmp.lt.s32.totalorder %s18, 5
      %p192 = pnand %p190, %p191
      %p193 = pneg %p192
      // Predicated region
      $region9: #{tpu_custom_call.1} parent=5 // pred_check
        _
      $region10: #{tpu_custom_call.1} parent=5 // pred_check_branch
        %195 = sbr.rel (%p192) target = $region12
      $region11: #{tpu_custom_call.1} parent=5 // pred_region
        %s196 = ssub.s32 %s18, 1
        // Predicated region
        $region13: #{tpu_custom_call.1} parent=11 // pred_check
          %p197 = pneg %p77
        $region14: #{tpu_custom_call.1} parent=11 // pred_check_branch
          %199 = sbr.rel (%p197) target = $region16
        $region15: #{tpu_custom_call.1} parent=11 // pred_region
          _
        $region16: #{tpu_custom_call.1} parent=11 // pred_fallthru
          _
        // Predicated region
        $region17: #{tpu_custom_call.1} parent=11 // pred_check
          %p200 = pneg %p98
        $region18: #{tpu_custom_call.1} parent=11 // pred_check_branch
          %202 = sbr.rel (%p200) target = $region20
        $region19: #{tpu_custom_call.1} parent=11 // pred_region
          _
        $region20: #{tpu_custom_call.1} parent=11 // pred_fallthru
          _
      $region12: #{tpu_custom_call.1} parent=5 // pred_fallthru
        _
      %p203 = scmp.lt.s32.totalorder %s18, 4
      // Predicated region
      $region21: #{tpu_custom_call.1} parent=5 // pred_check
        %p204 = pneg %p203
      $region22: #{tpu_custom_call.1} parent=5 // pred_check_branch
        %206 = sbr.rel (%p204) target = $region24
      $region23: #{tpu_custom_call.1} parent=5 // pred_region
        // Predicated region
        $region25: #{tpu_custom_call.1} parent=23 // pred_check
          %p207 = pneg %p50
        $region26: #{tpu_custom_call.1} parent=23 // pred_check_branch
          %209 = sbr.rel (%p207) target = $region28
        $region27: #{tpu_custom_call.1} parent=23 // pred_region
          %p210 = scmp.lt.s32.totalorder %s25, 1
          %s211 = scalar_select %p210, %s25, 1
          %s212 = smul.addr %s211, 41
          %s213 = smul.addr %s212, 4
          %s214 = scalar_lea.vmem %s0, %s213
        $region28: #{tpu_custom_call.1} parent=23 // pred_fallthru
          _
        // Predicated region
        $region29: #{tpu_custom_call.1} parent=23 // pred_check
          %p215 = pneg %p120
        $region30: #{tpu_custom_call.1} parent=23 // pred_check_branch
          %217 = sbr.rel (%p215) target = $region32
        $region31: #{tpu_custom_call.1} parent=23 // pred_region
          %p218 = scmp.lt.s32.totalorder %s25, 1
          %s219 = scalar_select %p218, %s25, 1
          %p220 = scmp.lt.s32.totalorder %s26, 1
          %s221 = scalar_select %p220, %s26, 1
          %s222 = smul.addr %s221, 4
          %s223 = smul.addr %s219, 8
          %s224 = sadd.s32 %s222, %s223
          %s225 = smul.addr %s224, 8
          %s226 = scalar_lea.vmem %s3, %s225
        $region32: #{tpu_custom_call.1} parent=23 // pred_fallthru
          _
      $region24: #{tpu_custom_call.1} parent=5 // pred_fallthru
        _
      %p227 = scmp.le.s32.totalorder 1, %s18
      %p228 = scmp.lt.s32.totalorder %s18, 5
      %p229 = pnand %p227, %p228
      %p230 = pneg %p229
      // Predicated region
      $region33: #{tpu_custom_call.1} parent=5 // pred_check
        _
      $region34: #{tpu_custom_call.1} parent=5 // pred_check_branch
        %232 = sbr.rel (%p229) target = $region36
      $region35: #{tpu_custom_call.1} parent=5 // pred_region
        %s233 = ssub.s32 %s18, 1
        %p234 = scmp.lt.s32.totalorder %s27, 1
        %s235 = scalar_select %p234, %s27, 1
        %s236 = smul.addr %s235, 41
        %s237 = smul.addr %s236, 4
        %s238 = scalar_lea.vmem %s0, %s237
        %p239 = pneg %p56
        %p240 = pneg %p53
        %p241 = pneg %p77
        %p242 = pneg %p74
        %p243 = pneg %p98
        %p244 = pneg %p95
        %p245 = scmp.lt.s32.totalorder %s27, 1
        %s246 = scalar_select %p245, %s27, 1
        %p247 = scmp.lt.s32.totalorder %s28, 1
        %s248 = scalar_select %p247, %s28, 1
        %s249 = smul.addr %s248, 4
        %s250 = smul.addr %s246, 8
        %s251 = sadd.s32 %s249, %s250
        %s252 = smul.addr %s251, 8
        %s253 = scalar_lea.vmem %s3, %s252
        %p254 = pneg %p126
        %p255 = pneg %p123
        %p256 = pneg %p154
        %p257 = pneg %p151
        %s258 = sand.u32 %s141, 1
        %s259 = scalar_lea.sflag [#allocation3], %s258
        %s260 = sand.u32 %s141, 1
        %s261 = smul.addr %s260, 32
        %s262 = scalar_lea.vmem [#allocation2], %s261
        %p263 = pneg %p182
        %p264 = pneg %p179
        %s265 = sand.u32 %s169, 1
        %s266 = scalar_lea.sflag [#allocation5], %s265
        %s267 = sand.u32 %s169, 1
        %s268 = smul.addr %s267, 32
        %s269 = scalar_lea.vmem [#allocation4], %s268
        %p270 = scmp.lt.s32.totalorder %s27, 1
        %s271 = scalar_select %p270, %s27, 1
        %s272 = smul.addr %s271, 41
        %s273 = smul.addr %s272, 4
        %s274 = scalar_lea.vmem %s0, %s273
        %p275 = scmp.lt.s32.totalorder %s27, 1
        %s276 = scalar_select %p275, %s27, 1
        %p277 = scmp.lt.s32.totalorder %s28, 1
        %s278 = scalar_select %p277, %s28, 1
        %s279 = smul.addr %s278, 4
        %s280 = smul.addr %s276, 8
        %s281 = sadd.s32 %s279, %s280
        %s282 = smul.addr %s281, 8
        %s283 = scalar_lea.vmem %s3, %s282
        %s285 = smul.u32 %s28, 144
        %s286 = sshra.s32 %s285, 3
        %s287 = sand.u32 %s285, 7
        %s288 = smul.addr %s286, 4
        %s289 = scalar_lea.vmem %s274, %s288
        %v290 = vld [vmem:[%s289] sm:$0xf]
        %v291 = vld [vmem:[%s289 + $0x4] sm:$0xf]
        %v292 = vld [vmem:[%s289 + $0x8] sm:$0xf]
        %v293 = vld [vmem:[%s289 + $0xc] sm:$0xf]
        %v294 = vld [vmem:[%s289 + $0x10] sm:$0xf]
        %v295 = vld [vmem:[%s289 + $0x14] sm:$0xf]
        %v296 = vld [vmem:[%s289 + $0x18] sm:$0xf]
        %v297 = vld [vmem:[%s289 + $0x1c] sm:$0xf]
        %v298 = vld [vmem:[%s289 + $0x20] sm:$0xf]
        %v299 = vld [vmem:[%s289 + $0x24] sm:$0xf]
        %v300 = vld [vmem:[%s289 + $0x28] sm:$0xf]
        %v301 = vld [vmem:[%s289 + $0x2c] sm:$0xf]
        %v302 = vld [vmem:[%s289 + $0x30] sm:$0xf]
        %v303 = vld [vmem:[%s289 + $0x34] sm:$0xf]
        %v304 = vld [vmem:[%s289 + $0x38] sm:$0xf]
        %v305 = vld [vmem:[%s289 + $0x3c] sm:$0xf]
        %v306 = vld [vmem:[%s289 + $0x40] sm:$0xf]
        %v307 = vld [vmem:[%s289 + $0x44] sm:$0xf]
        %v308 = vld [vmem:[%s289 + $0x48] sm:$0xf]
        %v309 = vld [vmem:[%s289 + $0x4c] sm:$0xf]
        %v310 = vld [vmem:[%s289 + $0x50] sm:$0xf]
        %v311 = vld [vmem:[%s289 + $0x54] sm:$0xf]
        %v312 = vld [vmem:[%s289 + $0x58] sm:$0x7]
        %v313 = vld [vmem:[%s1] sm:$0xf]
        %v314 = vld [vmem:[%s1 + $0x4] sm:$0xf]
        %v315 = vld [vmem:[%s1 + $0x8] sm:$0xf]
        %v316 = vld [vmem:[%s1 + $0xc] sm:$0xf]
        %v317 = vld [vmem:[%s1 + $0x10] sm:$0x3]
        %v341 = vunpack.c.l.b16 %v290
        %v342 = vunpack.c.l.b16 %v291
        %v343 = vunpack.c.l.b16 %v292
        %v344 = vunpack.c.l.b16 %v293
        %v345 = vunpack.c.l.b16 %v294
        %v346 = vunpack.c.l.b16 %v295
        %v347 = vunpack.c.l.b16 %v296
        %v348 = vunpack.c.l.b16 %v297
        %v349 = vunpack.c.l.b16 %v298
        %v350 = vunpack.c.l.b16 %v299
        %v351 = vunpack.c.l.b16 %v300
        %v352 = vunpack.c.l.b16 %v301
        %v353 = vunpack.c.l.b16 %v302
        %v354 = vunpack.c.l.b16 %v303
        %v355 = vunpack.c.l.b16 %v304
        %v356 = vunpack.c.l.b16 %v305
        %v357 = vunpack.c.l.b16 %v306
        %v358 = vunpack.c.l.b16 %v307
        %v359 = vunpack.c.l.b16 %v308
        %v360 = vunpack.c.l.b16 %v309
        %v361 = vunpack.c.l.b16 %v310
        %v362 = vunpack.c.l.b16 %v311
        %v363 = vunpack.c.l.b16 %v312
        %v364 = vpack.c.b16 %v342, %v341
        %v365 = vpack.c.b16 %v344, %v343
        %v366 = vpack.c.b16 %v346, %v345
        %v367 = vpack.c.b16 %v348, %v347
        %v368 = vpack.c.b16 %v350, %v349
        %v369 = vpack.c.b16 %v352, %v351
        %v370 = vpack.c.b16 %v354, %v353
        %v371 = vpack.c.b16 %v356, %v355
        %v372 = vpack.c.b16 %v358, %v357
        %v373 = vpack.c.b16 %v360, %v359
        %v374 = vpack.c.b16 %v362, %v361
        %v375 = vpack.c.b16 %v363, %v363
        %v381 = vunpack.c.l.b16 %v313
        %v382 = vunpack.c.l.b16 %v314
        %v383 = vunpack.c.l.b16 %v315
        %v384 = vunpack.c.l.b16 %v316
        %v385 = vunpack.c.l.b16 %v317
        %v386 = vpack.c.b16 %v382, %v381
        %v387 = vpack.c.b16 %v384, %v383
        %v388 = vpack.c.b16 %v385, %v385
        %vm391 = vcmask 293888
        %v393 = vsel %vm391, %v364, 0
        %v396 = vsel %vm391, %v365, 0
        %v399 = vsel %vm391, %v366, 0
        %v402 = vsel %vm391, %v367, 0
        %v405 = vsel %vm391, %v368, 0
        %v408 = vsel %vm391, %v369, 0
        %v411 = vsel %vm391, %v370, 0
        %v414 = vsel %vm391, %v371, 0
        %v417 = vsel %vm391, %v372, 0
        %v420 = vsel %vm391, %v373, 0
        %v423 = vsel %vm391, %v374, 0
        %v426 = vsel %vm391, %v375, 0
        %vm428 = vcmask 1041408
        %v430 = vsel %vm428, %v388, 0
        %432 = vmatpush.bf16.msra.mxu0 0
        %433 = vmatpush.bf16.msra.mxu0 0
        %434 = vmatpush.bf16.msra.mxu0 0
        %435 = vmatpush.bf16.msra.mxu0 0
        %436 = vmatpush.bf16.msra.mxu0 0
        %437 = vmatpush.bf16.msra.mxu0 %v430
        %438 = vmatpush.bf16.msra.mxu0 %v387
        %439 = vmatpush.bf16.msra.mxu0 %v386
        %440 = vmatmul.bf16.gmra.mxu0 %v393
        %v441 = vpop.f32.mrf.mxu0
        %v442 = vadd.f32 0.0, %v441
        %v443 = vpop.f32.mrf.mxu0
        %v444 = vadd.f32 0.0, %v443
        %445 = vmatmul.bf16.gmra.mxu0 %v396
        %v446 = vpop.f32.mrf.mxu0
        %v447 = vadd.f32 0.0, %v446
        %v448 = vpop.f32.mrf.mxu0
        %v449 = vadd.f32 0.0, %v448
        %450 = vmatmul.bf16.gmra.mxu0 %v399
        %v451 = vpop.f32.mrf.mxu0
        %v452 = vadd.f32 0.0, %v451
        %v453 = vpop.f32.mrf.mxu0
        %v454 = vadd.f32 0.0, %v453
        %455 = vmatmul.bf16.gmra.mxu0 %v402
        %v456 = vpop.f32.mrf.mxu0
        %v457 = vadd.f32 0.0, %v456
        %v458 = vpop.f32.mrf.mxu0
        %v459 = vadd.f32 0.0, %v458
        %460 = vmatmul.bf16.gmra.mxu0 %v405
        %v461 = vpop.f32.mrf.mxu0
        %v462 = vadd.f32 0.0, %v461
        %v463 = vpop.f32.mrf.mxu0
        %v464 = vadd.f32 0.0, %v463
        %465 = vmatmul.bf16.gmra.mxu0 %v408
        %v466 = vpop.f32.mrf.mxu0
        %v467 = vadd.f32 0.0, %v466
        %v468 = vpop.f32.mrf.mxu0
        %v469 = vadd.f32 0.0, %v468
        %470 = vmatmul.bf16.gmra.mxu0 %v411
        %v471 = vpop.f32.mrf.mxu0
        %v472 = vadd.f32 0.0, %v471
        %v473 = vpop.f32.mrf.mxu0
        %v474 = vadd.f32 0.0, %v473
        %475 = vmatmul.bf16.gmra.mxu0 %v414
        %v476 = vpop.f32.mrf.mxu0
        %v477 = vadd.f32 0.0, %v476
        %v478 = vpop.f32.mrf.mxu0
        %v479 = vadd.f32 0.0, %v478
        %480 = vmatmul.bf16.gmra.mxu0 %v417
        %v481 = vpop.f32.mrf.mxu0
        %v482 = vadd.f32 0.0, %v481
        %v483 = vpop.f32.mrf.mxu0
        %v484 = vadd.f32 0.0, %v483
        %485 = vmatmul.bf16.gmra.mxu0 %v420
        %v486 = vpop.f32.mrf.mxu0
        %v487 = vpop.f32.mrf.mxu0
        %488 = vmatmul.bf16.gmra.mxu0 %v423
        %v489 = vpop.f32.mrf.mxu0
        %v490 = vpop.f32.mrf.mxu0
        %491 = vmatmul.bf16.gmra.mxu0 %v426
        %v492 = vpop.f32.mrf.mxu0
        %v493 = vpop.f32.mrf.mxu0
        %494 = vdwg.mxu0
        %s495 = scalar_lea.vmem %s1, 20
        %v496 = vld [vmem:[%s495] sm:$0xf]
        %v497 = vld [vmem:[%s495 + $0x4] sm:$0xf]
        %v498 = vld [vmem:[%s495 + $0x8] sm:$0xf]
        %v499 = vld [vmem:[%s495 + $0xc] sm:$0xf]
        %v500 = vld [vmem:[%s495 + $0x10] sm:$0x3]
        %v506 = vunpack.c.l.b16 %v496
        %v507 = vunpack.c.l.b16 %v497
        %v508 = vunpack.c.l.b16 %v498
        %v509 = vunpack.c.l.b16 %v499
        %v510 = vunpack.c.l.b16 %v500
        %v511 = vpack.c.b16 %v507, %v506
        %v512 = vpack.c.b16 %v509, %v508
        %v513 = vpack.c.b16 %v510, %v510
        %v517 = vsel %vm428, %v513, 0
        %519 = vmatpush.bf16.msra.mxu0 0
        %520 = vmatpush.bf16.msra.mxu0 0
        %521 = vmatpush.bf16.msra.mxu0 0
        %522 = vmatpush.bf16.msra.mxu0 0
        %523 = vmatpush.bf16.msra.mxu0 0
        %524 = vmatpush.bf16.msra.mxu0 %v517
        %525 = vmatpush.bf16.msra.mxu0 %v512
        %526 = vmatpush.bf16.msra.mxu0 %v511
        %527 = vmatmul.bf16.gmra.mxu0 %v393
        %v528 = vpop.f32.mrf.mxu0
        %v529 = vadd.f32 0.0, %v528
        %v530 = vpop.f32.mrf.mxu0
        %v531 = vadd.f32 0.0, %v530
        %532 = vmatmul.bf16.gmra.mxu0 %v396
        %v533 = vpop.f32.mrf.mxu0
        %v534 = vadd.f32 0.0, %v533
        %v535 = vpop.f32.mrf.mxu0
        %v536 = vadd.f32 0.0, %v535
        %537 = vmatmul.bf16.gmra.mxu0 %v399
        %v538 = vpop.f32.mrf.mxu0
        %v539 = vadd.f32 0.0, %v538
        %v540 = vpop.f32.mrf.mxu0
        %v541 = vadd.f32 0.0, %v540
        %542 = vmatmul.bf16.gmra.mxu0 %v402
        %v543 = vpop.f32.mrf.mxu0
        %v544 = vadd.f32 0.0, %v543
        %v545 = vpop.f32.mrf.mxu0
        %v546 = vadd.f32 0.0, %v545
        %547 = vmatmul.bf16.gmra.mxu0 %v405
        %v548 = vpop.f32.mrf.mxu0
        %v549 = vadd.f32 0.0, %v548
        %v550 = vpop.f32.mrf.mxu0
        %v551 = vadd.f32 0.0, %v550
        %552 = vmatmul.bf16.gmra.mxu0 %v408
        %v553 = vpop.f32.mrf.mxu0
        %v554 = vadd.f32 0.0, %v553
        %v555 = vpop.f32.mrf.mxu0
        %v556 = vadd.f32 0.0, %v555
        %557 = vmatmul.bf16.gmra.mxu0 %v411
        %v558 = vpop.f32.mrf.mxu0
        %v559 = vadd.f32 0.0, %v558
        %v560 = vpop.f32.mrf.mxu0
        %v561 = vadd.f32 0.0, %v560
        %562 = vmatmul.bf16.gmra.mxu0 %v414
        %v563 = vpop.f32.mrf.mxu0
        %v564 = vadd.f32 0.0, %v563
        %v565 = vpop.f32.mrf.mxu0
        %v566 = vadd.f32 0.0, %v565
        %567 = vmatmul.bf16.gmra.mxu0 %v417
        %v568 = vpop.f32.mrf.mxu0
        %v569 = vadd.f32 0.0, %v568
        %v570 = vpop.f32.mrf.mxu0
        %v571 = vadd.f32 0.0, %v570
        %572 = vmatmul.bf16.gmra.mxu0 %v420
        %v573 = vpop.f32.mrf.mxu0
        %v574 = vadd.f32 0.0, %v573
        %v575 = vpop.f32.mrf.mxu0
        %576 = vmatmul.bf16.gmra.mxu0 %v423
        %v577 = vpop.f32.mrf.mxu0
        %v578 = vpop.f32.mrf.mxu0
        %579 = vmatmul.bf16.gmra.mxu0 %v426
        %v580 = vpop.f32.mrf.mxu0
        %v581 = vpop.f32.mrf.mxu0
        %582 = vdwg.mxu0
        %vm602 = vcmask 1046528
        %v603 = vrot.slane %v529, 1
        %v604 = vrot.slane %v531, 1
        %v605 = vsel %vm602, %v603, %v604
        %v606 = vrot.slane %v534, 1
        %v607 = vsel %vm602, %v604, %v606
        %v608 = vrot.slane %v536, 1
        %v609 = vsel %vm602, %v606, %v608
        %v610 = vrot.slane %v539, 1
        %v611 = vsel %vm602, %v608, %v610
        %v612 = vrot.slane %v541, 1
        %v613 = vsel %vm602, %v610, %v612
        %v614 = vrot.slane %v544, 1
        %v615 = vsel %vm602, %v612, %v614
        %v616 = vrot.slane %v546, 1
        %v617 = vsel %vm602, %v614, %v616
        %v618 = vrot.slane %v549, 1
        %v619 = vsel %vm602, %v616, %v618
        %v620 = vrot.slane %v551, 1
        %v621 = vsel %vm602, %v618, %v620
        %v622 = vrot.slane %v554, 1
        %v623 = vsel %vm602, %v620, %v622
        %v624 = vrot.slane %v556, 1
        %v625 = vsel %vm602, %v622, %v624
        %v626 = vrot.slane %v559, 1
        %v627 = vsel %vm602, %v624, %v626
        %v628 = vrot.slane %v561, 1
        %v629 = vsel %vm602, %v626, %v628
        %v630 = vrot.slane %v564, 1
        %v631 = vsel %vm602, %v628, %v630
        %v632 = vrot.slane %v566, 1
        %v633 = vsel %vm602, %v630, %v632
        %v634 = vrot.slane %v569, 1
        %v635 = vsel %vm602, %v632, %v634
        %v636 = vrot.slane %v571, 1
        %v637 = vsel %vm602, %v634, %v636
        %v638 = vrot.slane %v574, 1
        %v639 = vsel %vm602, %v636, %v638
        %v658 = vadd.f32 %v442, %v605
        %v659 = vadd.f32 %v444, %v607
        %v660 = vadd.f32 %v447, %v609
        %v661 = vadd.f32 %v449, %v611
        %v662 = vadd.f32 %v452, %v613
        %v663 = vadd.f32 %v454, %v615
        %v664 = vadd.f32 %v457, %v617
        %v665 = vadd.f32 %v459, %v619
        %v666 = vadd.f32 %v462, %v621
        %v667 = vadd.f32 %v464, %v623
        %v668 = vadd.f32 %v467, %v625
        %v669 = vadd.f32 %v469, %v627
        %v670 = vadd.f32 %v472, %v629
        %v671 = vadd.f32 %v474, %v631
        %v672 = vadd.f32 %v477, %v633
        %v673 = vadd.f32 %v479, %v635
        %v674 = vadd.f32 %v482, %v637
        %v675 = vadd.f32 %v484, %v639
        %s676 = scalar_lea.vmem %s1, 40
        %v677 = vld [vmem:[%s676] sm:$0xf]
        %v678 = vld [vmem:[%s676 + $0x4] sm:$0xf]
        %v679 = vld [vmem:[%s676 + $0x8] sm:$0xf]
        %v680 = vld [vmem:[%s676 + $0xc] sm:$0xf]
        %v681 = vld [vmem:[%s676 + $0x10] sm:$0x3]
        %v687 = vunpack.c.l.b16 %v677
        %v688 = vunpack.c.l.b16 %v678
        %v689 = vunpack.c.l.b16 %v679
        %v690 = vunpack.c.l.b16 %v680
        %v691 = vunpack.c.l.b16 %v681
        %v692 = vpack.c.b16 %v688, %v687
        %v693 = vpack.c.b16 %v690, %v689
        %v694 = vpack.c.b16 %v691, %v691
        %v698 = vsel %vm428, %v694, 0
        %700 = vmatpush.bf16.msra.mxu0 0
        %701 = vmatpush.bf16.msra.mxu0 0
        %702 = vmatpush.bf16.msra.mxu0 0
        %703 = vmatpush.bf16.msra.mxu0 0
        %704 = vmatpush.bf16.msra.mxu0 0
        %705 = vmatpush.bf16.msra.mxu0 %v698
        %706 = vmatpush.bf16.msra.mxu0 %v693
        %707 = vmatpush.bf16.msra.mxu0 %v692
        %708 = vmatmul.bf16.gmra.mxu0 %v393
        %v709 = vpop.f32.mrf.mxu0
        %v710 = vadd.f32 0.0, %v709
        %v711 = vpop.f32.mrf.mxu0
        %v712 = vadd.f32 0.0, %v711
        %713 = vmatmul.bf16.gmra.mxu0 %v396
        %v714 = vpop.f32.mrf.mxu0
        %v715 = vadd.f32 0.0, %v714
        %v716 = vpop.f32.mrf.mxu0
        %v717 = vadd.f32 0.0, %v716
        %718 = vmatmul.bf16.gmra.mxu0 %v399
        %v719 = vpop.f32.mrf.mxu0
        %v720 = vadd.f32 0.0, %v719
        %v721 = vpop.f32.mrf.mxu0
        %v722 = vadd.f32 0.0, %v721
        %723 = vmatmul.bf16.gmra.mxu0 %v402
        %v724 = vpop.f32.mrf.mxu0
        %v725 = vadd.f32 0.0, %v724
        %v726 = vpop.f32.mrf.mxu0
        %v727 = vadd.f32 0.0, %v726
        %728 = vmatmul.bf16.gmra.mxu0 %v405
        %v729 = vpop.f32.mrf.mxu0
        %v730 = vadd.f32 0.0, %v729
        %v731 = vpop.f32.mrf.mxu0
        %v732 = vadd.f32 0.0, %v731
        %733 = vmatmul.bf16.gmra.mxu0 %v408
        %v734 = vpop.f32.mrf.mxu0
        %v735 = vadd.f32 0.0, %v734
        %v736 = vpop.f32.mrf.mxu0
        %v737 = vadd.f32 0.0, %v736
        %738 = vmatmul.bf16.gmra.mxu0 %v411
        %v739 = vpop.f32.mrf.mxu0
        %v740 = vadd.f32 0.0, %v739
        %v741 = vpop.f32.mrf.mxu0
        %v742 = vadd.f32 0.0, %v741
        %743 = vmatmul.bf16.gmra.mxu0 %v414
        %v744 = vpop.f32.mrf.mxu0
        %v745 = vadd.f32 0.0, %v744
        %v746 = vpop.f32.mrf.mxu0
        %v747 = vadd.f32 0.0, %v746
        %748 = vmatmul.bf16.gmra.mxu0 %v417
        %v749 = vpop.f32.mrf.mxu0
        %v750 = vadd.f32 0.0, %v749
        %v751 = vpop.f32.mrf.mxu0
        %v752 = vadd.f32 0.0, %v751
        %753 = vmatmul.bf16.gmra.mxu0 %v420
        %v754 = vpop.f32.mrf.mxu0
        %v755 = vadd.f32 0.0, %v754
        %v756 = vpop.f32.mrf.mxu0
        %757 = vmatmul.bf16.gmra.mxu0 %v423
        %v758 = vpop.f32.mrf.mxu0
        %v759 = vpop.f32.mrf.mxu0
        %760 = vmatmul.bf16.gmra.mxu0 %v426
        %v761 = vpop.f32.mrf.mxu0
        %v762 = vpop.f32.mrf.mxu0
        %763 = vdwg.mxu0
        %vm783 = vcmask 1045504
        %v784 = vrot.slane %v710, 2
        %v785 = vrot.slane %v712, 2
        %v786 = vsel %vm783, %v784, %v785
        %v787 = vrot.slane %v715, 2
        %v788 = vsel %vm783, %v785, %v787
        %v789 = vrot.slane %v717, 2
        %v790 = vsel %vm783, %v787, %v789
        %v791 = vrot.slane %v720, 2
        %v792 = vsel %vm783, %v789, %v791
        %v793 = vrot.slane %v722, 2
        %v794 = vsel %vm783, %v791, %v793
        %v795 = vrot.slane %v725, 2
        %v796 = vsel %vm783, %v793, %v795
        %v797 = vrot.slane %v727, 2
        %v798 = vsel %vm783, %v795, %v797
        %v799 = vrot.slane %v730, 2
        %v800 = vsel %vm783, %v797, %v799
        %v801 = vrot.slane %v732, 2
        %v802 = vsel %vm783, %v799, %v801
        %v803 = vrot.slane %v735, 2
        %v804 = vsel %vm783, %v801, %v803
        %v805 = vrot.slane %v737, 2
        %v806 = vsel %vm783, %v803, %v805
        %v807 = vrot.slane %v740, 2
        %v808 = vsel %vm783, %v805, %v807
        %v809 = vrot.slane %v742, 2
        %v810 = vsel %vm783, %v807, %v809
        %v811 = vrot.slane %v745, 2
        %v812 = vsel %vm783, %v809, %v811
        %v813 = vrot.slane %v747, 2
        %v814 = vsel %vm783, %v811, %v813
        %v815 = vrot.slane %v750, 2
        %v816 = vsel %vm783, %v813, %v815
        %v817 = vrot.slane %v752, 2
        %v818 = vsel %vm783, %v815, %v817
        %v819 = vrot.slane %v755, 2
        %v820 = vsel %vm783, %v817, %v819
        %v839 = vadd.f32 %v658, %v786
        %v840 = vadd.f32 %v659, %v788
        %v841 = vadd.f32 %v660, %v790
        %v842 = vadd.f32 %v661, %v792
        %v843 = vadd.f32 %v662, %v794
        %v844 = vadd.f32 %v663, %v796
        %v845 = vadd.f32 %v664, %v798
        %v846 = vadd.f32 %v665, %v800
        %v847 = vadd.f32 %v666, %v802
        %v848 = vadd.f32 %v667, %v804
        %v849 = vadd.f32 %v668, %v806
        %v850 = vadd.f32 %v669, %v808
        %v851 = vadd.f32 %v670, %v810
        %v852 = vadd.f32 %v671, %v812
        %v853 = vadd.f32 %v672, %v814
        %v854 = vadd.f32 %v673, %v816
        %v855 = vadd.f32 %v674, %v818
        %v856 = vadd.f32 %v675, %v820
        %s857 = scalar_lea.vmem %s1, 60
        %v858 = vld [vmem:[%s857] sm:$0xf]
        %v859 = vld [vmem:[%s857 + $0x4] sm:$0xf]
        %v860 = vld [vmem:[%s857 + $0x8] sm:$0xf]
        %v861 = vld [vmem:[%s857 + $0xc] sm:$0xf]
        %v862 = vld [vmem:[%s857 + $0x10] sm:$0x3]
        %v868 = vunpack.c.l.b16 %v858
        %v869 = vunpack.c.l.b16 %v859
        %v870 = vunpack.c.l.b16 %v860
        %v871 = vunpack.c.l.b16 %v861
        %v872 = vunpack.c.l.b16 %v862
        %v873 = vpack.c.b16 %v869, %v868
        %v874 = vpack.c.b16 %v871, %v870
        %v875 = vpack.c.b16 %v872, %v872
        %v879 = vsel %vm428, %v875, 0
        %881 = vmatpush.bf16.msra.mxu0 0
        %882 = vmatpush.bf16.msra.mxu0 0
        %883 = vmatpush.bf16.msra.mxu0 0
        %884 = vmatpush.bf16.msra.mxu0 0
        %885 = vmatpush.bf16.msra.mxu0 0
        %886 = vmatpush.bf16.msra.mxu0 %v879
        %887 = vmatpush.bf16.msra.mxu0 %v874
        %888 = vmatpush.bf16.msra.mxu0 %v873
        %889 = vmatmul.bf16.gmra.mxu0 %v393
        %v890 = vpop.f32.mrf.mxu0
        %v891 = vpop.f32.mrf.mxu0
        %892 = vmatmul.bf16.gmra.mxu0 %v396
        %v893 = vpop.f32.mrf.mxu0
        %v894 = vadd.f32 0.0, %v893
        %v895 = vpop.f32.mrf.mxu0
        %v896 = vadd.f32 0.0, %v895
        %897 = vmatmul.bf16.gmra.mxu0 %v399
        %v898 = vpop.f32.mrf.mxu0
        %v899 = vadd.f32 0.0, %v898
        %v900 = vpop.f32.mrf.mxu0
        %v901 = vadd.f32 0.0, %v900
        %902 = vmatmul.bf16.gmra.mxu0 %v402
        %v903 = vpop.f32.mrf.mxu0
        %v904 = vadd.f32 0.0, %v903
        %v905 = vpop.f32.mrf.mxu0
        %v906 = vadd.f32 0.0, %v905
        %907 = vmatmul.bf16.gmra.mxu0 %v405
        %v908 = vpop.f32.mrf.mxu0
        %v909 = vadd.f32 0.0, %v908
        %v910 = vpop.f32.mrf.mxu0
        %v911 = vadd.f32 0.0, %v910
        %912 = vmatmul.bf16.gmra.mxu0 %v408
        %v913 = vpop.f32.mrf.mxu0
        %v914 = vadd.f32 0.0, %v913
        %v915 = vpop.f32.mrf.mxu0
        %v916 = vadd.f32 0.0, %v915
        %917 = vmatmul.bf16.gmra.mxu0 %v411
        %v918 = vpop.f32.mrf.mxu0
        %v919 = vadd.f32 0.0, %v918
        %v920 = vpop.f32.mrf.mxu0
        %v921 = vadd.f32 0.0, %v920
        %922 = vmatmul.bf16.gmra.mxu0 %v414
        %v923 = vpop.f32.mrf.mxu0
        %v924 = vadd.f32 0.0, %v923
        %v925 = vpop.f32.mrf.mxu0
        %v926 = vadd.f32 0.0, %v925
        %927 = vmatmul.bf16.gmra.mxu0 %v417
        %v928 = vpop.f32.mrf.mxu0
        %v929 = vadd.f32 0.0, %v928
        %v930 = vpop.f32.mrf.mxu0
        %v931 = vadd.f32 0.0, %v930
        %932 = vmatmul.bf16.gmra.mxu0 %v420
        %v933 = vpop.f32.mrf.mxu0
        %v934 = vadd.f32 0.0, %v933
        %v935 = vpop.f32.mrf.mxu0
        %v936 = vadd.f32 0.0, %v935
        %937 = vmatmul.bf16.gmra.mxu0 %v423
        %v938 = vpop.f32.mrf.mxu0
        %v939 = vadd.f32 0.0, %v938
        %v940 = vpop.f32.mrf.mxu0
        %941 = vmatmul.bf16.gmra.mxu0 %v426
        %v942 = vpop.f32.mrf.mxu0
        %v943 = vpop.f32.mrf.mxu0
        %944 = vdwg.mxu0
        %v964 = vrot.slane %v894, 2
        %v965 = vrot.slane %v896, 2
        %v966 = vsel %vm783, %v964, %v965
        %v967 = vrot.slane %v899, 2
        %v968 = vsel %vm783, %v965, %v967
        %v969 = vrot.slane %v901, 2
        %v970 = vsel %vm783, %v967, %v969
        %v971 = vrot.slane %v904, 2
        %v972 = vsel %vm783, %v969, %v971
        %v973 = vrot.slane %v906, 2
        %v974 = vsel %vm783, %v971, %v973
        %v975 = vrot.slane %v909, 2
        %v976 = vsel %vm783, %v973, %v975
        %v977 = vrot.slane %v911, 2
        %v978 = vsel %vm783, %v975, %v977
        %v979 = vrot.slane %v914, 2
        %v980 = vsel %vm783, %v977, %v979
        %v981 = vrot.slane %v916, 2
        %v982 = vsel %vm783, %v979, %v981
        %v983 = vrot.slane %v919, 2
        %v984 = vsel %vm783, %v981, %v983
        %v985 = vrot.slane %v921, 2
        %v986 = vsel %vm783, %v983, %v985
        %v987 = vrot.slane %v924, 2
        %v988 = vsel %vm783, %v985, %v987
        %v989 = vrot.slane %v926, 2
        %v990 = vsel %vm783, %v987, %v989
        %v991 = vrot.slane %v929, 2
        %v992 = vsel %vm783, %v989, %v991
        %v993 = vrot.slane %v931, 2
        %v994 = vsel %vm783, %v991, %v993
        %v995 = vrot.slane %v934, 2
        %v996 = vsel %vm783, %v993, %v995
        %v997 = vrot.slane %v936, 2
        %v998 = vsel %vm783, %v995, %v997
        %v999 = vrot.slane %v939, 2
        %v1000 = vsel %vm783, %v997, %v999
        %v1019 = vadd.f32 %v839, %v966
        %v1020 = vadd.f32 %v840, %v968
        %v1021 = vadd.f32 %v841, %v970
        %v1022 = vadd.f32 %v842, %v972
        %v1023 = vadd.f32 %v843, %v974
        %v1024 = vadd.f32 %v844, %v976
        %v1025 = vadd.f32 %v845, %v978
        %v1026 = vadd.f32 %v846, %v980
        %v1027 = vadd.f32 %v847, %v982
        %v1028 = vadd.f32 %v848, %v984
        %v1029 = vadd.f32 %v849, %v986
        %v1030 = vadd.f32 %v850, %v988
        %v1031 = vadd.f32 %v851, %v990
        %v1032 = vadd.f32 %v852, %v992
        %v1033 = vadd.f32 %v853, %v994
        %v1034 = vadd.f32 %v854, %v996
        %v1035 = vadd.f32 %v855, %v998
        %v1036 = vadd.f32 %v856, %v1000
        %s1037 = scalar_lea.vmem %s1, 80
        %v1038 = vld [vmem:[%s1037] sm:$0xf]
        %v1039 = vld [vmem:[%s1037 + $0x4] sm:$0xf]
        %v1040 = vld [vmem:[%s1037 + $0x8] sm:$0xf]
        %v1041 = vld [vmem:[%s1037 + $0xc] sm:$0xf]
        %v1042 = vld [vmem:[%s1037 + $0x10] sm:$0x3]
        %v1048 = vunpack.c.l.b16 %v1038
        %v1049 = vunpack.c.l.b16 %v1039
        %v1050 = vunpack.c.l.b16 %v1040
        %v1051 = vunpack.c.l.b16 %v1041
        %v1052 = vunpack.c.l.b16 %v1042
        %v1053 = vpack.c.b16 %v1049, %v1048
        %v1054 = vpack.c.b16 %v1051, %v1050
        %v1055 = vpack.c.b16 %v1052, %v1052
        %v1059 = vsel %vm428, %v1055, 0
        %1061 = vmatpush.bf16.msra.mxu0 0
        %1062 = vmatpush.bf16.msra.mxu0 0
        %1063 = vmatpush.bf16.msra.mxu0 0
        %1064 = vmatpush.bf16.msra.mxu0 0
        %1065 = vmatpush.bf16.msra.mxu0 0
        %1066 = vmatpush.bf16.msra.mxu0 %v1059
        %1067 = vmatpush.bf16.msra.mxu0 %v1054
        %1068 = vmatpush.bf16.msra.mxu0 %v1053
        %1069 = vmatmul.bf16.gmra.mxu0 %v393
        %v1070 = vpop.f32.mrf.mxu0
        %v1071 = vpop.f32.mrf.mxu0
        %1072 = vmatmul.bf16.gmra.mxu0 %v396
        %v1073 = vpop.f32.mrf.mxu0
        %v1074 = vadd.f32 0.0, %v1073
        %v1075 = vpop.f32.mrf.mxu0
        %v1076 = vadd.f32 0.0, %v1075
        %1077 = vmatmul.bf16.gmra.mxu0 %v399
        %v1078 = vpop.f32.mrf.mxu0
        %v1079 = vadd.f32 0.0, %v1078
        %v1080 = vpop.f32.mrf.mxu0
        %v1081 = vadd.f32 0.0, %v1080
        %1082 = vmatmul.bf16.gmra.mxu0 %v402
        %v1083 = vpop.f32.mrf.mxu0
        %v1084 = vadd.f32 0.0, %v1083
        %v1085 = vpop.f32.mrf.mxu0
        %v1086 = vadd.f32 0.0, %v1085
        %1087 = vmatmul.bf16.gmra.mxu0 %v405
        %v1088 = vpop.f32.mrf.mxu0
        %v1089 = vadd.f32 0.0, %v1088
        %v1090 = vpop.f32.mrf.mxu0
        %v1091 = vadd.f32 0.0, %v1090
        %1092 = vmatmul.bf16.gmra.mxu0 %v408
        %v1093 = vpop.f32.mrf.mxu0
        %v1094 = vadd.f32 0.0, %v1093
        %v1095 = vpop.f32.mrf.mxu0
        %v1096 = vadd.f32 0.0, %v1095
        %1097 = vmatmul.bf16.gmra.mxu0 %v411
        %v1098 = vpop.f32.mrf.mxu0
        %v1099 = vadd.f32 0.0, %v1098
        %v1100 = vpop.f32.mrf.mxu0
        %v1101 = vadd.f32 0.0, %v1100
        %1102 = vmatmul.bf16.gmra.mxu0 %v414
        %v1103 = vpop.f32.mrf.mxu0
        %v1104 = vadd.f32 0.0, %v1103
        %v1105 = vpop.f32.mrf.mxu0
        %v1106 = vadd.f32 0.0, %v1105
        %1107 = vmatmul.bf16.gmra.mxu0 %v417
        %v1108 = vpop.f32.mrf.mxu0
        %v1109 = vadd.f32 0.0, %v1108
        %v1110 = vpop.f32.mrf.mxu0
        %v1111 = vadd.f32 0.0, %v1110
        %1112 = vmatmul.bf16.gmra.mxu0 %v420
        %v1113 = vpop.f32.mrf.mxu0
        %v1114 = vadd.f32 0.0, %v1113
        %v1115 = vpop.f32.mrf.mxu0
        %v1116 = vadd.f32 0.0, %v1115
        %1117 = vmatmul.bf16.gmra.mxu0 %v423
        %v1118 = vpop.f32.mrf.mxu0
        %v1119 = vadd.f32 0.0, %v1118
        %v1120 = vpop.f32.mrf.mxu0
        %1121 = vmatmul.bf16.gmra.mxu0 %v426
        %v1122 = vpop.f32.mrf.mxu0
        %v1123 = vpop.f32.mrf.mxu0
        %1124 = vdwg.mxu0
        %vm1144 = vcmask 1044480
        %v1145 = vrot.slane %v1074, 3
        %v1146 = vrot.slane %v1076, 3
        %v1147 = vsel %vm1144, %v1145, %v1146
        %v1148 = vrot.slane %v1079, 3
        %v1149 = vsel %vm1144, %v1146, %v1148
        %v1150 = vrot.slane %v1081, 3
        %v1151 = vsel %vm1144, %v1148, %v1150
        %v1152 = vrot.slane %v1084, 3
        %v1153 = vsel %vm1144, %v1150, %v1152
        %v1154 = vrot.slane %v1086, 3
        %v1155 = vsel %vm1144, %v1152, %v1154
        %v1156 = vrot.slane %v1089, 3
        %v1157 = vsel %vm1144, %v1154, %v1156
        %v1158 = vrot.slane %v1091, 3
        %v1159 = vsel %vm1144, %v1156, %v1158
        %v1160 = vrot.slane %v1094, 3
        %v1161 = vsel %vm1144, %v1158, %v1160
        %v1162 = vrot.slane %v1096, 3
        %v1163 = vsel %vm1144, %v1160, %v1162
        %v1164 = vrot.slane %v1099, 3
        %v1165 = vsel %vm1144, %v1162, %v1164
        %v1166 = vrot.slane %v1101, 3
        %v1167 = vsel %vm1144, %v1164, %v1166
        %v1168 = vrot.slane %v1104, 3
        %v1169 = vsel %vm1144, %v1166, %v1168
        %v1170 = vrot.slane %v1106, 3
        %v1171 = vsel %vm1144, %v1168, %v1170
        %v1172 = vrot.slane %v1109, 3
        %v1173 = vsel %vm1144, %v1170, %v1172
        %v1174 = vrot.slane %v1111, 3
        %v1175 = vsel %vm1144, %v1172, %v1174
        %v1176 = vrot.slane %v1114, 3
        %v1177 = vsel %vm1144, %v1174, %v1176
        %v1178 = vrot.slane %v1116, 3
        %v1179 = vsel %vm1144, %v1176, %v1178
        %v1180 = vrot.slane %v1119, 3
        %v1181 = vsel %vm1144, %v1178, %v1180
        %v1200 = vadd.f32 %v1019, %v1147
        %v1201 = vadd.f32 %v1020, %v1149
        %v1202 = vadd.f32 %v1021, %v1151
        %v1203 = vadd.f32 %v1022, %v1153
        %v1204 = vadd.f32 %v1023, %v1155
        %v1205 = vadd.f32 %v1024, %v1157
        %v1206 = vadd.f32 %v1025, %v1159
        %v1207 = vadd.f32 %v1026, %v1161
        %v1208 = vadd.f32 %v1027, %v1163
        %v1209 = vadd.f32 %v1028, %v1165
        %v1210 = vadd.f32 %v1029, %v1167
        %v1211 = vadd.f32 %v1030, %v1169
        %v1212 = vadd.f32 %v1031, %v1171
        %v1213 = vadd.f32 %v1032, %v1173
        %v1214 = vadd.f32 %v1033, %v1175
        %v1215 = vadd.f32 %v1034, %v1177
        %v1216 = vadd.f32 %v1035, %v1179
        %v1217 = vadd.f32 %v1036, %v1181
        %s1218 = scalar_lea.vmem %s1, 100
        %v1219 = vld [vmem:[%s1218] sm:$0xf]
        %v1220 = vld [vmem:[%s1218 + $0x4] sm:$0xf]
        %v1221 = vld [vmem:[%s1218 + $0x8] sm:$0xf]
        %v1222 = vld [vmem:[%s1218 + $0xc] sm:$0xf]
        %v1223 = vld [vmem:[%s1218 + $0x10] sm:$0x3]
        %v1229 = vunpack.c.l.b16 %v1219
        %v1230 = vunpack.c.l.b16 %v1220
        %v1231 = vunpack.c.l.b16 %v1221
        %v1232 = vunpack.c.l.b16 %v1222
        %v1233 = vunpack.c.l.b16 %v1223
        %v1234 = vpack.c.b16 %v1230, %v1229
        %v1235 = vpack.c.b16 %v1232, %v1231
        %v1236 = vpack.c.b16 %v1233, %v1233
        %v1240 = vsel %vm428, %v1236, 0
        %1242 = vmatpush.bf16.msra.mxu0 0
        %1243 = vmatpush.bf16.msra.mxu0 0
        %1244 = vmatpush.bf16.msra.mxu0 0
        %1245 = vmatpush.bf16.msra.mxu0 0
        %1246 = vmatpush.bf16.msra.mxu0 0
        %1247 = vmatpush.bf16.msra.mxu0 %v1240
        %1248 = vmatpush.bf16.msra.mxu0 %v1235
        %1249 = vmatpush.bf16.msra.mxu0 %v1234
        %1250 = vmatmul.bf16.gmra.mxu0 %v393
        %v1251 = vpop.f32.mrf.mxu0
        %v1252 = vpop.f32.mrf.mxu0
        %1253 = vmatmul.bf16.gmra.mxu0 %v396
        %v1254 = vpop.f32.mrf.mxu0
        %v1255 = vadd.f32 0.0, %v1254
        %v1256 = vpop.f32.mrf.mxu0
        %v1257 = vadd.f32 0.0, %v1256
        %1258 = vmatmul.bf16.gmra.mxu0 %v399
        %v1259 = vpop.f32.mrf.mxu0
        %v1260 = vadd.f32 0.0, %v1259
        %v1261 = vpop.f32.mrf.mxu0
        %v1262 = vadd.f32 0.0, %v1261
        %1263 = vmatmul.bf16.gmra.mxu0 %v402
        %v1264 = vpop.f32.mrf.mxu0
        %v1265 = vadd.f32 0.0, %v1264
        %v1266 = vpop.f32.mrf.mxu0
        %v1267 = vadd.f32 0.0, %v1266
        %1268 = vmatmul.bf16.gmra.mxu0 %v405
        %v1269 = vpop.f32.mrf.mxu0
        %v1270 = vadd.f32 0.0, %v1269
        %v1271 = vpop.f32.mrf.mxu0
        %v1272 = vadd.f32 0.0, %v1271
        %1273 = vmatmul.bf16.gmra.mxu0 %v408
        %v1274 = vpop.f32.mrf.mxu0
        %v1275 = vadd.f32 0.0, %v1274
        %v1276 = vpop.f32.mrf.mxu0
        %v1277 = vadd.f32 0.0, %v1276
        %1278 = vmatmul.bf16.gmra.mxu0 %v411
        %v1279 = vpop.f32.mrf.mxu0
        %v1280 = vadd.f32 0.0, %v1279
        %v1281 = vpop.f32.mrf.mxu0
        %v1282 = vadd.f32 0.0, %v1281
        %1283 = vmatmul.bf16.gmra.mxu0 %v414
        %v1284 = vpop.f32.mrf.mxu0
        %v1285 = vadd.f32 0.0, %v1284
        %v1286 = vpop.f32.mrf.mxu0
        %v1287 = vadd.f32 0.0, %v1286
        %1288 = vmatmul.bf16.gmra.mxu0 %v417
        %v1289 = vpop.f32.mrf.mxu0
        %v1290 = vadd.f32 0.0, %v1289
        %v1291 = vpop.f32.mrf.mxu0
        %v1292 = vadd.f32 0.0, %v1291
        %1293 = vmatmul.bf16.gmra.mxu0 %v420
        %v1294 = vpop.f32.mrf.mxu0
        %v1295 = vadd.f32 0.0, %v1294
        %v1296 = vpop.f32.mrf.mxu0
        %v1297 = vadd.f32 0.0, %v1296
        %1298 = vmatmul.bf16.gmra.mxu0 %v423
        %v1299 = vpop.f32.mrf.mxu0
        %v1300 = vadd.f32 0.0, %v1299
        %v1301 = vpop.f32.mrf.mxu0
        %1302 = vmatmul.bf16.gmra.mxu0 %v426
        %v1303 = vpop.f32.mrf.mxu0
        %v1304 = vpop.f32.mrf.mxu0
        %1305 = vdwg.mxu0
        %vm1325 = vcmask 1043456
        %v1326 = vrot.slane %v1255, 4
        %v1327 = vrot.slane %v1257, 4
        %v1328 = vsel %vm1325, %v1326, %v1327
        %v1329 = vrot.slane %v1260, 4
        %v1330 = vsel %vm1325, %v1327, %v1329
        %v1331 = vrot.slane %v1262, 4
        %v1332 = vsel %vm1325, %v1329, %v1331
        %v1333 = vrot.slane %v1265, 4
        %v1334 = vsel %vm1325, %v1331, %v1333
        %v1335 = vrot.slane %v1267, 4
        %v1336 = vsel %vm1325, %v1333, %v1335
        %v1337 = vrot.slane %v1270, 4
        %v1338 = vsel %vm1325, %v1335, %v1337
        %v1339 = vrot.slane %v1272, 4
        %v1340 = vsel %vm1325, %v1337, %v1339
        %v1341 = vrot.slane %v1275, 4
        %v1342 = vsel %vm1325, %v1339, %v1341
        %v1343 = vrot.slane %v1277, 4
        %v1344 = vsel %vm1325, %v1341, %v1343
        %v1345 = vrot.slane %v1280, 4
        %v1346 = vsel %vm1325, %v1343, %v1345
        %v1347 = vrot.slane %v1282, 4
        %v1348 = vsel %vm1325, %v1345, %v1347
        %v1349 = vrot.slane %v1285, 4
        %v1350 = vsel %vm1325, %v1347, %v1349
        %v1351 = vrot.slane %v1287, 4
        %v1352 = vsel %vm1325, %v1349, %v1351
        %v1353 = vrot.slane %v1290, 4
        %v1354 = vsel %vm1325, %v1351, %v1353
        %v1355 = vrot.slane %v1292, 4
        %v1356 = vsel %vm1325, %v1353, %v1355
        %v1357 = vrot.slane %v1295, 4
        %v1358 = vsel %vm1325, %v1355, %v1357
        %v1359 = vrot.slane %v1297, 4
        %v1360 = vsel %vm1325, %v1357, %v1359
        %v1361 = vrot.slane %v1300, 4
        %v1362 = vsel %vm1325, %v1359, %v1361
        %v1381 = vadd.f32 %v1200, %v1328
        %v1382 = vadd.f32 %v1201, %v1330
        %v1383 = vadd.f32 %v1202, %v1332
        %v1384 = vadd.f32 %v1203, %v1334
        %v1385 = vadd.f32 %v1204, %v1336
        %v1386 = vadd.f32 %v1205, %v1338
        %v1387 = vadd.f32 %v1206, %v1340
        %v1388 = vadd.f32 %v1207, %v1342
        %v1389 = vadd.f32 %v1208, %v1344
        %v1390 = vadd.f32 %v1209, %v1346
        %v1391 = vadd.f32 %v1210, %v1348
        %v1392 = vadd.f32 %v1211, %v1350
        %v1393 = vadd.f32 %v1212, %v1352
        %v1394 = vadd.f32 %v1213, %v1354
        %v1395 = vadd.f32 %v1214, %v1356
        %v1396 = vadd.f32 %v1215, %v1358
        %v1397 = vadd.f32 %v1216, %v1360
        %v1398 = vadd.f32 %v1217, %v1362
        %s1399 = scalar_lea.vmem %s1, 120
        %v1400 = vld [vmem:[%s1399] sm:$0xf]
        %v1401 = vld [vmem:[%s1399 + $0x4] sm:$0xf]
        %v1402 = vld [vmem:[%s1399 + $0x8] sm:$0xf]
        %v1403 = vld [vmem:[%s1399 + $0xc] sm:$0xf]
        %v1404 = vld [vmem:[%s1399 + $0x10] sm:$0x3]
        %v1410 = vunpack.c.l.b16 %v1400
        %v1411 = vunpack.c.l.b16 %v1401
        %v1412 = vunpack.c.l.b16 %v1402
        %v1413 = vunpack.c.l.b16 %v1403
        %v1414 = vunpack.c.l.b16 %v1404
        %v1415 = vpack.c.b16 %v1411, %v1410
        %v1416 = vpack.c.b16 %v1413, %v1412
        %v1417 = vpack.c.b16 %v1414, %v1414
        %v1421 = vsel %vm428, %v1417, 0
        %1423 = vmatpush.bf16.msra.mxu0 0
        %1424 = vmatpush.bf16.msra.mxu0 0
        %1425 = vmatpush.bf16.msra.mxu0 0
        %1426 = vmatpush.bf16.msra.mxu0 0
        %1427 = vmatpush.bf16.msra.mxu0 0
        %1428 = vmatpush.bf16.msra.mxu0 %v1421
        %1429 = vmatpush.bf16.msra.mxu0 %v1416
        %1430 = vmatpush.bf16.msra.mxu0 %v1415
        %1431 = vmatmul.bf16.gmra.mxu0 %v393
        %v1432 = vpop.f32.mrf.mxu0
        %v1433 = vpop.f32.mrf.mxu0
        %1434 = vmatmul.bf16.gmra.mxu0 %v396
        %v1435 = vpop.f32.mrf.mxu0
        %v1436 = vpop.f32.mrf.mxu0
        %1437 = vmatmul.bf16.gmra.mxu0 %v399
        %v1438 = vpop.f32.mrf.mxu0
        %v1439 = vadd.f32 0.0, %v1438
        %v1440 = vpop.f32.mrf.mxu0
        %v1441 = vadd.f32 0.0, %v1440
        %1442 = vmatmul.bf16.gmra.mxu0 %v402
        %v1443 = vpop.f32.mrf.mxu0
        %v1444 = vadd.f32 0.0, %v1443
        %v1445 = vpop.f32.mrf.mxu0
        %v1446 = vadd.f32 0.0, %v1445
        %1447 = vmatmul.bf16.gmra.mxu0 %v405
        %v1448 = vpop.f32.mrf.mxu0
        %v1449 = vadd.f32 0.0, %v1448
        %v1450 = vpop.f32.mrf.mxu0
        %v1451 = vadd.f32 0.0, %v1450
        %1452 = vmatmul.bf16.gmra.mxu0 %v408
        %v1453 = vpop.f32.mrf.mxu0
        %v1454 = vadd.f32 0.0, %v1453
        %v1455 = vpop.f32.mrf.mxu0
        %v1456 = vadd.f32 0.0, %v1455
        %1457 = vmatmul.bf16.gmra.mxu0 %v411
        %v1458 = vpop.f32.mrf.mxu0
        %v1459 = vadd.f32 0.0, %v1458
        %v1460 = vpop.f32.mrf.mxu0
        %v1461 = vadd.f32 0.0, %v1460
        %1462 = vmatmul.bf16.gmra.mxu0 %v414
        %v1463 = vpop.f32.mrf.mxu0
        %v1464 = vadd.f32 0.0, %v1463
        %v1465 = vpop.f32.mrf.mxu0
        %v1466 = vadd.f32 0.0, %v1465
        %1467 = vmatmul.bf16.gmra.mxu0 %v417
        %v1468 = vpop.f32.mrf.mxu0
        %v1469 = vadd.f32 0.0, %v1468
        %v1470 = vpop.f32.mrf.mxu0
        %v1471 = vadd.f32 0.0, %v1470
        %1472 = vmatmul.bf16.gmra.mxu0 %v420
        %v1473 = vpop.f32.mrf.mxu0
        %v1474 = vadd.f32 0.0, %v1473
        %v1475 = vpop.f32.mrf.mxu0
        %v1476 = vadd.f32 0.0, %v1475
        %1477 = vmatmul.bf16.gmra.mxu0 %v423
        %v1478 = vpop.f32.mrf.mxu0
        %v1479 = vadd.f32 0.0, %v1478
        %v1480 = vpop.f32.mrf.mxu0
        %v1481 = vadd.f32 0.0, %v1480
        %1482 = vmatmul.bf16.gmra.mxu0 %v426
        %v1483 = vpop.f32.mrf.mxu0
        %v1484 = vadd.f32 0.0, %v1483
        %v1485 = vpop.f32.mrf.mxu0
        %1486 = vdwg.mxu0
        %v1506 = vrot.slane %v1439, 4
        %v1507 = vrot.slane %v1441, 4
        %v1508 = vsel %vm1325, %v1506, %v1507
        %v1509 = vrot.slane %v1444, 4
        %v1510 = vsel %vm1325, %v1507, %v1509
        %v1511 = vrot.slane %v1446, 4
        %v1512 = vsel %vm1325, %v1509, %v1511
        %v1513 = vrot.slane %v1449, 4
        %v1514 = vsel %vm1325, %v1511, %v1513
        %v1515 = vrot.slane %v1451, 4
        %v1516 = vsel %vm1325, %v1513, %v1515
        %v1517 = vrot.slane %v1454, 4
        %v1518 = vsel %vm1325, %v1515, %v1517
        %v1519 = vrot.slane %v1456, 4
        %v1520 = vsel %vm1325, %v1517, %v1519
        %v1521 = vrot.slane %v1459, 4
        %v1522 = vsel %vm1325, %v1519, %v1521
        %v1523 = vrot.slane %v1461, 4
        %v1524 = vsel %vm1325, %v1521, %v1523
        %v1525 = vrot.slane %v1464, 4
        %v1526 = vsel %vm1325, %v1523, %v1525
        %v1527 = vrot.slane %v1466, 4
        %v1528 = vsel %vm1325, %v1525, %v1527
        %v1529 = vrot.slane %v1469, 4
        %v1530 = vsel %vm1325, %v1527, %v1529
        %v1531 = vrot.slane %v1471, 4
        %v1532 = vsel %vm1325, %v1529, %v1531
        %v1533 = vrot.slane %v1474, 4
        %v1534 = vsel %vm1325, %v1531, %v1533
        %v1535 = vrot.slane %v1476, 4
        %v1536 = vsel %vm1325, %v1533, %v1535
        %v1537 = vrot.slane %v1479, 4
        %v1538 = vsel %vm1325, %v1535, %v1537
        %v1539 = vrot.slane %v1481, 4
        %v1540 = vsel %vm1325, %v1537, %v1539
        %v1541 = vrot.slane %v1484, 4
        %v1542 = vsel %vm1325, %v1539, %v1541
        %v1561 = vadd.f32 %v1381, %v1508
        %v1562 = vadd.f32 %v1382, %v1510
        %v1563 = vadd.f32 %v1383, %v1512
        %v1564 = vadd.f32 %v1384, %v1514
        %v1565 = vadd.f32 %v1385, %v1516
        %v1566 = vadd.f32 %v1386, %v1518
        %v1567 = vadd.f32 %v1387, %v1520
        %v1568 = vadd.f32 %v1388, %v1522
        %v1569 = vadd.f32 %v1389, %v1524
        %v1570 = vadd.f32 %v1390, %v1526
        %v1571 = vadd.f32 %v1391, %v1528
        %v1572 = vadd.f32 %v1392, %v1530
        %v1573 = vadd.f32 %v1393, %v1532
        %v1574 = vadd.f32 %v1394, %v1534
        %v1575 = vadd.f32 %v1395, %v1536
        %v1576 = vadd.f32 %v1396, %v1538
        %v1577 = vadd.f32 %v1397, %v1540
        %v1578 = vadd.f32 %v1398, %v1542
        %s1579 = scalar_lea.vmem %s1, 140
        %v1580 = vld [vmem:[%s1579] sm:$0xf]
        %v1581 = vld [vmem:[%s1579 + $0x4] sm:$0xf]
        %v1582 = vld [vmem:[%s1579 + $0x8] sm:$0xf]
        %v1583 = vld [vmem:[%s1579 + $0xc] sm:$0xf]
        %v1584 = vld [vmem:[%s1579 + $0x10] sm:$0x3]
        %v1590 = vunpack.c.l.b16 %v1580
        %v1591 = vunpack.c.l.b16 %v1581
        %v1592 = vunpack.c.l.b16 %v1582
        %v1593 = vunpack.c.l.b16 %v1583
        %v1594 = vunpack.c.l.b16 %v1584
        %v1595 = vpack.c.b16 %v1591, %v1590
        %v1596 = vpack.c.b16 %v1593, %v1592
        %v1597 = vpack.c.b16 %v1594, %v1594
        %v1601 = vsel %vm428, %v1597, 0
        %1603 = vmatpush.bf16.msra.mxu0 0
        %1604 = vmatpush.bf16.msra.mxu0 0
        %1605 = vmatpush.bf16.msra.mxu0 0
        %1606 = vmatpush.bf16.msra.mxu0 0
        %1607 = vmatpush.bf16.msra.mxu0 0
        %1608 = vmatpush.bf16.msra.mxu0 %v1601
        %1609 = vmatpush.bf16.msra.mxu0 %v1596
        %1610 = vmatpush.bf16.msra.mxu0 %v1595
        %1611 = vmatmul.bf16.gmra.mxu0 %v393
        %v1612 = vpop.f32.mrf.mxu0
        %v1613 = vpop.f32.mrf.mxu0
        %1614 = vmatmul.bf16.gmra.mxu0 %v396
        %v1615 = vpop.f32.mrf.mxu0
        %v1616 = vpop.f32.mrf.mxu0
        %1617 = vmatmul.bf16.gmra.mxu0 %v399
        %v1618 = vpop.f32.mrf.mxu0
        %v1619 = vadd.f32 0.0, %v1618
        %v1620 = vpop.f32.mrf.mxu0
        %v1621 = vadd.f32 0.0, %v1620
        %1622 = vmatmul.bf16.gmra.mxu0 %v402
        %v1623 = vpop.f32.mrf.mxu0
        %v1624 = vadd.f32 0.0, %v1623
        %v1625 = vpop.f32.mrf.mxu0
        %v1626 = vadd.f32 0.0, %v1625
        %1627 = vmatmul.bf16.gmra.mxu0 %v405
        %v1628 = vpop.f32.mrf.mxu0
        %v1629 = vadd.f32 0.0, %v1628
        %v1630 = vpop.f32.mrf.mxu0
        %v1631 = vadd.f32 0.0, %v1630
        %1632 = vmatmul.bf16.gmra.mxu0 %v408
        %v1633 = vpop.f32.mrf.mxu0
        %v1634 = vadd.f32 0.0, %v1633
        %v1635 = vpop.f32.mrf.mxu0
        %v1636 = vadd.f32 0.0, %v1635
        %1637 = vmatmul.bf16.gmra.mxu0 %v411
        %v1638 = vpop.f32.mrf.mxu0
        %v1639 = vadd.f32 0.0, %v1638
        %v1640 = vpop.f32.mrf.mxu0
        %v1641 = vadd.f32 0.0, %v1640
        %1642 = vmatmul.bf16.gmra.mxu0 %v414
        %v1643 = vpop.f32.mrf.mxu0
        %v1644 = vadd.f32 0.0, %v1643
        %v1645 = vpop.f32.mrf.mxu0
        %v1646 = vadd.f32 0.0, %v1645
        %1647 = vmatmul.bf16.gmra.mxu0 %v417
        %v1648 = vpop.f32.mrf.mxu0
        %v1649 = vadd.f32 0.0, %v1648
        %v1650 = vpop.f32.mrf.mxu0
        %v1651 = vadd.f32 0.0, %v1650
        %1652 = vmatmul.bf16.gmra.mxu0 %v420
        %v1653 = vpop.f32.mrf.mxu0
        %v1654 = vadd.f32 0.0, %v1653
        %v1655 = vpop.f32.mrf.mxu0
        %v1656 = vadd.f32 0.0, %v1655
        %1657 = vmatmul.bf16.gmra.mxu0 %v423
        %v1658 = vpop.f32.mrf.mxu0
        %v1659 = vadd.f32 0.0, %v1658
        %v1660 = vpop.f32.mrf.mxu0
        %v1661 = vadd.f32 0.0, %v1660
        %1662 = vmatmul.bf16.gmra.mxu0 %v426
        %v1663 = vpop.f32.mrf.mxu0
        %v1664 = vadd.f32 0.0, %v1663
        %v1665 = vpop.f32.mrf.mxu0
        %1666 = vdwg.mxu0
        %vm1686 = vcmask 1042432
        %v1687 = vrot.slane %v1619, 5
        %v1688 = vrot.slane %v1621, 5
        %v1689 = vsel %vm1686, %v1687, %v1688
        %v1690 = vrot.slane %v1624, 5
        %v1691 = vsel %vm1686, %v1688, %v1690
        %v1692 = vrot.slane %v1626, 5
        %v1693 = vsel %vm1686, %v1690, %v1692
        %v1694 = vrot.slane %v1629, 5
        %v1695 = vsel %vm1686, %v1692, %v1694
        %v1696 = vrot.slane %v1631, 5
        %v1697 = vsel %vm1686, %v1694, %v1696
        %v1698 = vrot.slane %v1634, 5
        %v1699 = vsel %vm1686, %v1696, %v1698
        %v1700 = vrot.slane %v1636, 5
        %v1701 = vsel %vm1686, %v1698, %v1700
        %v1702 = vrot.slane %v1639, 5
        %v1703 = vsel %vm1686, %v1700, %v1702
        %v1704 = vrot.slane %v1641, 5
        %v1705 = vsel %vm1686, %v1702, %v1704
        %v1706 = vrot.slane %v1644, 5
        %v1707 = vsel %vm1686, %v1704, %v1706
        %v1708 = vrot.slane %v1646, 5
        %v1709 = vsel %vm1686, %v1706, %v1708
        %v1710 = vrot.slane %v1649, 5
        %v1711 = vsel %vm1686, %v1708, %v1710
        %v1712 = vrot.slane %v1651, 5
        %v1713 = vsel %vm1686, %v1710, %v1712
        %v1714 = vrot.slane %v1654, 5
        %v1715 = vsel %vm1686, %v1712, %v1714
        %v1716 = vrot.slane %v1656, 5
        %v1717 = vsel %vm1686, %v1714, %v1716
        %v1718 = vrot.slane %v1659, 5
        %v1719 = vsel %vm1686, %v1716, %v1718
        %v1720 = vrot.slane %v1661, 5
        %v1721 = vsel %vm1686, %v1718, %v1720
        %v1722 = vrot.slane %v1664, 5
        %v1723 = vsel %vm1686, %v1720, %v1722
        %v1742 = vadd.f32 %v1561, %v1689
        %v1743 = vadd.f32 %v1562, %v1691
        %v1744 = vadd.f32 %v1563, %v1693
        %v1745 = vadd.f32 %v1564, %v1695
        %v1746 = vadd.f32 %v1565, %v1697
        %v1747 = vadd.f32 %v1566, %v1699
        %v1748 = vadd.f32 %v1567, %v1701
        %v1749 = vadd.f32 %v1568, %v1703
        %v1750 = vadd.f32 %v1569, %v1705
        %v1751 = vadd.f32 %v1570, %v1707
        %v1752 = vadd.f32 %v1571, %v1709
        %v1753 = vadd.f32 %v1572, %v1711
        %v1754 = vadd.f32 %v1573, %v1713
        %v1755 = vadd.f32 %v1574, %v1715
        %v1756 = vadd.f32 %v1575, %v1717
        %v1757 = vadd.f32 %v1576, %v1719
        %v1758 = vadd.f32 %v1577, %v1721
        %v1759 = vadd.f32 %v1578, %v1723
        %s1760 = scalar_lea.vmem %s1, 160
        %v1761 = vld [vmem:[%s1760] sm:$0xf]
        %v1762 = vld [vmem:[%s1760 + $0x4] sm:$0xf]
        %v1763 = vld [vmem:[%s1760 + $0x8] sm:$0xf]
        %v1764 = vld [vmem:[%s1760 + $0xc] sm:$0xf]
        %v1765 = vld [vmem:[%s1760 + $0x10] sm:$0x3]
        %v1771 = vunpack.c.l.b16 %v1761
        %v1772 = vunpack.c.l.b16 %v1762
        %v1773 = vunpack.c.l.b16 %v1763
        %v1774 = vunpack.c.l.b16 %v1764
        %v1775 = vunpack.c.l.b16 %v1765
        %v1776 = vpack.c.b16 %v1772, %v1771
        %v1777 = vpack.c.b16 %v1774, %v1773
        %v1778 = vpack.c.b16 %v1775, %v1775
        %v1782 = vsel %vm428, %v1778, 0
        %1784 = vmatpush.bf16.msra.mxu0 0
        %1785 = vmatpush.bf16.msra.mxu0 0
        %1786 = vmatpush.bf16.msra.mxu0 0
        %1787 = vmatpush.bf16.msra.mxu0 0
        %1788 = vmatpush.bf16.msra.mxu0 0
        %1789 = vmatpush.bf16.msra.mxu0 %v1782
        %1790 = vmatpush.bf16.msra.mxu0 %v1777
        %1791 = vmatpush.bf16.msra.mxu0 %v1776
        %1792 = vmatmul.bf16.gmra.mxu0 %v393
        %v1793 = vpop.f32.mrf.mxu0
        %v1794 = vpop.f32.mrf.mxu0
        %1795 = vmatmul.bf16.gmra.mxu0 %v396
        %v1796 = vpop.f32.mrf.mxu0
        %v1797 = vpop.f32.mrf.mxu0
        %1798 = vmatmul.bf16.gmra.mxu0 %v399
        %v1799 = vpop.f32.mrf.mxu0
        %v1800 = vadd.f32 0.0, %v1799
        %v1801 = vpop.f32.mrf.mxu0
        %v1802 = vadd.f32 0.0, %v1801
        %1803 = vmatmul.bf16.gmra.mxu0 %v402
        %v1804 = vpop.f32.mrf.mxu0
        %v1805 = vadd.f32 0.0, %v1804
        %v1806 = vpop.f32.mrf.mxu0
        %v1807 = vadd.f32 0.0, %v1806
        %1808 = vmatmul.bf16.gmra.mxu0 %v405
        %v1809 = vpop.f32.mrf.mxu0
        %v1810 = vadd.f32 0.0, %v1809
        %v1811 = vpop.f32.mrf.mxu0
        %v1812 = vadd.f32 0.0, %v1811
        %1813 = vmatmul.bf16.gmra.mxu0 %v408
        %v1814 = vpop.f32.mrf.mxu0
        %v1815 = vadd.f32 0.0, %v1814
        %v1816 = vpop.f32.mrf.mxu0
        %v1817 = vadd.f32 0.0, %v1816
        %1818 = vmatmul.bf16.gmra.mxu0 %v411
        %v1819 = vpop.f32.mrf.mxu0
        %v1820 = vadd.f32 0.0, %v1819
        %v1821 = vpop.f32.mrf.mxu0
        %v1822 = vadd.f32 0.0, %v1821
        %1823 = vmatmul.bf16.gmra.mxu0 %v414
        %v1824 = vpop.f32.mrf.mxu0
        %v1825 = vadd.f32 0.0, %v1824
        %v1826 = vpop.f32.mrf.mxu0
        %v1827 = vadd.f32 0.0, %v1826
        %1828 = vmatmul.bf16.gmra.mxu0 %v417
        %v1829 = vpop.f32.mrf.mxu0
        %v1830 = vadd.f32 0.0, %v1829
        %v1831 = vpop.f32.mrf.mxu0
        %v1832 = vadd.f32 0.0, %v1831
        %1833 = vmatmul.bf16.gmra.mxu0 %v420
        %v1834 = vpop.f32.mrf.mxu0
        %v1835 = vadd.f32 0.0, %v1834
        %v1836 = vpop.f32.mrf.mxu0
        %v1837 = vadd.f32 0.0, %v1836
        %1838 = vmatmul.bf16.gmra.mxu0 %v423
        %v1839 = vpop.f32.mrf.mxu0
        %v1840 = vadd.f32 0.0, %v1839
        %v1841 = vpop.f32.mrf.mxu0
        %v1842 = vadd.f32 0.0, %v1841
        %1843 = vmatmul.bf16.gmra.mxu0 %v426
        %v1844 = vpop.f32.mrf.mxu0
        %v1845 = vadd.f32 0.0, %v1844
        %v1846 = vpop.f32.mrf.mxu0
        %1847 = vdwg.mxu0
        %v1867 = vrot.slane %v1800, 6
        %v1868 = vrot.slane %v1802, 6
        %v1869 = vsel %vm428, %v1867, %v1868
        %v1870 = vrot.slane %v1805, 6
        %v1871 = vsel %vm428, %v1868, %v1870
        %v1872 = vrot.slane %v1807, 6
        %v1873 = vsel %vm428, %v1870, %v1872
        %v1874 = vrot.slane %v1810, 6
        %v1875 = vsel %vm428, %v1872, %v1874
        %v1876 = vrot.slane %v1812, 6
        %v1877 = vsel %vm428, %v1874, %v1876
        %v1878 = vrot.slane %v1815, 6
        %v1879 = vsel %vm428, %v1876, %v1878
        %v1880 = vrot.slane %v1817, 6
        %v1881 = vsel %vm428, %v1878, %v1880
        %v1882 = vrot.slane %v1820, 6
        %v1883 = vsel %vm428, %v1880, %v1882
        %v1884 = vrot.slane %v1822, 6
        %v1885 = vsel %vm428, %v1882, %v1884
        %v1886 = vrot.slane %v1825, 6
        %v1887 = vsel %vm428, %v1884, %v1886
        %v1888 = vrot.slane %v1827, 6
        %v1889 = vsel %vm428, %v1886, %v1888
        %v1890 = vrot.slane %v1830, 6
        %v1891 = vsel %vm428, %v1888, %v1890
        %v1892 = vrot.slane %v1832, 6
        %v1893 = vsel %vm428, %v1890, %v1892
        %v1894 = vrot.slane %v1835, 6
        %v1895 = vsel %vm428, %v1892, %v1894
        %v1896 = vrot.slane %v1837, 6
        %v1897 = vsel %vm428, %v1894, %v1896
        %v1898 = vrot.slane %v1840, 6
        %v1899 = vsel %vm428, %v1896, %v1898
        %v1900 = vrot.slane %v1842, 6
        %v1901 = vsel %vm428, %v1898, %v1900
        %v1902 = vrot.slane %v1845, 6
        %v1903 = vsel %vm428, %v1900, %v1902
        %v1922 = vadd.f32 %v1742, %v1869
        %v1923 = vadd.f32 %v1743, %v1871
        %v1924 = vadd.f32 %v1744, %v1873
        %v1925 = vadd.f32 %v1745, %v1875
        %v1926 = vadd.f32 %v1746, %v1877
        %v1927 = vadd.f32 %v1747, %v1879
        %v1928 = vadd.f32 %v1748, %v1881
        %v1929 = vadd.f32 %v1749, %v1883
        %v1930 = vadd.f32 %v1750, %v1885
        %v1931 = vadd.f32 %v1751, %v1887
        %v1932 = vadd.f32 %v1752, %v1889
        %v1933 = vadd.f32 %v1753, %v1891
        %v1934 = vadd.f32 %v1754, %v1893
        %v1935 = vadd.f32 %v1755, %v1895
        %v1936 = vadd.f32 %v1756, %v1897
        %v1937 = vadd.f32 %v1757, %v1899
        %v1938 = vadd.f32 %v1758, %v1901
        %v1939 = vadd.f32 %v1759, %v1903
        %v1940 = vld [vmem:[%s2] sm:$0x1]
        %v1942 = vperm.slane %v1940, 0
        %v1944 = vadd.f32 %v1922, %v1942
        %v1945 = vadd.f32 %v1923, %v1942
        %v1946 = vadd.f32 %v1924, %v1942
        %v1947 = vadd.f32 %v1925, %v1942
        %v1948 = vadd.f32 %v1926, %v1942
        %v1949 = vadd.f32 %v1927, %v1942
        %v1950 = vadd.f32 %v1928, %v1942
        %v1951 = vadd.f32 %v1929, %v1942
        %v1952 = vadd.f32 %v1930, %v1942
        %v1953 = vadd.f32 %v1931, %v1942
        %v1954 = vadd.f32 %v1932, %v1942
        %v1955 = vadd.f32 %v1933, %v1942
        %v1956 = vadd.f32 %v1934, %v1942
        %v1957 = vadd.f32 %v1935, %v1942
        %v1958 = vadd.f32 %v1936, %v1942
        %v1959 = vadd.f32 %v1937, %v1942
        %v1960 = vadd.f32 %v1938, %v1942
        %v1961 = vadd.f32 %v1939, %v1942
        %v1980 = vrot.slane %v1944, 2
        %v1981 = vrot.slane %v1944, 4
        %v1982 = vrot.slane %v1944, 6
        %v1983 = vrot.slane %v1945, 2
        %v1984 = vrot.slane %v1945, 4
        %v1985 = vrot.slane %v1945, 6
        %v1986 = vrot.slane %v1946, 2
        %v1987 = vrot.slane %v1946, 4
        %v1988 = vrot.slane %v1946, 6
        %v1989 = vrot.slane %v1947, 2
        %v1990 = vrot.slane %v1947, 4
        %v1991 = vrot.slane %v1947, 6
        %v1992 = vrot.slane %v1948, 4
        %v1993 = vrot.slane %v1948, 6
        %v1994 = vrot.slane %v1949, 2
        %v1995 = vrot.slane %v1949, 4
        %v1996 = vrot.slane %v1949, 6
        %v1997 = vrot.slane %v1950, 2
        %v1998 = vrot.slane %v1950, 6
        %v1999 = vrot.slane %v1951, 2
        %v2000 = vrot.slane %v1951, 4
        %v2001 = vrot.slane %v1951, 6
        %v2002 = vrot.slane %v1952, 2
        %v2003 = vrot.slane %v1952, 4
        %v2004 = vrot.slane %v1953, 2
        %v2005 = vrot.slane %v1953, 4
        %v2006 = vrot.slane %v1953, 6
        %v2007 = vrot.slane %v1954, 2
        %v2008 = vrot.slane %v1954, 4
        %v2009 = vrot.slane %v1954, 6
        %v2010 = vrot.slane %v1955, 2
        %v2011 = vrot.slane %v1955, 4
        %v2012 = vrot.slane %v1955, 6
        %v2013 = vrot.slane %v1956, 2
        %v2014 = vrot.slane %v1956, 4
        %v2015 = vrot.slane %v1956, 6
        %v2016 = vrot.slane %v1957, 4
        %v2017 = vrot.slane %v1957, 6
        %v2018 = vrot.slane %v1958, 2
        %v2019 = vrot.slane %v1958, 4
        %v2020 = vrot.slane %v1958, 6
        %v2021 = vrot.slane %v1959, 2
        %v2022 = vrot.slane %v1959, 6
        %v2023 = vrot.slane %v1960, 2
        %v2024 = vrot.slane %v1960, 4
        %v2025 = vrot.slane %v1960, 6
        %v2026 = vrot.slane %v1961, 2
        %v2027 = vrot.slane %v1961, 4
        %v2076 = vmul.f32 %v1944, 0.5
        %v2077 = vmul.f32 %v1980, 0.5
        %v2078 = vmul.f32 %v1981, 0.5
        %v2079 = vmul.f32 %v1982, 0.5
        %v2080 = vmul.f32 %v1945, 0.5
        %v2081 = vmul.f32 %v1983, 0.5
        %v2082 = vmul.f32 %v1984, 0.5
        %v2083 = vmul.f32 %v1985, 0.5
        %v2084 = vmul.f32 %v1986, 0.5
        %v2085 = vmul.f32 %v1987, 0.5
        %v2086 = vmul.f32 %v1988, 0.5
        %v2087 = vmul.f32 %v1947, 0.5
        %v2088 = vmul.f32 %v1989, 0.5
        %v2089 = vmul.f32 %v1990, 0.5
        %v2090 = vmul.f32 %v1991, 0.5
        %v2091 = vmul.f32 %v1948, 0.5
        %v2092 = vmul.f32 %v1992, 0.5
        %v2093 = vmul.f32 %v1993, 0.5
        %v2094 = vmul.f32 %v1949, 0.5
        %v2095 = vmul.f32 %v1994, 0.5
        %v2096 = vmul.f32 %v1995, 0.5
        %v2097 = vmul.f32 %v1996, 0.5
        %v2098 = vmul.f32 %v1950, 0.5
        %v2099 = vmul.f32 %v1997, 0.5
        %v2100 = vmul.f32 %v1998, 0.5
        %v2101 = vmul.f32 %v1951, 0.5
        %v2102 = vmul.f32 %v1999, 0.5
        %v2103 = vmul.f32 %v2000, 0.5
        %v2104 = vmul.f32 %v2001, 0.5
        %v2105 = vmul.f32 %v1952, 0.5
        %v2106 = vmul.f32 %v2002, 0.5
        %v2107 = vmul.f32 %v2003, 0.5
        %v2108 = vmul.f32 %v1953, 0.5
        %v2109 = vmul.f32 %v2004, 0.5
        %v2110 = vmul.f32 %v2005, 0.5
        %v2111 = vmul.f32 %v2006, 0.5
        %v2112 = vmul.f32 %v1954, 0.5
        %v2113 = vmul.f32 %v2007, 0.5
        %v2114 = vmul.f32 %v2008, 0.5
        %v2115 = vmul.f32 %v2009, 0.5
        %v2116 = vmul.f32 %v2010, 0.5
        %v2117 = vmul.f32 %v2011, 0.5
        %v2118 = vmul.f32 %v2012, 0.5
        %v2119 = vmul.f32 %v1956, 0.5
        %v2120 = vmul.f32 %v2013, 0.5
        %v2121 = vmul.f32 %v2014, 0.5
        %v2122 = vmul.f32 %v2015, 0.5
        %v2123 = vmul.f32 %v1957, 0.5
        %v2124 = vmul.f32 %v2016, 0.5
        %v2125 = vmul.f32 %v2017, 0.5
        %v2126 = vmul.f32 %v1958, 0.5
        %v2127 = vmul.f32 %v2018, 0.5
        %v2128 = vmul.f32 %v2019, 0.5
        %v2129 = vmul.f32 %v2020, 0.5
        %v2130 = vmul.f32 %v1959, 0.5
        %v2131 = vmul.f32 %v2021, 0.5
        %v2132 = vmul.f32 %v2022, 0.5
        %v2133 = vmul.f32 %v1960, 0.5
        %v2134 = vmul.f32 %v2023, 0.5
        %v2135 = vmul.f32 %v2024, 0.5
        %v2136 = vmul.f32 %v2025, 0.5
        %v2137 = vmul.f32 %v1961, 0.5
        %v2138 = vmul.f32 %v2026, 0.5
        %v2139 = vmul.f32 %v2027, 0.5
        %v2140 = vtanh.pop %v2076
        %v2141 = vtanh.pop %v2077
        %v2142 = vtanh.pop %v2078
        %v2143 = vtanh.pop %v2079
        %v2144 = vtanh.pop %v2080
        %v2145 = vtanh.pop %v2081
        %v2146 = vtanh.pop %v2082
        %v2147 = vtanh.pop %v2083
        %v2148 = vtanh.pop %v2084
        %v2149 = vtanh.pop %v2085
        %v2150 = vtanh.pop %v2086
        %v2151 = vtanh.pop %v2087
        %v2152 = vtanh.pop %v2088
        %v2153 = vtanh.pop %v2089
        %v2154 = vtanh.pop %v2090
        %v2155 = vtanh.pop %v2091
        %v2156 = vtanh.pop %v2092
        %v2157 = vtanh.pop %v2093
        %v2158 = vtanh.pop %v2094
        %v2159 = vtanh.pop %v2095
        %v2160 = vtanh.pop %v2096
        %v2161 = vtanh.pop %v2097
        %v2162 = vtanh.pop %v2098
        %v2163 = vtanh.pop %v2099
        %v2164 = vtanh.pop %v2100
        %v2165 = vtanh.pop %v2101
        %v2166 = vtanh.pop %v2102
        %v2167 = vtanh.pop %v2103
        %v2168 = vtanh.pop %v2104
        %v2169 = vtanh.pop %v2105
        %v2170 = vtanh.pop %v2106
        %v2171 = vtanh.pop %v2107
        %v2172 = vtanh.pop %v2108
        %v2173 = vtanh.pop %v2109
        %v2174 = vtanh.pop %v2110
        %v2175 = vtanh.pop %v2111
        %v2176 = vtanh.pop %v2112
        %v2177 = vtanh.pop %v2113
        %v2178 = vtanh.pop %v2114
        %v2179 = vtanh.pop %v2115
        %v2180 = vtanh.pop %v2116
        %v2181 = vtanh.pop %v2117
        %v2182 = vtanh.pop %v2118
        %v2183 = vtanh.pop %v2119
        %v2184 = vtanh.pop %v2120
        %v2185 = vtanh.pop %v2121
        %v2186 = vtanh.pop %v2122
        %v2187 = vtanh.pop %v2123
        %v2188 = vtanh.pop %v2124
        %v2189 = vtanh.pop %v2125
        %v2190 = vtanh.pop %v2126
        %v2191 = vtanh.pop %v2127
        %v2192 = vtanh.pop %v2128
        %v2193 = vtanh.pop %v2129
        %v2194 = vtanh.pop %v2130
        %v2195 = vtanh.pop %v2131
        %v2196 = vtanh.pop %v2132
        %v2197 = vtanh.pop %v2133
        %v2198 = vtanh.pop %v2134
        %v2199 = vtanh.pop %v2135
        %v2200 = vtanh.pop %v2136
        %v2201 = vtanh.pop %v2137
        %v2202 = vtanh.pop %v2138
        %v2203 = vtanh.pop %v2139
        %v2204 = vmul.f32 %v2140, 0.5
        %v2205 = vmul.f32 %v2141, 0.5
        %v2206 = vmul.f32 %v2142, 0.5
        %v2207 = vmul.f32 %v2143, 0.5
        %v2208 = vmul.f32 %v2144, 0.5
        %v2209 = vmul.f32 %v2145, 0.5
        %v2210 = vmul.f32 %v2146, 0.5
        %v2211 = vmul.f32 %v2147, 0.5
        %v2212 = vmul.f32 %v2148, 0.5
        %v2213 = vmul.f32 %v2149, 0.5
        %v2214 = vmul.f32 %v2150, 0.5
        %v2215 = vmul.f32 %v2151, 0.5
        %v2216 = vmul.f32 %v2152, 0.5
        %v2217 = vmul.f32 %v2153, 0.5
        %v2218 = vmul.f32 %v2154, 0.5
        %v2219 = vmul.f32 %v2155, 0.5
        %v2220 = vmul.f32 %v2156, 0.5
        %v2221 = vmul.f32 %v2157, 0.5
        %v2222 = vmul.f32 %v2158, 0.5
        %v2223 = vmul.f32 %v2159, 0.5
        %v2224 = vmul.f32 %v2160, 0.5
        %v2225 = vmul.f32 %v2161, 0.5
        %v2226 = vmul.f32 %v2162, 0.5
        %v2227 = vmul.f32 %v2163, 0.5
        %v2228 = vmul.f32 %v2164, 0.5
        %v2229 = vmul.f32 %v2165, 0.5
        %v2230 = vmul.f32 %v2166, 0.5
        %v2231 = vmul.f32 %v2167, 0.5
        %v2232 = vmul.f32 %v2168, 0.5
        %v2233 = vmul.f32 %v2169, 0.5
        %v2234 = vmul.f32 %v2170, 0.5
        %v2235 = vmul.f32 %v2171, 0.5
        %v2236 = vmul.f32 %v2172, 0.5
        %v2237 = vmul.f32 %v2173, 0.5
        %v2238 = vmul.f32 %v2174, 0.5
        %v2239 = vmul.f32 %v2175, 0.5
        %v2240 = vmul.f32 %v2176, 0.5
        %v2241 = vmul.f32 %v2177, 0.5
        %v2242 = vmul.f32 %v2178, 0.5
        %v2243 = vmul.f32 %v2179, 0.5
        %v2244 = vmul.f32 %v2180, 0.5
        %v2245 = vmul.f32 %v2181, 0.5
        %v2246 = vmul.f32 %v2182, 0.5
        %v2247 = vmul.f32 %v2183, 0.5
        %v2248 = vmul.f32 %v2184, 0.5
        %v2249 = vmul.f32 %v2185, 0.5
        %v2250 = vmul.f32 %v2186, 0.5
        %v2251 = vmul.f32 %v2187, 0.5
        %v2252 = vmul.f32 %v2188, 0.5
        %v2253 = vmul.f32 %v2189, 0.5
        %v2254 = vmul.f32 %v2190, 0.5
        %v2255 = vmul.f32 %v2191, 0.5
        %v2256 = vmul.f32 %v2192, 0.5
        %v2257 = vmul.f32 %v2193, 0.5
        %v2258 = vmul.f32 %v2194, 0.5
        %v2259 = vmul.f32 %v2195, 0.5
        %v2260 = vmul.f32 %v2196, 0.5
        %v2261 = vmul.f32 %v2197, 0.5
        %v2262 = vmul.f32 %v2198, 0.5
        %v2263 = vmul.f32 %v2199, 0.5
        %v2264 = vmul.f32 %v2200, 0.5
        %v2265 = vmul.f32 %v2201, 0.5
        %v2266 = vmul.f32 %v2202, 0.5
        %v2267 = vmul.f32 %v2203, 0.5
        %v2268 = vadd.f32 %v2204, 0.5
        %v2269 = vadd.f32 %v2205, 0.5
        %v2270 = vadd.f32 %v2206, 0.5
        %v2271 = vadd.f32 %v2207, 0.5
        %v2272 = vadd.f32 %v2208, 0.5
        %v2273 = vadd.f32 %v2209, 0.5
        %v2274 = vadd.f32 %v2210, 0.5
        %v2275 = vadd.f32 %v2211, 0.5
        %v2276 = vadd.f32 %v2212, 0.5
        %v2277 = vadd.f32 %v2213, 0.5
        %v2278 = vadd.f32 %v2214, 0.5
        %v2279 = vadd.f32 %v2215, 0.5
        %v2280 = vadd.f32 %v2216, 0.5
        %v2281 = vadd.f32 %v2217, 0.5
        %v2282 = vadd.f32 %v2218, 0.5
        %v2283 = vadd.f32 %v2219, 0.5
        %v2284 = vadd.f32 %v2220, 0.5
        %v2285 = vadd.f32 %v2221, 0.5
        %v2286 = vadd.f32 %v2222, 0.5
        %v2287 = vadd.f32 %v2223, 0.5
        %v2288 = vadd.f32 %v2224, 0.5
        %v2289 = vadd.f32 %v2225, 0.5
        %v2290 = vadd.f32 %v2226, 0.5
        %v2291 = vadd.f32 %v2227, 0.5
        %v2292 = vadd.f32 %v2228, 0.5
        %v2293 = vadd.f32 %v2229, 0.5
        %v2294 = vadd.f32 %v2230, 0.5
        %v2295 = vadd.f32 %v2231, 0.5
        %v2296 = vadd.f32 %v2232, 0.5
        %v2297 = vadd.f32 %v2233, 0.5
        %v2298 = vadd.f32 %v2234, 0.5
        %v2299 = vadd.f32 %v2235, 0.5
        %v2300 = vadd.f32 %v2236, 0.5
        %v2301 = vadd.f32 %v2237, 0.5
        %v2302 = vadd.f32 %v2238, 0.5
        %v2303 = vadd.f32 %v2239, 0.5
        %v2304 = vadd.f32 %v2240, 0.5
        %v2305 = vadd.f32 %v2241, 0.5
        %v2306 = vadd.f32 %v2242, 0.5
        %v2307 = vadd.f32 %v2243, 0.5
        %v2308 = vadd.f32 %v2244, 0.5
        %v2309 = vadd.f32 %v2245, 0.5
        %v2310 = vadd.f32 %v2246, 0.5
        %v2311 = vadd.f32 %v2247, 0.5
        %v2312 = vadd.f32 %v2248, 0.5
        %v2313 = vadd.f32 %v2249, 0.5
        %v2314 = vadd.f32 %v2250, 0.5
        %v2315 = vadd.f32 %v2251, 0.5
        %v2316 = vadd.f32 %v2252, 0.5
        %v2317 = vadd.f32 %v2253, 0.5
        %v2318 = vadd.f32 %v2254, 0.5
        %v2319 = vadd.f32 %v2255, 0.5
        %v2320 = vadd.f32 %v2256, 0.5
        %v2321 = vadd.f32 %v2257, 0.5
        %v2322 = vadd.f32 %v2258, 0.5
        %v2323 = vadd.f32 %v2259, 0.5
        %v2324 = vadd.f32 %v2260, 0.5
        %v2325 = vadd.f32 %v2261, 0.5
        %v2326 = vadd.f32 %v2262, 0.5
        %v2327 = vadd.f32 %v2263, 0.5
        %v2328 = vadd.f32 %v2264, 0.5
        %v2329 = vadd.f32 %v2265, 0.5
        %v2330 = vadd.f32 %v2266, 0.5
        %v2331 = vadd.f32 %v2267, 0.5
        %v2332 = vtanh.pop %v1944
        %v2333 = vtanh.pop %v1980
        %v2334 = vtanh.pop %v1981
        %v2335 = vtanh.pop %v1982
        %v2336 = vtanh.pop %v1945
        %v2337 = vtanh.pop %v1983
        %v2338 = vtanh.pop %v1984
        %v2339 = vtanh.pop %v1985
        %v2340 = vtanh.pop %v1986
        %v2341 = vtanh.pop %v1987
        %v2342 = vtanh.pop %v1988
        %v2343 = vtanh.pop %v1947
        %v2344 = vtanh.pop %v1989
        %v2345 = vtanh.pop %v1990
        %v2346 = vtanh.pop %v1991
        %v2347 = vtanh.pop %v1948
        %v2348 = vtanh.pop %v1992
        %v2349 = vtanh.pop %v1993
        %v2350 = vtanh.pop %v1949
        %v2351 = vtanh.pop %v1994
        %v2352 = vtanh.pop %v1995
        %v2353 = vtanh.pop %v1996
        %v2354 = vtanh.pop %v1950
        %v2355 = vtanh.pop %v1997
        %v2356 = vtanh.pop %v1998
        %v2357 = vtanh.pop %v1951
        %v2358 = vtanh.pop %v1999
        %v2359 = vtanh.pop %v2000
        %v2360 = vtanh.pop %v2001
        %v2361 = vtanh.pop %v1952
        %v2362 = vtanh.pop %v2002
        %v2363 = vtanh.pop %v2003
        %v2364 = vtanh.pop %v1953
        %v2365 = vtanh.pop %v2004
        %v2366 = vtanh.pop %v2005
        %v2367 = vtanh.pop %v2006
        %v2368 = vtanh.pop %v1954
        %v2369 = vtanh.pop %v2007
        %v2370 = vtanh.pop %v2008
        %v2371 = vtanh.pop %v2009
        %v2372 = vtanh.pop %v2010
        %v2373 = vtanh.pop %v2011
        %v2374 = vtanh.pop %v2012
        %v2375 = vtanh.pop %v1956
        %v2376 = vtanh.pop %v2013
        %v2377 = vtanh.pop %v2014
        %v2378 = vtanh.pop %v2015
        %v2379 = vtanh.pop %v1957
        %v2380 = vtanh.pop %v2016
        %v2381 = vtanh.pop %v2017
        %v2382 = vtanh.pop %v1958
        %v2383 = vtanh.pop %v2018
        %v2384 = vtanh.pop %v2019
        %v2385 = vtanh.pop %v2020
        %v2386 = vtanh.pop %v1959
        %v2387 = vtanh.pop %v2021
        %v2388 = vtanh.pop %v2022
        %v2389 = vtanh.pop %v1960
        %v2390 = vtanh.pop %v2023
        %v2391 = vtanh.pop %v2024
        %v2392 = vtanh.pop %v2025
        %v2393 = vtanh.pop %v1961
        %v2394 = vtanh.pop %v2026
        %v2395 = vtanh.pop %v2027
        %v2396 = vld [vmem:[%s283] sm:$0xff]
        %v2397 = vld [vmem:[%s283 + $0x8] sm:$0xff]
        %v2398 = vld [vmem:[%s283 + $0x10] sm:$0xff]
        %v2399 = vld [vmem:[%s283 + $0x18] sm:$0xff]
        %2401 = vrot.lane.b32.xlu0 %v2396, 96
        %v2402 = vpop.permute.xlu0 %2401
        %2404 = vrot.lane.b32.xlu0 %v2396, 64
        %v2405 = vpop.permute.xlu0 %2404
        %2407 = vrot.lane.b32.xlu0 %v2396, 32
        %v2408 = vpop.permute.xlu0 %2407
        %2411 = vrot.lane.b32.xlu0 %v2397, 96
        %v2412 = vpop.permute.xlu0 %2411
        %2414 = vrot.lane.b32.xlu0 %v2397, 64
        %v2415 = vpop.permute.xlu0 %2414
        %2417 = vrot.lane.b32.xlu0 %v2397, 32
        %v2418 = vpop.permute.xlu0 %2417
        %2421 = vrot.lane.b32.xlu0 %v2398, 96
        %v2422 = vpop.permute.xlu0 %2421
        %2424 = vrot.lane.b32.xlu0 %v2398, 64
        %v2425 = vpop.permute.xlu0 %2424
        %2427 = vrot.lane.b32.xlu0 %v2398, 32
        %v2428 = vpop.permute.xlu0 %2427
        %2431 = vrot.lane.b32.xlu0 %v2399, 96
        %v2432 = vpop.permute.xlu0 %2431
        %2434 = vrot.lane.b32.xlu0 %v2399, 64
        %v2435 = vpop.permute.xlu0 %2434
        %2437 = vrot.lane.b32.xlu0 %v2399, 32
        %v2438 = vpop.permute.xlu0 %2437
        %v2440 = vrot.slane %v2405, 4
        %vm2441 = vcmask 1047556
        %v2442 = vsel %vm2441, %v2440, %v2396
        %v2443 = vrot.slane %v2396, 4
        %v2444 = vsel %vm2441, %v2405, %v2443
        %v2446 = vunpack.c.l.s4 1983009808
        %v2447 = vunpack.c.0.s8 %v2446
        %v2448 = vperm.slane %v2442, %v2447
        %v2450 = vunpack.c.l.s4 1983009808
        %v2451 = vunpack.c.0.s8 %v2450
        %v2452 = vperm.slane %v2444, %v2451
        %v2453 = vrot.slane %v2408, 4
        %v2454 = vsel %vm2441, %v2453, %v2402
        %v2455 = vrot.slane %v2402, 4
        %v2456 = vsel %vm2441, %v2408, %v2455
        %v2458 = vunpack.c.l.s4 1983009808
        %v2459 = vunpack.c.0.s8 %v2458
        %v2460 = vperm.slane %v2454, %v2459
        %v2462 = vunpack.c.l.s4 1983009808
        %v2463 = vunpack.c.0.s8 %v2462
        %v2464 = vperm.slane %v2456, %v2463
        %v2465 = vrot.slane %v2415, 4
        %v2466 = vsel %vm2441, %v2465, %v2397
        %v2467 = vrot.slane %v2397, 4
        %v2468 = vsel %vm2441, %v2415, %v2467
        %v2470 = vunpack.c.l.s4 1983009808
        %v2471 = vunpack.c.0.s8 %v2470
        %v2472 = vperm.slane %v2466, %v2471
        %v2474 = vunpack.c.l.s4 1983009808
        %v2475 = vunpack.c.0.s8 %v2474
        %v2476 = vperm.slane %v2468, %v2475
        %v2477 = vrot.slane %v2418, 4
        %v2478 = vsel %vm2441, %v2477, %v2412
        %v2479 = vrot.slane %v2412, 4
        %v2480 = vsel %vm2441, %v2418, %v2479
        %v2482 = vunpack.c.l.s4 1983009808
        %v2483 = vunpack.c.0.s8 %v2482
        %v2484 = vperm.slane %v2478, %v2483
        %v2486 = vunpack.c.l.s4 1983009808
        %v2487 = vunpack.c.0.s8 %v2486
        %v2488 = vperm.slane %v2480, %v2487
        %v2489 = vrot.slane %v2460, 4
        %v2490 = vsel %vm2441, %v2489, %v2448
        %v2491 = vrot.slane %v2448, 4
        %v2492 = vsel %vm2441, %v2460, %v2491
        %v2494 = vunpack.c.l.s4 1934713408
        %v2495 = vunpack.c.0.s8 %v2494
        %v2496 = vperm.slane %v2490, %v2495
        %v2498 = vunpack.c.l.s4 1934713408
        %v2499 = vunpack.c.0.s8 %v2498
        %v2500 = vperm.slane %v2492, %v2499
        %v2501 = vrot.slane %v2464, 4
        %v2502 = vsel %vm2441, %v2501, %v2452
        %v2503 = vrot.slane %v2452, 4
        %v2504 = vsel %vm2441, %v2464, %v2503
        %v2506 = vunpack.c.l.s4 1934713408
        %v2507 = vunpack.c.0.s8 %v2506
        %v2508 = vperm.slane %v2502, %v2507
        %v2510 = vunpack.c.l.s4 1934713408
        %v2511 = vunpack.c.0.s8 %v2510
        %v2512 = vperm.slane %v2504, %v2511
        %v2513 = vrot.slane %v2484, 4
        %v2514 = vsel %vm2441, %v2513, %v2472
        %v2515 = vrot.slane %v2472, 4
        %v2516 = vsel %vm2441, %v2484, %v2515
        %v2518 = vunpack.c.l.s4 1934713408
        %v2519 = vunpack.c.0.s8 %v2518
        %v2520 = vperm.slane %v2514, %v2519
        %v2522 = vunpack.c.l.s4 1934713408
        %v2523 = vunpack.c.0.s8 %v2522
        %v2524 = vperm.slane %v2516, %v2523
        %v2525 = vrot.slane %v2488, 4
        %v2526 = vsel %vm2441, %v2525, %v2476
        %v2527 = vrot.slane %v2476, 4
        %v2528 = vsel %vm2441, %v2488, %v2527
        %v2530 = vunpack.c.l.s4 1934713408
        %v2531 = vunpack.c.0.s8 %v2530
        %v2532 = vperm.slane %v2526, %v2531
        %v2534 = vunpack.c.l.s4 1934713408
        %v2535 = vunpack.c.0.s8 %v2534
        %v2536 = vperm.slane %v2528, %v2535
        %v2537 = vrot.slane %v2520, 4
        %v2538 = vsel %vm2441, %v2537, %v2496
        %v2539 = vrot.slane %v2496, 4
        %v2540 = vsel %vm2441, %v2520, %v2539
        %v2541 = vrot.slane %v2524, 4
        %v2542 = vsel %vm2441, %v2541, %v2500
        %v2543 = vrot.slane %v2500, 4
        %v2544 = vsel %vm2441, %v2524, %v2543
        %v2545 = vrot.slane %v2532, 4
        %v2546 = vsel %vm2441, %v2545, %v2508
        %v2547 = vrot.slane %v2508, 4
        %v2548 = vsel %vm2441, %v2532, %v2547
        %v2549 = vrot.slane %v2536, 4
        %v2550 = vsel %vm2441, %v2549, %v2512
        %v2551 = vrot.slane %v2512, 4
        %v2552 = vsel %vm2441, %v2536, %v2551
        %v2553 = vrot.slane %v2425, 4
        %v2554 = vsel %vm2441, %v2553, %v2398
        %v2555 = vrot.slane %v2398, 4
        %v2556 = vsel %vm2441, %v2425, %v2555
        %v2558 = vunpack.c.l.s4 1983009808
        %v2559 = vunpack.c.0.s8 %v2558
        %v2560 = vperm.slane %v2554, %v2559
        %v2562 = vunpack.c.l.s4 1983009808
        %v2563 = vunpack.c.0.s8 %v2562
        %v2564 = vperm.slane %v2556, %v2563
        %v2565 = vrot.slane %v2428, 4
        %v2566 = vsel %vm2441, %v2565, %v2422
        %v2567 = vrot.slane %v2422, 4
        %v2568 = vsel %vm2441, %v2428, %v2567
        %v2570 = vunpack.c.l.s4 1983009808
        %v2571 = vunpack.c.0.s8 %v2570
        %v2572 = vperm.slane %v2566, %v2571
        %v2574 = vunpack.c.l.s4 1983009808
        %v2575 = vunpack.c.0.s8 %v2574
        %v2576 = vperm.slane %v2568, %v2575
        %v2577 = vrot.slane %v2435, 4
        %v2578 = vsel %vm2441, %v2577, %v2399
        %v2579 = vrot.slane %v2399, 4
        %v2580 = vsel %vm2441, %v2435, %v2579
        %v2582 = vunpack.c.l.s4 1983009808
        %v2583 = vunpack.c.0.s8 %v2582
        %v2584 = vperm.slane %v2578, %v2583
        %v2586 = vunpack.c.l.s4 1983009808
        %v2587 = vunpack.c.0.s8 %v2586
        %v2588 = vperm.slane %v2580, %v2587
        %v2589 = vrot.slane %v2438, 4
        %v2590 = vsel %vm2441, %v2589, %v2432
        %v2591 = vrot.slane %v2432, 4
        %v2592 = vsel %vm2441, %v2438, %v2591
        %v2594 = vunpack.c.l.s4 1983009808
        %v2595 = vunpack.c.0.s8 %v2594
        %v2596 = vperm.slane %v2590, %v2595
        %v2598 = vunpack.c.l.s4 1983009808
        %v2599 = vunpack.c.0.s8 %v2598
        %v2600 = vperm.slane %v2592, %v2599
        %v2601 = vrot.slane %v2572, 4
        %v2602 = vsel %vm2441, %v2601, %v2560
        %v2603 = vrot.slane %v2560, 4
        %v2604 = vsel %vm2441, %v2572, %v2603
        %v2606 = vunpack.c.l.s4 1934713408
        %v2607 = vunpack.c.0.s8 %v2606
        %v2608 = vperm.slane %v2602, %v2607
        %v2610 = vunpack.c.l.s4 1934713408
        %v2611 = vunpack.c.0.s8 %v2610
        %v2612 = vperm.slane %v2604, %v2611
        %v2613 = vrot.slane %v2576, 4
        %v2614 = vsel %vm2441, %v2613, %v2564
        %v2615 = vrot.slane %v2564, 4
        %v2616 = vsel %vm2441, %v2576, %v2615
        %v2618 = vunpack.c.l.s4 1934713408
        %v2619 = vunpack.c.0.s8 %v2618
        %v2620 = vperm.slane %v2614, %v2619
        %v2622 = vunpack.c.l.s4 1934713408
        %v2623 = vunpack.c.0.s8 %v2622
        %v2624 = vperm.slane %v2616, %v2623
        %v2625 = vrot.slane %v2596, 4
        %v2626 = vsel %vm2441, %v2625, %v2584
        %v2627 = vrot.slane %v2584, 4
        %v2628 = vsel %vm2441, %v2596, %v2627
        %v2630 = vunpack.c.l.s4 1934713408
        %v2631 = vunpack.c.0.s8 %v2630
        %v2632 = vperm.slane %v2626, %v2631
        %v2634 = vunpack.c.l.s4 1934713408
        %v2635 = vunpack.c.0.s8 %v2634
        %v2636 = vperm.slane %v2628, %v2635
        %v2637 = vrot.slane %v2600, 4
        %v2638 = vsel %vm2441, %v2637, %v2588
        %v2639 = vrot.slane %v2588, 4
        %v2640 = vsel %vm2441, %v2600, %v2639
        %v2642 = vunpack.c.l.s4 1934713408
        %v2643 = vunpack.c.0.s8 %v2642
        %v2644 = vperm.slane %v2638, %v2643
        %v2646 = vunpack.c.l.s4 1934713408
        %v2647 = vunpack.c.0.s8 %v2646
        %v2648 = vperm.slane %v2640, %v2647
        %v2649 = vrot.slane %v2632, 4
        %v2650 = vsel %vm2441, %v2649, %v2608
        %v2651 = vrot.slane %v2608, 4
        %v2652 = vsel %vm2441, %v2632, %v2651
        %v2653 = vrot.slane %v2636, 4
        %v2654 = vsel %vm2441, %v2653, %v2612
        %v2655 = vrot.slane %v2612, 4
        %v2656 = vsel %vm2441, %v2636, %v2655
        %v2657 = vrot.slane %v2644, 4
        %v2658 = vsel %vm2441, %v2657, %v2620
        %v2659 = vrot.slane %v2620, 4
        %v2660 = vsel %vm2441, %v2644, %v2659
        %v2661 = vrot.slane %v2648, 4
        %v2662 = vsel %vm2441, %v2661, %v2624
        %v2663 = vrot.slane %v2624, 4
        %v2664 = vsel %vm2441, %v2648, %v2663
        %v2681 = vrot.slane %v2538, 2
        %v2682 = vrot.slane %v2538, 4
        %v2683 = vrot.slane %v2538, 6
        %v2684 = vrot.slane %v2650, 2
        %v2685 = vrot.slane %v2650, 4
        %v2686 = vrot.slane %v2650, 6
        %v2687 = vrot.slane %v2540, 2
        %v2688 = vrot.slane %v2540, 4
        %v2689 = vrot.slane %v2540, 6
        %v2690 = vrot.slane %v2652, 2
        %v2691 = vrot.slane %v2652, 4
        %v2692 = vrot.slane %v2652, 6
        %v2693 = vrot.slane %v2542, 2
        %v2694 = vrot.slane %v2542, 4
        %v2695 = vrot.slane %v2542, 6
        %v2696 = vrot.slane %v2654, 2
        %v2697 = vrot.slane %v2654, 4
        %v2698 = vrot.slane %v2654, 6
        %v2699 = vrot.slane %v2544, 2
        %v2700 = vrot.slane %v2544, 4
        %v2701 = vrot.slane %v2544, 6
        %v2702 = vrot.slane %v2656, 2
        %v2703 = vrot.slane %v2656, 4
        %v2704 = vrot.slane %v2656, 6
        %v2705 = vrot.slane %v2546, 2
        %v2706 = vrot.slane %v2546, 4
        %v2707 = vrot.slane %v2546, 6
        %v2708 = vrot.slane %v2658, 2
        %v2709 = vrot.slane %v2658, 4
        %v2710 = vrot.slane %v2658, 6
        %v2711 = vrot.slane %v2548, 2
        %v2712 = vrot.slane %v2548, 4
        %v2713 = vrot.slane %v2548, 6
        %v2714 = vrot.slane %v2660, 2
        %v2715 = vrot.slane %v2660, 4
        %v2716 = vrot.slane %v2660, 6
        %v2717 = vrot.slane %v2550, 2
        %v2718 = vrot.slane %v2550, 4
        %v2719 = vrot.slane %v2550, 6
        %v2720 = vrot.slane %v2662, 2
        %v2721 = vrot.slane %v2662, 4
        %v2722 = vrot.slane %v2662, 6
        %v2723 = vrot.slane %v2552, 2
        %v2724 = vrot.slane %v2552, 4
        %v2725 = vrot.slane %v2552, 6
        %v2726 = vrot.slane %v2664, 2
        %v2727 = vrot.slane %v2664, 4
        %v2728 = vrot.slane %v2664, 6
        %2729 = vrot.lane.b32.xlu0 %v2538, 32
        %v2730 = vpop.permute.xlu0 %2729
        %2731 = vrot.lane.b32.xlu0 %v2681, 32
        %v2732 = vpop.permute.xlu0 %2731
        %2733 = vrot.lane.b32.xlu0 %v2682, 32
        %v2734 = vpop.permute.xlu0 %2733
        %2735 = vrot.lane.b32.xlu0 %v2683, 32
        %v2736 = vpop.permute.xlu0 %2735
        %2737 = vrot.lane.b32.xlu0 %v2650, 32
        %v2738 = vpop.permute.xlu0 %2737
        %2739 = vrot.lane.b32.xlu0 %v2684, 32
        %v2740 = vpop.permute.xlu0 %2739
        %2741 = vrot.lane.b32.xlu0 %v2685, 32
        %v2742 = vpop.permute.xlu0 %2741
        %2743 = vrot.lane.b32.xlu0 %v2686, 32
        %v2744 = vpop.permute.xlu0 %2743
        %2745 = vrot.lane.b32.xlu0 %v2540, 32
        %v2746 = vpop.permute.xlu0 %2745
        %2747 = vrot.lane.b32.xlu0 %v2687, 32
        %v2748 = vpop.permute.xlu0 %2747
        %2749 = vrot.lane.b32.xlu0 %v2688, 32
        %v2750 = vpop.permute.xlu0 %2749
        %2751 = vrot.lane.b32.xlu0 %v2689, 32
        %v2752 = vpop.permute.xlu0 %2751
        %2753 = vrot.lane.b32.xlu0 %v2652, 32
        %v2754 = vpop.permute.xlu0 %2753
        %2755 = vrot.lane.b32.xlu0 %v2690, 32
        %v2756 = vpop.permute.xlu0 %2755
        %2757 = vrot.lane.b32.xlu0 %v2691, 32
        %v2758 = vpop.permute.xlu0 %2757
        %2759 = vrot.lane.b32.xlu0 %v2692, 32
        %v2760 = vpop.permute.xlu0 %2759
        %2761 = vrot.lane.b32.xlu0 %v2542, 32
        %v2762 = vpop.permute.xlu0 %2761
        %2763 = vrot.lane.b32.xlu0 %v2693, 32
        %v2764 = vpop.permute.xlu0 %2763
        %2765 = vrot.lane.b32.xlu0 %v2694, 32
        %v2766 = vpop.permute.xlu0 %2765
        %2767 = vrot.lane.b32.xlu0 %v2695, 32
        %v2768 = vpop.permute.xlu0 %2767
        %2769 = vrot.lane.b32.xlu0 %v2654, 32
        %v2770 = vpop.permute.xlu0 %2769
        %2771 = vrot.lane.b32.xlu0 %v2696, 32
        %v2772 = vpop.permute.xlu0 %2771
        %2773 = vrot.lane.b32.xlu0 %v2697, 32
        %v2774 = vpop.permute.xlu0 %2773
        %2775 = vrot.lane.b32.xlu0 %v2698, 32
        %v2776 = vpop.permute.xlu0 %2775
        %2777 = vrot.lane.b32.xlu0 %v2544, 32
        %v2778 = vpop.permute.xlu0 %2777
        %2779 = vrot.lane.b32.xlu0 %v2699, 32
        %v2780 = vpop.permute.xlu0 %2779
        %2781 = vrot.lane.b32.xlu0 %v2700, 32
        %v2782 = vpop.permute.xlu0 %2781
        %2783 = vrot.lane.b32.xlu0 %v2701, 32
        %v2784 = vpop.permute.xlu0 %2783
        %2785 = vrot.lane.b32.xlu0 %v2656, 32
        %v2786 = vpop.permute.xlu0 %2785
        %2787 = vrot.lane.b32.xlu0 %v2702, 32
        %v2788 = vpop.permute.xlu0 %2787
        %2789 = vrot.lane.b32.xlu0 %v2703, 32
        %v2790 = vpop.permute.xlu0 %2789
        %2791 = vrot.lane.b32.xlu0 %v2704, 32
        %v2792 = vpop.permute.xlu0 %2791
        %2793 = vrot.lane.b32.xlu0 %v2546, 32
        %v2794 = vpop.permute.xlu0 %2793
        %2795 = vrot.lane.b32.xlu0 %v2705, 32
        %v2796 = vpop.permute.xlu0 %2795
        %2797 = vrot.lane.b32.xlu0 %v2706, 32
        %v2798 = vpop.permute.xlu0 %2797
        %2799 = vrot.lane.b32.xlu0 %v2707, 32
        %v2800 = vpop.permute.xlu0 %2799
        %2801 = vrot.lane.b32.xlu0 %v2658, 32
        %v2802 = vpop.permute.xlu0 %2801
        %2803 = vrot.lane.b32.xlu0 %v2708, 32
        %v2804 = vpop.permute.xlu0 %2803
        %2805 = vrot.lane.b32.xlu0 %v2709, 32
        %v2806 = vpop.permute.xlu0 %2805
        %2807 = vrot.lane.b32.xlu0 %v2710, 32
        %v2808 = vpop.permute.xlu0 %2807
        %2809 = vrot.lane.b32.xlu0 %v2548, 32
        %v2810 = vpop.permute.xlu0 %2809
        %2811 = vrot.lane.b32.xlu0 %v2711, 32
        %v2812 = vpop.permute.xlu0 %2811
        %2813 = vrot.lane.b32.xlu0 %v2712, 32
        %v2814 = vpop.permute.xlu0 %2813
        %2815 = vrot.lane.b32.xlu0 %v2713, 32
        %v2816 = vpop.permute.xlu0 %2815
        %2817 = vrot.lane.b32.xlu0 %v2660, 32
        %v2818 = vpop.permute.xlu0 %2817
        %2819 = vrot.lane.b32.xlu0 %v2714, 32
        %v2820 = vpop.permute.xlu0 %2819
        %2821 = vrot.lane.b32.xlu0 %v2715, 32
        %v2822 = vpop.permute.xlu0 %2821
        %2823 = vrot.lane.b32.xlu0 %v2716, 32
        %v2824 = vpop.permute.xlu0 %2823
        %2825 = vrot.lane.b32.xlu0 %v2550, 32
        %v2826 = vpop.permute.xlu0 %2825
        %2827 = vrot.lane.b32.xlu0 %v2717, 32
        %v2828 = vpop.permute.xlu0 %2827
        %2829 = vrot.lane.b32.xlu0 %v2718, 32
        %v2830 = vpop.permute.xlu0 %2829
        %2831 = vrot.lane.b32.xlu0 %v2719, 32
        %v2832 = vpop.permute.xlu0 %2831
        %2833 = vrot.lane.b32.xlu0 %v2662, 32
        %v2834 = vpop.permute.xlu0 %2833
        %2835 = vrot.lane.b32.xlu0 %v2720, 32
        %v2836 = vpop.permute.xlu0 %2835
        %2837 = vrot.lane.b32.xlu0 %v2721, 32
        %v2838 = vpop.permute.xlu0 %2837
        %2839 = vrot.lane.b32.xlu0 %v2722, 32
        %v2840 = vpop.permute.xlu0 %2839
        %2841 = vrot.lane.b32.xlu0 %v2552, 32
        %v2842 = vpop.permute.xlu0 %2841
        %2843 = vrot.lane.b32.xlu0 %v2723, 32
        %v2844 = vpop.permute.xlu0 %2843
        %2845 = vrot.lane.b32.xlu0 %v2724, 32
        %v2846 = vpop.permute.xlu0 %2845
        %2847 = vrot.lane.b32.xlu0 %v2725, 32
        %v2848 = vpop.permute.xlu0 %2847
        %2849 = vrot.lane.b32.xlu0 %v2664, 32
        %v2850 = vpop.permute.xlu0 %2849
        %2851 = vrot.lane.b32.xlu0 %v2726, 32
        %v2852 = vpop.permute.xlu0 %2851
        %2853 = vrot.lane.b32.xlu0 %v2727, 32
        %v2854 = vpop.permute.xlu0 %2853
        %2855 = vrot.lane.b32.xlu0 %v2728, 32
        %v2856 = vpop.permute.xlu0 %2855
        %v2921 = vmul.f32 %v2268, %v2730
        %v2922 = vmul.f32 %v2269, %v2732
        %v2923 = vmul.f32 %v2270, %v2734
        %v2924 = vmul.f32 %v2271, %v2736
        %v2925 = vmul.f32 %v2272, %v2738
        %v2926 = vmul.f32 %v2273, %v2740
        %v2927 = vmul.f32 %v2274, %v2742
        %v2928 = vmul.f32 %v2275, %v2744
        %v2929 = vmul.f32 %v2276, %v2746
        %v2930 = vmul.f32 %v2277, %v2748
        %v2931 = vmul.f32 %v2278, %v2750
        %v2932 = vmul.f32 %v2279, %v2752
        %v2933 = vmul.f32 %v2280, %v2754
        %v2934 = vmul.f32 %v2281, %v2756
        %v2935 = vmul.f32 %v2282, %v2758
        %v2936 = vmul.f32 %v2283, %v2760
        %v2937 = vmul.f32 %v2284, %v2762
        %v2938 = vmul.f32 %v2285, %v2764
        %v2939 = vmul.f32 %v2286, %v2766
        %v2940 = vmul.f32 %v2287, %v2768
        %v2941 = vmul.f32 %v2288, %v2770
        %v2942 = vmul.f32 %v2289, %v2772
        %v2943 = vmul.f32 %v2290, %v2774
        %v2944 = vmul.f32 %v2291, %v2776
        %v2945 = vmul.f32 %v2292, %v2778
        %v2946 = vmul.f32 %v2293, %v2780
        %v2947 = vmul.f32 %v2294, %v2782
        %v2948 = vmul.f32 %v2295, %v2784
        %v2949 = vmul.f32 %v2296, %v2786
        %v2950 = vmul.f32 %v2297, %v2788
        %v2951 = vmul.f32 %v2298, %v2790
        %v2952 = vmul.f32 %v2299, %v2792
        %v2953 = vmul.f32 %v2300, %v2794
        %v2954 = vmul.f32 %v2301, %v2796
        %v2955 = vmul.f32 %v2302, %v2798
        %v2956 = vmul.f32 %v2303, %v2800
        %v2957 = vmul.f32 %v2304, %v2802
        %v2958 = vmul.f32 %v2305, %v2804
        %v2959 = vmul.f32 %v2306, %v2806
        %v2960 = vmul.f32 %v2307, %v2808
        %v2961 = vmul.f32 %v2308, %v2810
        %v2962 = vmul.f32 %v2309, %v2812
        %v2963 = vmul.f32 %v2310, %v2814
        %v2964 = vmul.f32 %v2311, %v2816
        %v2965 = vmul.f32 %v2312, %v2818
        %v2966 = vmul.f32 %v2313, %v2820
        %v2967 = vmul.f32 %v2314, %v2822
        %v2968 = vmul.f32 %v2315, %v2824
        %v2969 = vmul.f32 %v2316, %v2826
        %v2970 = vmul.f32 %v2317, %v2828
        %v2971 = vmul.f32 %v2318, %v2830
        %v2972 = vmul.f32 %v2319, %v2832
        %v2973 = vmul.f32 %v2320, %v2834
        %v2974 = vmul.f32 %v2321, %v2836
        %v2975 = vmul.f32 %v2322, %v2838
        %v2976 = vmul.f32 %v2323, %v2840
        %v2977 = vmul.f32 %v2324, %v2842
        %v2978 = vmul.f32 %v2325, %v2844
        %v2979 = vmul.f32 %v2326, %v2846
        %v2980 = vmul.f32 %v2327, %v2848
        %v2981 = vmul.f32 %v2328, %v2850
        %v2982 = vmul.f32 %v2329, %v2852
        %v2983 = vmul.f32 %v2330, %v2854
        %v2984 = vmul.f32 %v2331, %v2856
        %3049 = vrot.lane.b32.xlu0 %v2332, 32
        %v3050 = vpop.permute.xlu0 %3049
        %3051 = vrot.lane.b32.xlu0 %v2333, 32
        %v3052 = vpop.permute.xlu0 %3051
        %3053 = vrot.lane.b32.xlu0 %v2334, 32
        %v3054 = vpop.permute.xlu0 %3053
        %3055 = vrot.lane.b32.xlu0 %v2335, 32
        %v3056 = vpop.permute.xlu0 %3055
        %3057 = vrot.lane.b32.xlu0 %v2336, 32
        %v3058 = vpop.permute.xlu0 %3057
        %3059 = vrot.lane.b32.xlu0 %v2337, 32
        %v3060 = vpop.permute.xlu0 %3059
        %3061 = vrot.lane.b32.xlu0 %v2338, 32
        %v3062 = vpop.permute.xlu0 %3061
        %3063 = vrot.lane.b32.xlu0 %v2339, 32
        %v3064 = vpop.permute.xlu0 %3063
        %3065 = vrot.lane.b32.xlu0 %v2340, 32
        %v3066 = vpop.permute.xlu0 %3065
        %3067 = vrot.lane.b32.xlu0 %v2341, 32
        %v3068 = vpop.permute.xlu0 %3067
        %3069 = vrot.lane.b32.xlu0 %v2342, 32
        %v3070 = vpop.permute.xlu0 %3069
        %3071 = vrot.lane.b32.xlu0 %v2343, 32
        %v3072 = vpop.permute.xlu0 %3071
        %3073 = vrot.lane.b32.xlu0 %v2344, 32
        %v3074 = vpop.permute.xlu0 %3073
        %3075 = vrot.lane.b32.xlu0 %v2345, 32
        %v3076 = vpop.permute.xlu0 %3075
        %3077 = vrot.lane.b32.xlu0 %v2346, 32
        %v3078 = vpop.permute.xlu0 %3077
        %3079 = vrot.lane.b32.xlu0 %v2347, 32
        %v3080 = vpop.permute.xlu0 %3079
        %3081 = vrot.lane.b32.xlu0 %v2348, 32
        %v3082 = vpop.permute.xlu0 %3081
        %3083 = vrot.lane.b32.xlu0 %v2349, 32
        %v3084 = vpop.permute.xlu0 %3083
        %3085 = vrot.lane.b32.xlu0 %v2350, 32
        %v3086 = vpop.permute.xlu0 %3085
        %3087 = vrot.lane.b32.xlu0 %v2351, 32
        %v3088 = vpop.permute.xlu0 %3087
        %3089 = vrot.lane.b32.xlu0 %v2352, 32
        %v3090 = vpop.permute.xlu0 %3089
        %3091 = vrot.lane.b32.xlu0 %v2353, 32
        %v3092 = vpop.permute.xlu0 %3091
        %3093 = vrot.lane.b32.xlu0 %v2354, 32
        %v3094 = vpop.permute.xlu0 %3093
        %3095 = vrot.lane.b32.xlu0 %v2355, 32
        %v3096 = vpop.permute.xlu0 %3095
        %3097 = vrot.lane.b32.xlu0 %v2356, 32
        %v3098 = vpop.permute.xlu0 %3097
        %3099 = vrot.lane.b32.xlu0 %v2357, 32
        %v3100 = vpop.permute.xlu0 %3099
        %3101 = vrot.lane.b32.xlu0 %v2358, 32
        %v3102 = vpop.permute.xlu0 %3101
        %3103 = vrot.lane.b32.xlu0 %v2359, 32
        %v3104 = vpop.permute.xlu0 %3103
        %3105 = vrot.lane.b32.xlu0 %v2360, 32
        %v3106 = vpop.permute.xlu0 %3105
        %3107 = vrot.lane.b32.xlu0 %v2361, 32
        %v3108 = vpop.permute.xlu0 %3107
        %3109 = vrot.lane.b32.xlu0 %v2362, 32
        %v3110 = vpop.permute.xlu0 %3109
        %3111 = vrot.lane.b32.xlu0 %v2363, 32
        %v3112 = vpop.permute.xlu0 %3111
        %3113 = vrot.lane.b32.xlu0 %v2364, 32
        %v3114 = vpop.permute.xlu0 %3113
        %3115 = vrot.lane.b32.xlu0 %v2365, 32
        %v3116 = vpop.permute.xlu0 %3115
        %3117 = vrot.lane.b32.xlu0 %v2366, 32
        %v3118 = vpop.permute.xlu0 %3117
        %3119 = vrot.lane.b32.xlu0 %v2367, 32
        %v3120 = vpop.permute.xlu0 %3119
        %3121 = vrot.lane.b32.xlu0 %v2368, 32
        %v3122 = vpop.permute.xlu0 %3121
        %3123 = vrot.lane.b32.xlu0 %v2369, 32
        %v3124 = vpop.permute.xlu0 %3123
        %3125 = vrot.lane.b32.xlu0 %v2370, 32
        %v3126 = vpop.permute.xlu0 %3125
        %3127 = vrot.lane.b32.xlu0 %v2371, 32
        %v3128 = vpop.permute.xlu0 %3127
        %3129 = vrot.lane.b32.xlu0 %v2372, 32
        %v3130 = vpop.permute.xlu0 %3129
        %3131 = vrot.lane.b32.xlu0 %v2373, 32
        %v3132 = vpop.permute.xlu0 %3131
        %3133 = vrot.lane.b32.xlu0 %v2374, 32
        %v3134 = vpop.permute.xlu0 %3133
        %3135 = vrot.lane.b32.xlu0 %v2375, 32
        %v3136 = vpop.permute.xlu0 %3135
        %3137 = vrot.lane.b32.xlu0 %v2376, 32
        %v3138 = vpop.permute.xlu0 %3137
        %3139 = vrot.lane.b32.xlu0 %v2377, 32
        %v3140 = vpop.permute.xlu0 %3139
        %3141 = vrot.lane.b32.xlu0 %v2378, 32
        %v3142 = vpop.permute.xlu0 %3141
        %3143 = vrot.lane.b32.xlu0 %v2379, 32
        %v3144 = vpop.permute.xlu0 %3143
        %3145 = vrot.lane.b32.xlu0 %v2380, 32
        %v3146 = vpop.permute.xlu0 %3145
        %3147 = vrot.lane.b32.xlu0 %v2381, 32
        %v3148 = vpop.permute.xlu0 %3147
        %3149 = vrot.lane.b32.xlu0 %v2382, 32
        %v3150 = vpop.permute.xlu0 %3149
        %3151 = vrot.lane.b32.xlu0 %v2383, 32
        %v3152 = vpop.permute.xlu0 %3151
        %3153 = vrot.lane.b32.xlu0 %v2384, 32
        %v3154 = vpop.permute.xlu0 %3153
        %3155 = vrot.lane.b32.xlu0 %v2385, 32
        %v3156 = vpop.permute.xlu0 %3155
        %3157 = vrot.lane.b32.xlu0 %v2386, 32
        %v3158 = vpop.permute.xlu0 %3157
        %3159 = vrot.lane.b32.xlu0 %v2387, 32
        %v3160 = vpop.permute.xlu0 %3159
        %3161 = vrot.lane.b32.xlu0 %v2388, 32
        %v3162 = vpop.permute.xlu0 %3161
        %3163 = vrot.lane.b32.xlu0 %v2389, 32
        %v3164 = vpop.permute.xlu0 %3163
        %3165 = vrot.lane.b32.xlu0 %v2390, 32
        %v3166 = vpop.permute.xlu0 %3165
        %3167 = vrot.lane.b32.xlu0 %v2391, 32
        %v3168 = vpop.permute.xlu0 %3167
        %3169 = vrot.lane.b32.xlu0 %v2392, 32
        %v3170 = vpop.permute.xlu0 %3169
        %3171 = vrot.lane.b32.xlu0 %v2393, 32
        %v3172 = vpop.permute.xlu0 %3171
        %3173 = vrot.lane.b32.xlu0 %v2394, 32
        %v3174 = vpop.permute.xlu0 %3173
        %3175 = vrot.lane.b32.xlu0 %v2395, 32
        %v3176 = vpop.permute.xlu0 %3175
        %v3241 = vmul.f32 %v2268, %v3050
        %v3242 = vmul.f32 %v2269, %v3052
        %v3243 = vmul.f32 %v2270, %v3054
        %v3244 = vmul.f32 %v2271, %v3056
        %v3245 = vmul.f32 %v2272, %v3058
        %v3246 = vmul.f32 %v2273, %v3060
        %v3247 = vmul.f32 %v2274, %v3062
        %v3248 = vmul.f32 %v2275, %v3064
        %v3249 = vmul.f32 %v2276, %v3066
        %v3250 = vmul.f32 %v2277, %v3068
        %v3251 = vmul.f32 %v2278, %v3070
        %v3252 = vmul.f32 %v2279, %v3072
        %v3253 = vmul.f32 %v2280, %v3074
        %v3254 = vmul.f32 %v2281, %v3076
        %v3255 = vmul.f32 %v2282, %v3078
        %v3256 = vmul.f32 %v2283, %v3080
        %v3257 = vmul.f32 %v2284, %v3082
        %v3258 = vmul.f32 %v2285, %v3084
        %v3259 = vmul.f32 %v2286, %v3086
        %v3260 = vmul.f32 %v2287, %v3088
        %v3261 = vmul.f32 %v2288, %v3090
        %v3262 = vmul.f32 %v2289, %v3092
        %v3263 = vmul.f32 %v2290, %v3094
        %v3264 = vmul.f32 %v2291, %v3096
        %v3265 = vmul.f32 %v2292, %v3098
        %v3266 = vmul.f32 %v2293, %v3100
        %v3267 = vmul.f32 %v2294, %v3102
        %v3268 = vmul.f32 %v2295, %v3104
        %v3269 = vmul.f32 %v2296, %v3106
        %v3270 = vmul.f32 %v2297, %v3108
        %v3271 = vmul.f32 %v2298, %v3110
        %v3272 = vmul.f32 %v2299, %v3112
        %v3273 = vmul.f32 %v2300, %v3114
        %v3274 = vmul.f32 %v2301, %v3116
        %v3275 = vmul.f32 %v2302, %v3118
        %v3276 = vmul.f32 %v2303, %v3120
        %v3277 = vmul.f32 %v2304, %v3122
        %v3278 = vmul.f32 %v2305, %v3124
        %v3279 = vmul.f32 %v2306, %v3126
        %v3280 = vmul.f32 %v2307, %v3128
        %v3281 = vmul.f32 %v2308, %v3130
        %v3282 = vmul.f32 %v2309, %v3132
        %v3283 = vmul.f32 %v2310, %v3134
        %v3284 = vmul.f32 %v2311, %v3136
        %v3285 = vmul.f32 %v2312, %v3138
        %v3286 = vmul.f32 %v2313, %v3140
        %v3287 = vmul.f32 %v2314, %v3142
        %v3288 = vmul.f32 %v2315, %v3144
        %v3289 = vmul.f32 %v2316, %v3146
        %v3290 = vmul.f32 %v2317, %v3148
        %v3291 = vmul.f32 %v2318, %v3150
        %v3292 = vmul.f32 %v2319, %v3152
        %v3293 = vmul.f32 %v2320, %v3154
        %v3294 = vmul.f32 %v2321, %v3156
        %v3295 = vmul.f32 %v2322, %v3158
        %v3296 = vmul.f32 %v2323, %v3160
        %v3297 = vmul.f32 %v2324, %v3162
        %v3298 = vmul.f32 %v2325, %v3164
        %v3299 = vmul.f32 %v2326, %v3166
        %v3300 = vmul.f32 %v2327, %v3168
        %v3301 = vmul.f32 %v2328, %v3170
        %v3302 = vmul.f32 %v2329, %v3172
        %v3303 = vmul.f32 %v2330, %v3174
        %v3304 = vmul.f32 %v2331, %v3176
        %3369 = vrot.lane.b32.xlu0 %v3241, 32
        %v3370 = vpop.permute.xlu0 %3369
        %3371 = vrot.lane.b32.xlu0 %v3242, 32
        %v3372 = vpop.permute.xlu0 %3371
        %3373 = vrot.lane.b32.xlu0 %v3243, 32
        %v3374 = vpop.permute.xlu0 %3373
        %3375 = vrot.lane.b32.xlu0 %v3244, 32
        %v3376 = vpop.permute.xlu0 %3375
        %3377 = vrot.lane.b32.xlu0 %v3245, 32
        %v3378 = vpop.permute.xlu0 %3377
        %3379 = vrot.lane.b32.xlu0 %v3246, 32
        %v3380 = vpop.permute.xlu0 %3379
        %3381 = vrot.lane.b32.xlu0 %v3247, 32
        %v3382 = vpop.permute.xlu0 %3381
        %3383 = vrot.lane.b32.xlu0 %v3248, 32
        %v3384 = vpop.permute.xlu0 %3383
        %3385 = vrot.lane.b32.xlu0 %v3249, 32
        %v3386 = vpop.permute.xlu0 %3385
        %3387 = vrot.lane.b32.xlu0 %v3250, 32
        %v3388 = vpop.permute.xlu0 %3387
        %3389 = vrot.lane.b32.xlu0 %v3251, 32
        %v3390 = vpop.permute.xlu0 %3389
        %3391 = vrot.lane.b32.xlu0 %v3252, 32
        %v3392 = vpop.permute.xlu0 %3391
        %3393 = vrot.lane.b32.xlu0 %v3253, 32
        %v3394 = vpop.permute.xlu0 %3393
        %3395 = vrot.lane.b32.xlu0 %v3254, 32
        %v3396 = vpop.permute.xlu0 %3395
        %3397 = vrot.lane.b32.xlu0 %v3255, 32
        %v3398 = vpop.permute.xlu0 %3397
        %3399 = vrot.lane.b32.xlu0 %v3256, 32
        %v3400 = vpop.permute.xlu0 %3399
        %3401 = vrot.lane.b32.xlu0 %v3257, 32
        %v3402 = vpop.permute.xlu0 %3401
        %3403 = vrot.lane.b32.xlu0 %v3258, 32
        %v3404 = vpop.permute.xlu0 %3403
        %3405 = vrot.lane.b32.xlu0 %v3259, 32
        %v3406 = vpop.permute.xlu0 %3405
        %3407 = vrot.lane.b32.xlu0 %v3260, 32
        %v3408 = vpop.permute.xlu0 %3407
        %3409 = vrot.lane.b32.xlu0 %v3261, 32
        %v3410 = vpop.permute.xlu0 %3409
        %3411 = vrot.lane.b32.xlu0 %v3262, 32
        %v3412 = vpop.permute.xlu0 %3411
        %3413 = vrot.lane.b32.xlu0 %v3263, 32
        %v3414 = vpop.permute.xlu0 %3413
        %3415 = vrot.lane.b32.xlu0 %v3264, 32
        %v3416 = vpop.permute.xlu0 %3415
        %3417 = vrot.lane.b32.xlu0 %v3265, 32
        %v3418 = vpop.permute.xlu0 %3417
        %3419 = vrot.lane.b32.xlu0 %v3266, 32
        %v3420 = vpop.permute.xlu0 %3419
        %3421 = vrot.lane.b32.xlu0 %v3267, 32
        %v3422 = vpop.permute.xlu0 %3421
        %3423 = vrot.lane.b32.xlu0 %v3268, 32
        %v3424 = vpop.permute.xlu0 %3423
        %3425 = vrot.lane.b32.xlu0 %v3269, 32
        %v3426 = vpop.permute.xlu0 %3425
        %3427 = vrot.lane.b32.xlu0 %v3270, 32
        %v3428 = vpop.permute.xlu0 %3427
        %3429 = vrot.lane.b32.xlu0 %v3271, 32
        %v3430 = vpop.permute.xlu0 %3429
        %3431 = vrot.lane.b32.xlu0 %v3272, 32
        %v3432 = vpop.permute.xlu0 %3431
        %3433 = vrot.lane.b32.xlu0 %v3273, 32
        %v3434 = vpop.permute.xlu0 %3433
        %3435 = vrot.lane.b32.xlu0 %v3274, 32
        %v3436 = vpop.permute.xlu0 %3435
        %3437 = vrot.lane.b32.xlu0 %v3275, 32
        %v3438 = vpop.permute.xlu0 %3437
        %3439 = vrot.lane.b32.xlu0 %v3276, 32
        %v3440 = vpop.permute.xlu0 %3439
        %3441 = vrot.lane.b32.xlu0 %v3277, 32
        %v3442 = vpop.permute.xlu0 %3441
        %3443 = vrot.lane.b32.xlu0 %v3278, 32
        %v3444 = vpop.permute.xlu0 %3443
        %3445 = vrot.lane.b32.xlu0 %v3279, 32
        %v3446 = vpop.permute.xlu0 %3445
        %3447 = vrot.lane.b32.xlu0 %v3280, 32
        %v3448 = vpop.permute.xlu0 %3447
        %3449 = vrot.lane.b32.xlu0 %v3281, 32
        %v3450 = vpop.permute.xlu0 %3449
        %3451 = vrot.lane.b32.xlu0 %v3282, 32
        %v3452 = vpop.permute.xlu0 %3451
        %3453 = vrot.lane.b32.xlu0 %v3283, 32
        %v3454 = vpop.permute.xlu0 %3453
        %3455 = vrot.lane.b32.xlu0 %v3284, 32
        %v3456 = vpop.permute.xlu0 %3455
        %3457 = vrot.lane.b32.xlu0 %v3285, 32
        %v3458 = vpop.permute.xlu0 %3457
        %3459 = vrot.lane.b32.xlu0 %v3286, 32
        %v3460 = vpop.permute.xlu0 %3459
        %3461 = vrot.lane.b32.xlu0 %v3287, 32
        %v3462 = vpop.permute.xlu0 %3461
        %3463 = vrot.lane.b32.xlu0 %v3288, 32
        %v3464 = vpop.permute.xlu0 %3463
        %3465 = vrot.lane.b32.xlu0 %v3289, 32
        %v3466 = vpop.permute.xlu0 %3465
        %3467 = vrot.lane.b32.xlu0 %v3290, 32
        %v3468 = vpop.permute.xlu0 %3467
        %3469 = vrot.lane.b32.xlu0 %v3291, 32
        %v3470 = vpop.permute.xlu0 %3469
        %3471 = vrot.lane.b32.xlu0 %v3292, 32
        %v3472 = vpop.permute.xlu0 %3471
        %3473 = vrot.lane.b32.xlu0 %v3293, 32
        %v3474 = vpop.permute.xlu0 %3473
        %3475 = vrot.lane.b32.xlu0 %v3294, 32
        %v3476 = vpop.permute.xlu0 %3475
        %3477 = vrot.lane.b32.xlu0 %v3295, 32
        %v3478 = vpop.permute.xlu0 %3477
        %3479 = vrot.lane.b32.xlu0 %v3296, 32
        %v3480 = vpop.permute.xlu0 %3479
        %3481 = vrot.lane.b32.xlu0 %v3297, 32
        %v3482 = vpop.permute.xlu0 %3481
        %3483 = vrot.lane.b32.xlu0 %v3298, 32
        %v3484 = vpop.permute.xlu0 %3483
        %3485 = vrot.lane.b32.xlu0 %v3299, 32
        %v3486 = vpop.permute.xlu0 %3485
        %3487 = vrot.lane.b32.xlu0 %v3300, 32
        %v3488 = vpop.permute.xlu0 %3487
        %3489 = vrot.lane.b32.xlu0 %v3301, 32
        %v3490 = vpop.permute.xlu0 %3489
        %3491 = vrot.lane.b32.xlu0 %v3302, 32
        %v3492 = vpop.permute.xlu0 %3491
        %3493 = vrot.lane.b32.xlu0 %v3303, 32
        %v3494 = vpop.permute.xlu0 %3493
        %3495 = vrot.lane.b32.xlu0 %v3304, 32
        %v3496 = vpop.permute.xlu0 %3495
        %v3561 = vadd.f32 %v2921, %v3370
        %v3562 = vadd.f32 %v2922, %v3372
        %v3563 = vadd.f32 %v2923, %v3374
        %v3564 = vadd.f32 %v2924, %v3376
        %v3565 = vadd.f32 %v2925, %v3378
        %v3566 = vadd.f32 %v2926, %v3380
        %v3567 = vadd.f32 %v2927, %v3382
        %v3568 = vadd.f32 %v2928, %v3384
        %v3569 = vadd.f32 %v2929, %v3386
        %v3570 = vadd.f32 %v2930, %v3388
        %v3571 = vadd.f32 %v2931, %v3390
        %v3572 = vadd.f32 %v2932, %v3392
        %v3573 = vadd.f32 %v2933, %v3394
        %v3574 = vadd.f32 %v2934, %v3396
        %v3575 = vadd.f32 %v2935, %v3398
        %v3576 = vadd.f32 %v2936, %v3400
        %v3577 = vadd.f32 %v2937, %v3402
        %v3578 = vadd.f32 %v2938, %v3404
        %v3579 = vadd.f32 %v2939, %v3406
        %v3580 = vadd.f32 %v2940, %v3408
        %v3581 = vadd.f32 %v2941, %v3410
        %v3582 = vadd.f32 %v2942, %v3412
        %v3583 = vadd.f32 %v2943, %v3414
        %v3584 = vadd.f32 %v2944, %v3416
        %v3585 = vadd.f32 %v2945, %v3418
        %v3586 = vadd.f32 %v2946, %v3420
        %v3587 = vadd.f32 %v2947, %v3422
        %v3588 = vadd.f32 %v2948, %v3424
        %v3589 = vadd.f32 %v2949, %v3426
        %v3590 = vadd.f32 %v2950, %v3428
        %v3591 = vadd.f32 %v2951, %v3430
        %v3592 = vadd.f32 %v2952, %v3432
        %v3593 = vadd.f32 %v2953, %v3434
        %v3594 = vadd.f32 %v2954, %v3436
        %v3595 = vadd.f32 %v2955, %v3438
        %v3596 = vadd.f32 %v2956, %v3440
        %v3597 = vadd.f32 %v2957, %v3442
        %v3598 = vadd.f32 %v2958, %v3444
        %v3599 = vadd.f32 %v2959, %v3446
        %v3600 = vadd.f32 %v2960, %v3448
        %v3601 = vadd.f32 %v2961, %v3450
        %v3602 = vadd.f32 %v2962, %v3452
        %v3603 = vadd.f32 %v2963, %v3454
        %v3604 = vadd.f32 %v2964, %v3456
        %v3605 = vadd.f32 %v2965, %v3458
        %v3606 = vadd.f32 %v2966, %v3460
        %v3607 = vadd.f32 %v2967, %v3462
        %v3608 = vadd.f32 %v2968, %v3464
        %v3609 = vadd.f32 %v2969, %v3466
        %v3610 = vadd.f32 %v2970, %v3468
        %v3611 = vadd.f32 %v2971, %v3470
        %v3612 = vadd.f32 %v2972, %v3472
        %v3613 = vadd.f32 %v2973, %v3474
        %v3614 = vadd.f32 %v2974, %v3476
        %v3615 = vadd.f32 %v2975, %v3478
        %v3616 = vadd.f32 %v2976, %v3480
        %v3617 = vadd.f32 %v2977, %v3482
        %v3618 = vadd.f32 %v2978, %v3484
        %v3619 = vadd.f32 %v2979, %v3486
        %v3620 = vadd.f32 %v2980, %v3488
        %v3621 = vadd.f32 %v2981, %v3490
        %v3622 = vadd.f32 %v2982, %v3492
        %v3623 = vadd.f32 %v2983, %v3494
        %v3624 = vadd.f32 %v2984, %v3496
        %v3625 = vtanh.pop %v3561
        %v3626 = vtanh.pop %v3562
        %v3627 = vtanh.pop %v3563
        %v3628 = vtanh.pop %v3564
        %v3629 = vtanh.pop %v3565
        %v3630 = vtanh.pop %v3566
        %v3631 = vtanh.pop %v3567
        %v3632 = vtanh.pop %v3568
        %v3633 = vtanh.pop %v3569
        %v3634 = vtanh.pop %v3570
        %v3635 = vtanh.pop %v3571
        %v3636 = vtanh.pop %v3572
        %v3637 = vtanh.pop %v3573
        %v3638 = vtanh.pop %v3574
        %v3639 = vtanh.pop %v3575
        %v3640 = vtanh.pop %v3576
        %v3641 = vtanh.pop %v3577
        %v3642 = vtanh.pop %v3578
        %v3643 = vtanh.pop %v3579
        %v3644 = vtanh.pop %v3580
        %v3645 = vtanh.pop %v3581
        %v3646 = vtanh.pop %v3582
        %v3647 = vtanh.pop %v3583
        %v3648 = vtanh.pop %v3584
        %v3649 = vtanh.pop %v3585
        %v3650 = vtanh.pop %v3586
        %v3651 = vtanh.pop %v3587
        %v3652 = vtanh.pop %v3588
        %v3653 = vtanh.pop %v3589
        %v3654 = vtanh.pop %v3590
        %v3655 = vtanh.pop %v3591
        %v3656 = vtanh.pop %v3592
        %v3657 = vtanh.pop %v3593
        %v3658 = vtanh.pop %v3594
        %v3659 = vtanh.pop %v3595
        %v3660 = vtanh.pop %v3596
        %v3661 = vtanh.pop %v3597
        %v3662 = vtanh.pop %v3598
        %v3663 = vtanh.pop %v3599
        %v3664 = vtanh.pop %v3600
        %v3665 = vtanh.pop %v3601
        %v3666 = vtanh.pop %v3602
        %v3667 = vtanh.pop %v3603
        %v3668 = vtanh.pop %v3604
        %v3669 = vtanh.pop %v3605
        %v3670 = vtanh.pop %v3606
        %v3671 = vtanh.pop %v3607
        %v3672 = vtanh.pop %v3608
        %v3673 = vtanh.pop %v3609
        %v3674 = vtanh.pop %v3610
        %v3675 = vtanh.pop %v3611
        %v3676 = vtanh.pop %v3612
        %v3677 = vtanh.pop %v3613
        %v3678 = vtanh.pop %v3614
        %v3679 = vtanh.pop %v3615
        %v3680 = vtanh.pop %v3616
        %v3681 = vtanh.pop %v3617
        %v3682 = vtanh.pop %v3618
        %v3683 = vtanh.pop %v3619
        %v3684 = vtanh.pop %v3620
        %v3685 = vtanh.pop %v3621
        %v3686 = vtanh.pop %v3622
        %v3687 = vtanh.pop %v3623
        %v3688 = vtanh.pop %v3624
        %3753 = vrot.lane.b32.xlu0 %v3625, 32
        %v3754 = vpop.permute.xlu0 %3753
        %3755 = vrot.lane.b32.xlu0 %v3626, 32
        %v3756 = vpop.permute.xlu0 %3755
        %3757 = vrot.lane.b32.xlu0 %v3627, 32
        %v3758 = vpop.permute.xlu0 %3757
        %3759 = vrot.lane.b32.xlu0 %v3628, 32
        %v3760 = vpop.permute.xlu0 %3759
        %3761 = vrot.lane.b32.xlu0 %v3629, 32
        %v3762 = vpop.permute.xlu0 %3761
        %3763 = vrot.lane.b32.xlu0 %v3630, 32
        %v3764 = vpop.permute.xlu0 %3763
        %3765 = vrot.lane.b32.xlu0 %v3631, 32
        %v3766 = vpop.permute.xlu0 %3765
        %3767 = vrot.lane.b32.xlu0 %v3632, 32
        %v3768 = vpop.permute.xlu0 %3767
        %3769 = vrot.lane.b32.xlu0 %v3633, 32
        %v3770 = vpop.permute.xlu0 %3769
        %3771 = vrot.lane.b32.xlu0 %v3634, 32
        %v3772 = vpop.permute.xlu0 %3771
        %3773 = vrot.lane.b32.xlu0 %v3635, 32
        %v3774 = vpop.permute.xlu0 %3773
        %3775 = vrot.lane.b32.xlu0 %v3636, 32
        %v3776 = vpop.permute.xlu0 %3775
        %3777 = vrot.lane.b32.xlu0 %v3637, 32
        %v3778 = vpop.permute.xlu0 %3777
        %3779 = vrot.lane.b32.xlu0 %v3638, 32
        %v3780 = vpop.permute.xlu0 %3779
        %3781 = vrot.lane.b32.xlu0 %v3639, 32
        %v3782 = vpop.permute.xlu0 %3781
        %3783 = vrot.lane.b32.xlu0 %v3640, 32
        %v3784 = vpop.permute.xlu0 %3783
        %3785 = vrot.lane.b32.xlu0 %v3641, 32
        %v3786 = vpop.permute.xlu0 %3785
        %3787 = vrot.lane.b32.xlu0 %v3642, 32
        %v3788 = vpop.permute.xlu0 %3787
        %3789 = vrot.lane.b32.xlu0 %v3643, 32
        %v3790 = vpop.permute.xlu0 %3789
        %3791 = vrot.lane.b32.xlu0 %v3644, 32
        %v3792 = vpop.permute.xlu0 %3791
        %3793 = vrot.lane.b32.xlu0 %v3645, 32
        %v3794 = vpop.permute.xlu0 %3793
        %3795 = vrot.lane.b32.xlu0 %v3646, 32
        %v3796 = vpop.permute.xlu0 %3795
        %3797 = vrot.lane.b32.xlu0 %v3647, 32
        %v3798 = vpop.permute.xlu0 %3797
        %3799 = vrot.lane.b32.xlu0 %v3648, 32
        %v3800 = vpop.permute.xlu0 %3799
        %3801 = vrot.lane.b32.xlu0 %v3649, 32
        %v3802 = vpop.permute.xlu0 %3801
        %3803 = vrot.lane.b32.xlu0 %v3650, 32
        %v3804 = vpop.permute.xlu0 %3803
        %3805 = vrot.lane.b32.xlu0 %v3651, 32
        %v3806 = vpop.permute.xlu0 %3805
        %3807 = vrot.lane.b32.xlu0 %v3652, 32
        %v3808 = vpop.permute.xlu0 %3807
        %3809 = vrot.lane.b32.xlu0 %v3653, 32
        %v3810 = vpop.permute.xlu0 %3809
        %3811 = vrot.lane.b32.xlu0 %v3654, 32
        %v3812 = vpop.permute.xlu0 %3811
        %3813 = vrot.lane.b32.xlu0 %v3655, 32
        %v3814 = vpop.permute.xlu0 %3813
        %3815 = vrot.lane.b32.xlu0 %v3656, 32
        %v3816 = vpop.permute.xlu0 %3815
        %3817 = vrot.lane.b32.xlu0 %v3657, 32
        %v3818 = vpop.permute.xlu0 %3817
        %3819 = vrot.lane.b32.xlu0 %v3658, 32
        %v3820 = vpop.permute.xlu0 %3819
        %3821 = vrot.lane.b32.xlu0 %v3659, 32
        %v3822 = vpop.permute.xlu0 %3821
        %3823 = vrot.lane.b32.xlu0 %v3660, 32
        %v3824 = vpop.permute.xlu0 %3823
        %3825 = vrot.lane.b32.xlu0 %v3661, 32
        %v3826 = vpop.permute.xlu0 %3825
        %3827 = vrot.lane.b32.xlu0 %v3662, 32
        %v3828 = vpop.permute.xlu0 %3827
        %3829 = vrot.lane.b32.xlu0 %v3663, 32
        %v3830 = vpop.permute.xlu0 %3829
        %3831 = vrot.lane.b32.xlu0 %v3664, 32
        %v3832 = vpop.permute.xlu0 %3831
        %3833 = vrot.lane.b32.xlu0 %v3665, 32
        %v3834 = vpop.permute.xlu0 %3833
        %3835 = vrot.lane.b32.xlu0 %v3666, 32
        %v3836 = vpop.permute.xlu0 %3835
        %3837 = vrot.lane.b32.xlu0 %v3667, 32
        %v3838 = vpop.permute.xlu0 %3837
        %3839 = vrot.lane.b32.xlu0 %v3668, 32
        %v3840 = vpop.permute.xlu0 %3839
        %3841 = vrot.lane.b32.xlu0 %v3669, 32
        %v3842 = vpop.permute.xlu0 %3841
        %3843 = vrot.lane.b32.xlu0 %v3670, 32
        %v3844 = vpop.permute.xlu0 %3843
        %3845 = vrot.lane.b32.xlu0 %v3671, 32
        %v3846 = vpop.permute.xlu0 %3845
        %3847 = vrot.lane.b32.xlu0 %v3672, 32
        %v3848 = vpop.permute.xlu0 %3847
        %3849 = vrot.lane.b32.xlu0 %v3673, 32
        %v3850 = vpop.permute.xlu0 %3849
        %3851 = vrot.lane.b32.xlu0 %v3674, 32
        %v3852 = vpop.permute.xlu0 %3851
        %3853 = vrot.lane.b32.xlu0 %v3675, 32
        %v3854 = vpop.permute.xlu0 %3853
        %3855 = vrot.lane.b32.xlu0 %v3676, 32
        %v3856 = vpop.permute.xlu0 %3855
        %3857 = vrot.lane.b32.xlu0 %v3677, 32
        %v3858 = vpop.permute.xlu0 %3857
        %3859 = vrot.lane.b32.xlu0 %v3678, 32
        %v3860 = vpop.permute.xlu0 %3859
        %3861 = vrot.lane.b32.xlu0 %v3679, 32
        %v3862 = vpop.permute.xlu0 %3861
        %3863 = vrot.lane.b32.xlu0 %v3680, 32
        %v3864 = vpop.permute.xlu0 %3863
        %3865 = vrot.lane.b32.xlu0 %v3681, 32
        %v3866 = vpop.permute.xlu0 %3865
        %3867 = vrot.lane.b32.xlu0 %v3682, 32
        %v3868 = vpop.permute.xlu0 %3867
        %3869 = vrot.lane.b32.xlu0 %v3683, 32
        %v3870 = vpop.permute.xlu0 %3869
        %3871 = vrot.lane.b32.xlu0 %v3684, 32
        %v3872 = vpop.permute.xlu0 %3871
        %3873 = vrot.lane.b32.xlu0 %v3685, 32
        %v3874 = vpop.permute.xlu0 %3873
        %3875 = vrot.lane.b32.xlu0 %v3686, 32
        %v3876 = vpop.permute.xlu0 %3875
        %3877 = vrot.lane.b32.xlu0 %v3687, 32
        %v3878 = vpop.permute.xlu0 %3877
        %3879 = vrot.lane.b32.xlu0 %v3688, 32
        %v3880 = vpop.permute.xlu0 %3879
        %v3945 = vmul.f32 %v2268, %v3754
        %v3946 = vmul.f32 %v2269, %v3756
        %v3947 = vmul.f32 %v2270, %v3758
        %v3948 = vmul.f32 %v2271, %v3760
        %v3949 = vmul.f32 %v2272, %v3762
        %v3950 = vmul.f32 %v2273, %v3764
        %v3951 = vmul.f32 %v2274, %v3766
        %v3952 = vmul.f32 %v2275, %v3768
        %v3953 = vmul.f32 %v2276, %v3770
        %v3954 = vmul.f32 %v2277, %v3772
        %v3955 = vmul.f32 %v2278, %v3774
        %v3956 = vmul.f32 %v2279, %v3776
        %v3957 = vmul.f32 %v2280, %v3778
        %v3958 = vmul.f32 %v2281, %v3780
        %v3959 = vmul.f32 %v2282, %v3782
        %v3960 = vmul.f32 %v2283, %v3784
        %v3961 = vmul.f32 %v2284, %v3786
        %v3962 = vmul.f32 %v2285, %v3788
        %v3963 = vmul.f32 %v2286, %v3790
        %v3964 = vmul.f32 %v2287, %v3792
        %v3965 = vmul.f32 %v2288, %v3794
        %v3966 = vmul.f32 %v2289, %v3796
        %v3967 = vmul.f32 %v2290, %v3798
        %v3968 = vmul.f32 %v2291, %v3800
        %v3969 = vmul.f32 %v2292, %v3802
        %v3970 = vmul.f32 %v2293, %v3804
        %v3971 = vmul.f32 %v2294, %v3806
        %v3972 = vmul.f32 %v2295, %v3808
        %v3973 = vmul.f32 %v2296, %v3810
        %v3974 = vmul.f32 %v2297, %v3812
        %v3975 = vmul.f32 %v2298, %v3814
        %v3976 = vmul.f32 %v2299, %v3816
        %v3977 = vmul.f32 %v2300, %v3818
        %v3978 = vmul.f32 %v2301, %v3820
        %v3979 = vmul.f32 %v2302, %v3822
        %v3980 = vmul.f32 %v2303, %v3824
        %v3981 = vmul.f32 %v2304, %v3826
        %v3982 = vmul.f32 %v2305, %v3828
        %v3983 = vmul.f32 %v2306, %v3830
        %v3984 = vmul.f32 %v2307, %v3832
        %v3985 = vmul.f32 %v2308, %v3834
        %v3986 = vmul.f32 %v2309, %v3836
        %v3987 = vmul.f32 %v2310, %v3838
        %v3988 = vmul.f32 %v2311, %v3840
        %v3989 = vmul.f32 %v2312, %v3842
        %v3990 = vmul.f32 %v2313, %v3844
        %v3991 = vmul.f32 %v2314, %v3846
        %v3992 = vmul.f32 %v2315, %v3848
        %v3993 = vmul.f32 %v2316, %v3850
        %v3994 = vmul.f32 %v2317, %v3852
        %v3995 = vmul.f32 %v2318, %v3854
        %v3996 = vmul.f32 %v2319, %v3856
        %v3997 = vmul.f32 %v2320, %v3858
        %v3998 = vmul.f32 %v2321, %v3860
        %v3999 = vmul.f32 %v2322, %v3862
        %v4000 = vmul.f32 %v2323, %v3864
        %v4001 = vmul.f32 %v2324, %v3866
        %v4002 = vmul.f32 %v2325, %v3868
        %v4003 = vmul.f32 %v2326, %v3870
        %v4004 = vmul.f32 %v2327, %v3872
        %v4005 = vmul.f32 %v2328, %v3874
        %v4006 = vmul.f32 %v2329, %v3876
        %v4007 = vmul.f32 %v2330, %v3878
        %v4008 = vmul.f32 %v2331, %v3880
        %4073 = vrot.lane.b32.xlu0 %v3945, 64
        %v4074 = vpop.permute.xlu0 %4073
        %4075 = vrot.lane.b32.xlu0 %v3946, 64
        %v4076 = vpop.permute.xlu0 %4075
        %4077 = vrot.lane.b32.xlu0 %v3947, 64
        %v4078 = vpop.permute.xlu0 %4077
        %4079 = vrot.lane.b32.xlu0 %v3948, 64
        %v4080 = vpop.permute.xlu0 %4079
        %4081 = vrot.lane.b32.xlu0 %v3949, 64
        %v4082 = vpop.permute.xlu0 %4081
        %4083 = vrot.lane.b32.xlu0 %v3950, 64
        %v4084 = vpop.permute.xlu0 %4083
        %4085 = vrot.lane.b32.xlu0 %v3951, 64
        %v4086 = vpop.permute.xlu0 %4085
        %4087 = vrot.lane.b32.xlu0 %v3952, 64
        %v4088 = vpop.permute.xlu0 %4087
        %4089 = vrot.lane.b32.xlu0 %v3953, 64
        %v4090 = vpop.permute.xlu0 %4089
        %4091 = vrot.lane.b32.xlu0 %v3954, 64
        %v4092 = vpop.permute.xlu0 %4091
        %4093 = vrot.lane.b32.xlu0 %v3955, 64
        %v4094 = vpop.permute.xlu0 %4093
        %4095 = vrot.lane.b32.xlu0 %v3956, 64
        %v4096 = vpop.permute.xlu0 %4095
        %4097 = vrot.lane.b32.xlu0 %v3957, 64
        %v4098 = vpop.permute.xlu0 %4097
        %4099 = vrot.lane.b32.xlu0 %v3958, 64
        %v4100 = vpop.permute.xlu0 %4099
        %4101 = vrot.lane.b32.xlu0 %v3959, 64
        %v4102 = vpop.permute.xlu0 %4101
        %4103 = vrot.lane.b32.xlu0 %v3960, 64
        %v4104 = vpop.permute.xlu0 %4103
        %4105 = vrot.lane.b32.xlu0 %v3961, 64
        %v4106 = vpop.permute.xlu0 %4105
        %4107 = vrot.lane.b32.xlu0 %v3962, 64
        %v4108 = vpop.permute.xlu0 %4107
        %4109 = vrot.lane.b32.xlu0 %v3963, 64
        %v4110 = vpop.permute.xlu0 %4109
        %4111 = vrot.lane.b32.xlu0 %v3964, 64
        %v4112 = vpop.permute.xlu0 %4111
        %4113 = vrot.lane.b32.xlu0 %v3965, 64
        %v4114 = vpop.permute.xlu0 %4113
        %4115 = vrot.lane.b32.xlu0 %v3966, 64
        %v4116 = vpop.permute.xlu0 %4115
        %4117 = vrot.lane.b32.xlu0 %v3967, 64
        %v4118 = vpop.permute.xlu0 %4117
        %4119 = vrot.lane.b32.xlu0 %v3968, 64
        %v4120 = vpop.permute.xlu0 %4119
        %4121 = vrot.lane.b32.xlu0 %v3969, 64
        %v4122 = vpop.permute.xlu0 %4121
        %4123 = vrot.lane.b32.xlu0 %v3970, 64
        %v4124 = vpop.permute.xlu0 %4123
        %4125 = vrot.lane.b32.xlu0 %v3971, 64
        %v4126 = vpop.permute.xlu0 %4125
        %4127 = vrot.lane.b32.xlu0 %v3972, 64
        %v4128 = vpop.permute.xlu0 %4127
        %4129 = vrot.lane.b32.xlu0 %v3973, 64
        %v4130 = vpop.permute.xlu0 %4129
        %4131 = vrot.lane.b32.xlu0 %v3974, 64
        %v4132 = vpop.permute.xlu0 %4131
        %4133 = vrot.lane.b32.xlu0 %v3975, 64
        %v4134 = vpop.permute.xlu0 %4133
        %4135 = vrot.lane.b32.xlu0 %v3976, 64
        %v4136 = vpop.permute.xlu0 %4135
        %4137 = vrot.lane.b32.xlu0 %v3977, 64
        %v4138 = vpop.permute.xlu0 %4137
        %4139 = vrot.lane.b32.xlu0 %v3978, 64
        %v4140 = vpop.permute.xlu0 %4139
        %4141 = vrot.lane.b32.xlu0 %v3979, 64
        %v4142 = vpop.permute.xlu0 %4141
        %4143 = vrot.lane.b32.xlu0 %v3980, 64
        %v4144 = vpop.permute.xlu0 %4143
        %4145 = vrot.lane.b32.xlu0 %v3981, 64
        %v4146 = vpop.permute.xlu0 %4145
        %4147 = vrot.lane.b32.xlu0 %v3982, 64
        %v4148 = vpop.permute.xlu0 %4147
        %4149 = vrot.lane.b32.xlu0 %v3983, 64
        %v4150 = vpop.permute.xlu0 %4149
        %4151 = vrot.lane.b32.xlu0 %v3984, 64
        %v4152 = vpop.permute.xlu0 %4151
        %4153 = vrot.lane.b32.xlu0 %v3985, 64
        %v4154 = vpop.permute.xlu0 %4153
        %4155 = vrot.lane.b32.xlu0 %v3986, 64
        %v4156 = vpop.permute.xlu0 %4155
        %4157 = vrot.lane.b32.xlu0 %v3987, 64
        %v4158 = vpop.permute.xlu0 %4157
        %4159 = vrot.lane.b32.xlu0 %v3988, 64
        %v4160 = vpop.permute.xlu0 %4159
        %4161 = vrot.lane.b32.xlu0 %v3989, 64
        %v4162 = vpop.permute.xlu0 %4161
        %4163 = vrot.lane.b32.xlu0 %v3990, 64
        %v4164 = vpop.permute.xlu0 %4163
        %4165 = vrot.lane.b32.xlu0 %v3991, 64
        %v4166 = vpop.permute.xlu0 %4165
        %4167 = vrot.lane.b32.xlu0 %v3992, 64
        %v4168 = vpop.permute.xlu0 %4167
        %4169 = vrot.lane.b32.xlu0 %v3993, 64
        %v4170 = vpop.permute.xlu0 %4169
        %4171 = vrot.lane.b32.xlu0 %v3994, 64
        %v4172 = vpop.permute.xlu0 %4171
        %4173 = vrot.lane.b32.xlu0 %v3995, 64
        %v4174 = vpop.permute.xlu0 %4173
        %4175 = vrot.lane.b32.xlu0 %v3996, 64
        %v4176 = vpop.permute.xlu0 %4175
        %4177 = vrot.lane.b32.xlu0 %v3997, 64
        %v4178 = vpop.permute.xlu0 %4177
        %4179 = vrot.lane.b32.xlu0 %v3998, 64
        %v4180 = vpop.permute.xlu0 %4179
        %4181 = vrot.lane.b32.xlu0 %v3999, 64
        %v4182 = vpop.permute.xlu0 %4181
        %4183 = vrot.lane.b32.xlu0 %v4000, 64
        %v4184 = vpop.permute.xlu0 %4183
        %4185 = vrot.lane.b32.xlu0 %v4001, 64
        %v4186 = vpop.permute.xlu0 %4185
        %4187 = vrot.lane.b32.xlu0 %v4002, 64
        %v4188 = vpop.permute.xlu0 %4187
        %4189 = vrot.lane.b32.xlu0 %v4003, 64
        %v4190 = vpop.permute.xlu0 %4189
        %4191 = vrot.lane.b32.xlu0 %v4004, 64
        %v4192 = vpop.permute.xlu0 %4191
        %4193 = vrot.lane.b32.xlu0 %v4005, 64
        %v4194 = vpop.permute.xlu0 %4193
        %4195 = vrot.lane.b32.xlu0 %v4006, 64
        %v4196 = vpop.permute.xlu0 %4195
        %4197 = vrot.lane.b32.xlu0 %v4007, 64
        %v4198 = vpop.permute.xlu0 %4197
        %4199 = vrot.lane.b32.xlu0 %v4008, 64
        %v4200 = vpop.permute.xlu0 %4199
        %v4265 = vrot.slane %v4090, 4
        %v4266 = vsel %vm2441, %v4265, %v4074
        %v4268 = vunpack.c.l.s4 1934713408
        %v4269 = vunpack.c.0.s8 %v4268
        %v4270 = vperm.slane %v4266, %v4269
        %v4271 = vrot.slane %v4270, 4
        %v4272 = vsel %vm2441, 0.0, %v4271
        %v4273 = vrot.slane %v4122, 4
        %v4274 = vsel %vm2441, %v4273, %v4106
        %v4276 = vunpack.c.l.s4 1934713408
        %v4277 = vunpack.c.0.s8 %v4276
        %v4278 = vperm.slane %v4274, %v4277
        %v4279 = vrot.slane %v4278, 4
        %v4280 = vsel %vm2441, 0.0, %v4279
        %v4281 = vrot.slane %v4154, 4
        %v4282 = vsel %vm2441, %v4281, %v4138
        %v4284 = vunpack.c.l.s4 1934713408
        %v4285 = vunpack.c.0.s8 %v4284
        %v4286 = vperm.slane %v4282, %v4285
        %v4287 = vrot.slane %v4286, 4
        %v4288 = vsel %vm2441, 0.0, %v4287
        %v4289 = vrot.slane %v4186, 4
        %v4290 = vsel %vm2441, %v4289, %v4170
        %v4292 = vunpack.c.l.s4 1934713408
        %v4293 = vunpack.c.0.s8 %v4292
        %v4294 = vperm.slane %v4290, %v4293
        %v4295 = vrot.slane %v4294, 4
        %v4296 = vsel %vm2441, 0.0, %v4295
        %v4297 = vrot.slane %v4092, 4
        %v4298 = vsel %vm2441, %v4297, %v4076
        %v4300 = vunpack.c.l.s4 1934713408
        %v4301 = vunpack.c.0.s8 %v4300
        %v4302 = vperm.slane %v4298, %v4301
        %v4303 = vrot.slane %v4302, 4
        %v4304 = vsel %vm2441, 0.0, %v4303
        %v4305 = vrot.slane %v4124, 4
        %v4306 = vsel %vm2441, %v4305, %v4108
        %v4308 = vunpack.c.l.s4 1934713408
        %v4309 = vunpack.c.0.s8 %v4308
        %v4310 = vperm.slane %v4306, %v4309
        %v4311 = vrot.slane %v4310, 4
        %v4312 = vsel %vm2441, 0.0, %v4311
        %v4313 = vrot.slane %v4156, 4
        %v4314 = vsel %vm2441, %v4313, %v4140
        %v4316 = vunpack.c.l.s4 1934713408
        %v4317 = vunpack.c.0.s8 %v4316
        %v4318 = vperm.slane %v4314, %v4317
        %v4319 = vrot.slane %v4318, 4
        %v4320 = vsel %vm2441, 0.0, %v4319
        %v4321 = vrot.slane %v4188, 4
        %v4322 = vsel %vm2441, %v4321, %v4172
        %v4324 = vunpack.c.l.s4 1934713408
        %v4325 = vunpack.c.0.s8 %v4324
        %v4326 = vperm.slane %v4322, %v4325
        %v4327 = vrot.slane %v4326, 4
        %v4328 = vsel %vm2441, 0.0, %v4327
        %v4329 = vrot.slane %v4094, 4
        %v4330 = vsel %vm2441, %v4329, %v4078
        %v4332 = vunpack.c.l.s4 1934713408
        %v4333 = vunpack.c.0.s8 %v4332
        %v4334 = vperm.slane %v4330, %v4333
        %v4335 = vrot.slane %v4334, 4
        %v4336 = vsel %vm2441, 0.0, %v4335
        %v4337 = vrot.slane %v4126, 4
        %v4338 = vsel %vm2441, %v4337, %v4110
        %v4340 = vunpack.c.l.s4 1934713408
        %v4341 = vunpack.c.0.s8 %v4340
        %v4342 = vperm.slane %v4338, %v4341
        %v4343 = vrot.slane %v4342, 4
        %v4344 = vsel %vm2441, 0.0, %v4343
        %v4345 = vrot.slane %v4158, 4
        %v4346 = vsel %vm2441, %v4345, %v4142
        %v4348 = vunpack.c.l.s4 1934713408
        %v4349 = vunpack.c.0.s8 %v4348
        %v4350 = vperm.slane %v4346, %v4349
        %v4351 = vrot.slane %v4350, 4
        %v4352 = vsel %vm2441, 0.0, %v4351
        %v4353 = vrot.slane %v4190, 4
        %v4354 = vsel %vm2441, %v4353, %v4174
        %v4356 = vunpack.c.l.s4 1934713408
        %v4357 = vunpack.c.0.s8 %v4356
        %v4358 = vperm.slane %v4354, %v4357
        %v4359 = vrot.slane %v4358, 4
        %v4360 = vsel %vm2441, 0.0, %v4359
        %v4361 = vrot.slane %v4096, 4
        %v4362 = vsel %vm2441, %v4361, %v4080
        %v4364 = vunpack.c.l.s4 1934713408
        %v4365 = vunpack.c.0.s8 %v4364
        %v4366 = vperm.slane %v4362, %v4365
        %v4367 = vrot.slane %v4366, 4
        %v4368 = vsel %vm2441, 0.0, %v4367
        %v4369 = vrot.slane %v4128, 4
        %v4370 = vsel %vm2441, %v4369, %v4112
        %v4372 = vunpack.c.l.s4 1934713408
        %v4373 = vunpack.c.0.s8 %v4372
        %v4374 = vperm.slane %v4370, %v4373
        %v4375 = vrot.slane %v4374, 4
        %v4376 = vsel %vm2441, 0.0, %v4375
        %v4377 = vrot.slane %v4160, 4
        %v4378 = vsel %vm2441, %v4377, %v4144
        %v4380 = vunpack.c.l.s4 1934713408
        %v4381 = vunpack.c.0.s8 %v4380
        %v4382 = vperm.slane %v4378, %v4381
        %v4383 = vrot.slane %v4382, 4
        %v4384 = vsel %vm2441, 0.0, %v4383
        %v4385 = vrot.slane %v4192, 4
        %v4386 = vsel %vm2441, %v4385, %v4176
        %v4388 = vunpack.c.l.s4 1934713408
        %v4389 = vunpack.c.0.s8 %v4388
        %v4390 = vperm.slane %v4386, %v4389
        %v4391 = vrot.slane %v4390, 4
        %v4392 = vsel %vm2441, 0.0, %v4391
        %v4393 = vrot.slane %v4098, 4
        %v4394 = vsel %vm2441, %v4393, %v4082
        %v4396 = vunpack.c.l.s4 1934713408
        %v4397 = vunpack.c.0.s8 %v4396
        %v4398 = vperm.slane %v4394, %v4397
        %v4399 = vrot.slane %v4398, 4
        %v4400 = vsel %vm2441, 0.0, %v4399
        %v4401 = vrot.slane %v4130, 4
        %v4402 = vsel %vm2441, %v4401, %v4114
        %v4404 = vunpack.c.l.s4 1934713408
        %v4405 = vunpack.c.0.s8 %v4404
        %v4406 = vperm.slane %v4402, %v4405
        %v4407 = vrot.slane %v4406, 4
        %v4408 = vsel %vm2441, 0.0, %v4407
        %v4409 = vrot.slane %v4162, 4
        %v4410 = vsel %vm2441, %v4409, %v4146
        %v4412 = vunpack.c.l.s4 1934713408
        %v4413 = vunpack.c.0.s8 %v4412
        %v4414 = vperm.slane %v4410, %v4413
        %v4415 = vrot.slane %v4414, 4
        %v4416 = vsel %vm2441, 0.0, %v4415
        %v4417 = vrot.slane %v4194, 4
        %v4418 = vsel %vm2441, %v4417, %v4178
        %v4420 = vunpack.c.l.s4 1934713408
        %v4421 = vunpack.c.0.s8 %v4420
        %v4422 = vperm.slane %v4418, %v4421
        %v4423 = vrot.slane %v4422, 4
        %v4424 = vsel %vm2441, 0.0, %v4423
        %v4425 = vrot.slane %v4100, 4
        %v4426 = vsel %vm2441, %v4425, %v4084
        %v4428 = vunpack.c.l.s4 1934713408
        %v4429 = vunpack.c.0.s8 %v4428
        %v4430 = vperm.slane %v4426, %v4429
        %v4431 = vrot.slane %v4430, 4
        %v4432 = vsel %vm2441, 0.0, %v4431
        %v4433 = vrot.slane %v4132, 4
        %v4434 = vsel %vm2441, %v4433, %v4116
        %v4436 = vunpack.c.l.s4 1934713408
        %v4437 = vunpack.c.0.s8 %v4436
        %v4438 = vperm.slane %v4434, %v4437
        %v4439 = vrot.slane %v4438, 4
        %v4440 = vsel %vm2441, 0.0, %v4439
        %v4441 = vrot.slane %v4164, 4
        %v4442 = vsel %vm2441, %v4441, %v4148
        %v4444 = vunpack.c.l.s4 1934713408
        %v4445 = vunpack.c.0.s8 %v4444
        %v4446 = vperm.slane %v4442, %v4445
        %v4447 = vrot.slane %v4446, 4
        %v4448 = vsel %vm2441, 0.0, %v4447
        %v4449 = vrot.slane %v4196, 4
        %v4450 = vsel %vm2441, %v4449, %v4180
        %v4452 = vunpack.c.l.s4 1934713408
        %v4453 = vunpack.c.0.s8 %v4452
        %v4454 = vperm.slane %v4450, %v4453
        %v4455 = vrot.slane %v4454, 4
        %v4456 = vsel %vm2441, 0.0, %v4455
        %v4457 = vrot.slane %v4102, 4
        %v4458 = vsel %vm2441, %v4457, %v4086
        %v4460 = vunpack.c.l.s4 1934713408
        %v4461 = vunpack.c.0.s8 %v4460
        %v4462 = vperm.slane %v4458, %v4461
        %v4463 = vrot.slane %v4462, 4
        %v4464 = vsel %vm2441, 0.0, %v4463
        %v4465 = vrot.slane %v4134, 4
        %v4466 = vsel %vm2441, %v4465, %v4118
        %v4468 = vunpack.c.l.s4 1934713408
        %v4469 = vunpack.c.0.s8 %v4468
        %v4470 = vperm.slane %v4466, %v4469
        %v4471 = vrot.slane %v4470, 4
        %v4472 = vsel %vm2441, 0.0, %v4471
        %v4473 = vrot.slane %v4166, 4
        %v4474 = vsel %vm2441, %v4473, %v4150
        %v4476 = vunpack.c.l.s4 1934713408
        %v4477 = vunpack.c.0.s8 %v4476
        %v4478 = vperm.slane %v4474, %v4477
        %v4479 = vrot.slane %v4478, 4
        %v4480 = vsel %vm2441, 0.0, %v4479
        %v4481 = vrot.slane %v4198, 4
        %v4482 = vsel %vm2441, %v4481, %v4182
        %v4484 = vunpack.c.l.s4 1934713408
        %v4485 = vunpack.c.0.s8 %v4484
        %v4486 = vperm.slane %v4482, %v4485
        %v4487 = vrot.slane %v4486, 4
        %v4488 = vsel %vm2441, 0.0, %v4487
        %v4489 = vrot.slane %v4104, 4
        %v4490 = vsel %vm2441, %v4489, %v4088
        %v4492 = vunpack.c.l.s4 1934713408
        %v4493 = vunpack.c.0.s8 %v4492
        %v4494 = vperm.slane %v4490, %v4493
        %v4495 = vrot.slane %v4494, 4
        %v4496 = vsel %vm2441, 0.0, %v4495
        %v4497 = vrot.slane %v4136, 4
        %v4498 = vsel %vm2441, %v4497, %v4120
        %v4500 = vunpack.c.l.s4 1934713408
        %v4501 = vunpack.c.0.s8 %v4500
        %v4502 = vperm.slane %v4498, %v4501
        %v4503 = vrot.slane %v4502, 4
        %v4504 = vsel %vm2441, 0.0, %v4503
        %v4505 = vrot.slane %v4168, 4
        %v4506 = vsel %vm2441, %v4505, %v4152
        %v4508 = vunpack.c.l.s4 1934713408
        %v4509 = vunpack.c.0.s8 %v4508
        %v4510 = vperm.slane %v4506, %v4509
        %v4511 = vrot.slane %v4510, 4
        %v4512 = vsel %vm2441, 0.0, %v4511
        %v4513 = vrot.slane %v4200, 4
        %v4514 = vsel %vm2441, %v4513, %v4184
        %v4516 = vunpack.c.l.s4 1934713408
        %v4517 = vunpack.c.0.s8 %v4516
        %v4518 = vperm.slane %v4514, %v4517
        %v4519 = vrot.slane %v4518, 4
        %v4520 = vsel %vm2441, 0.0, %v4519
        %4525 = vst [vmem:[#allocation1] ss:$4 sm:$0xff] %v4270
        %s4526 = scalar_lea.vmem [#allocation1], 1
        %4527 = vst [vmem:[%s4526] ss:$4 sm:$0xff] %v4278
        %s4528 = scalar_lea.vmem [#allocation1], 2
        %4529 = vst [vmem:[%s4528] ss:$4 sm:$0xff] %v4286
        %s4530 = scalar_lea.vmem [#allocation1], 3
        %4531 = vst [vmem:[%s4530] ss:$4 sm:$0xff] %v4294
        %v4532 = vld.sshfl [vmem:[#allocation1] sm:$0xff pattern:$0x73625140]
        %4538 = vst [vmem:[#allocation1] ss:$4 sm:$0xff] %v4272
        %s4539 = scalar_lea.vmem [#allocation1], 1
        %4540 = vst [vmem:[%s4539] ss:$4 sm:$0xff] %v4280
        %s4541 = scalar_lea.vmem [#allocation1], 2
        %4542 = vst [vmem:[%s4541] ss:$4 sm:$0xff] %v4288
        %s4543 = scalar_lea.vmem [#allocation1], 3
        %4544 = vst [vmem:[%s4543] ss:$4 sm:$0xff] %v4296
        %v4545 = vld.sshfl [vmem:[#allocation1] sm:$0xff pattern:$0x73625140]
        %4546 = vrot.lane.b32.xlu0 %v4545, 32
        %v4547 = vpop.permute.xlu0 %4546
        %4553 = vst [vmem:[#allocation1] ss:$4 sm:$0xff] %v4302
        %s4554 = scalar_lea.vmem [#allocation1], 1
        %4555 = vst [vmem:[%s4554] ss:$4 sm:$0xff] %v4310
        %s4556 = scalar_lea.vmem [#allocation1], 2
        %4557 = vst [vmem:[%s4556] ss:$4 sm:$0xff] %v4318
        %s4558 = scalar_lea.vmem [#allocation1], 3
        %4559 = vst [vmem:[%s4558] ss:$4 sm:$0xff] %v4326
        %v4560 = vld.sshfl [vmem:[#allocation1] sm:$0xff pattern:$0x73625140]
        %4561 = vrot.lane.b32.xlu0 %v4560, 64
        %v4562 = vpop.permute.xlu0 %4561
        %4568 = vst [vmem:[#allocation1] ss:$4 sm:$0xff] %v4304
        %s4569 = scalar_lea.vmem [#allocation1], 1
        %4570 = vst [vmem:[%s4569] ss:$4 sm:$0xff] %v4312
        %s4571 = scalar_lea.vmem [#allocation1], 2
        %4572 = vst [vmem:[%s4571] ss:$4 sm:$0xff] %v4320
        %s4573 = scalar_lea.vmem [#allocation1], 3
        %4574 = vst [vmem:[%s4573] ss:$4 sm:$0xff] %v4328
        %v4575 = vld.sshfl [vmem:[#allocation1] sm:$0xff pattern:$0x73625140]
        %4576 = vrot.lane.b32.xlu0 %v4575, 96
        %v4577 = vpop.permute.xlu0 %4576
        %4583 = vst [vmem:[#allocation1] ss:$4 sm:$0xff] %v4334
        %s4584 = scalar_lea.vmem [#allocation1], 1
        %4585 = vst [vmem:[%s4584] ss:$4 sm:$0xff] %v4342
        %s4586 = scalar_lea.vmem [#allocation1], 2
        %4587 = vst [vmem:[%s4586] ss:$4 sm:$0xff] %v4350
        %s4588 = scalar_lea.vmem [#allocation1], 3
        %4589 = vst [vmem:[%s4588] ss:$4 sm:$0xff] %v4358
        %v4590 = vld.sshfl [vmem:[#allocation1] sm:$0xff pattern:$0x73625140]
        %4596 = vst [vmem:[#allocation1] ss:$4 sm:$0xff] %v4336
        %s4597 = scalar_lea.vmem [#allocation1], 1
        %4598 = vst [vmem:[%s4597] ss:$4 sm:$0xff] %v4344
        %s4599 = scalar_lea.vmem [#allocation1], 2
        %4600 = vst [vmem:[%s4599] ss:$4 sm:$0xff] %v4352
        %s4601 = scalar_lea.vmem [#allocation1], 3
        %4602 = vst [vmem:[%s4601] ss:$4 sm:$0xff] %v4360
        %v4603 = vld.sshfl [vmem:[#allocation1] sm:$0xff pattern:$0x73625140]
        %4604 = vrot.lane.b32.xlu0 %v4603, 32
        %v4605 = vpop.permute.xlu0 %4604
        %4611 = vst [vmem:[#allocation1] ss:$4 sm:$0xff] %v4366
        %s4612 = scalar_lea.vmem [#allocation1], 1
        %4613 = vst [vmem:[%s4612] ss:$4 sm:$0xff] %v4374
        %s4614 = scalar_lea.vmem [#allocation1], 2
        %4615 = vst [vmem:[%s4614] ss:$4 sm:$0xff] %v4382
        %s4616 = scalar_lea.vmem [#allocation1], 3
        %4617 = vst [vmem:[%s4616] ss:$4 sm:$0xff] %v4390
        %v4618 = vld.sshfl [vmem:[#allocation1] sm:$0xff pattern:$0x73625140]
        %4619 = vrot.lane.b32.xlu0 %v4618, 64
        %v4620 = vpop.permute.xlu0 %4619
        %4626 = vst [vmem:[#allocation1] ss:$4 sm:$0xff] %v4368
        %s4627 = scalar_lea.vmem [#allocation1], 1
        %4628 = vst [vmem:[%s4627] ss:$4 sm:$0xff] %v4376
        %s4629 = scalar_lea.vmem [#allocation1], 2
        %4630 = vst [vmem:[%s4629] ss:$4 sm:$0xff] %v4384
        %s4631 = scalar_lea.vmem [#allocation1], 3
        %4632 = vst [vmem:[%s4631] ss:$4 sm:$0xff] %v4392
        %v4633 = vld.sshfl [vmem:[#allocation1] sm:$0xff pattern:$0x73625140]
        %4634 = vrot.lane.b32.xlu0 %v4633, 96
        %v4635 = vpop.permute.xlu0 %4634
        %4641 = vst [vmem:[#allocation1] ss:$4 sm:$0xff] %v4398
        %s4642 = scalar_lea.vmem [#allocation1], 1
        %4643 = vst [vmem:[%s4642] ss:$4 sm:$0xff] %v4406
        %s4644 = scalar_lea.vmem [#allocation1], 2
        %4645 = vst [vmem:[%s4644] ss:$4 sm:$0xff] %v4414
        %s4646 = scalar_lea.vmem [#allocation1], 3
        %4647 = vst [vmem:[%s4646] ss:$4 sm:$0xff] %v4422
        %v4648 = vld.sshfl [vmem:[#allocation1] sm:$0xff pattern:$0x73625140]
        %4654 = vst [vmem:[#allocation1] ss:$4 sm:$0xff] %v4400
        %s4655 = scalar_lea.vmem [#allocation1], 1
        %4656 = vst [vmem:[%s4655] ss:$4 sm:$0xff] %v4408
        %s4657 = scalar_lea.vmem [#allocation1], 2
        %4658 = vst [vmem:[%s4657] ss:$4 sm:$0xff] %v4416
        %s4659 = scalar_lea.vmem [#allocation1], 3
        %4660 = vst [vmem:[%s4659] ss:$4 sm:$0xff] %v4424
        %v4661 = vld.sshfl [vmem:[#allocation1] sm:$0xff pattern:$0x73625140]
        %4662 = vrot.lane.b32.xlu0 %v4661, 32
        %v4663 = vpop.permute.xlu0 %4662
        %4669 = vst [vmem:[#allocation1] ss:$4 sm:$0xff] %v4430
        %s4670 = scalar_lea.vmem [#allocation1], 1
        %4671 = vst [vmem:[%s4670] ss:$4 sm:$0xff] %v4438
        %s4672 = scalar_lea.vmem [#allocation1], 2
        %4673 = vst [vmem:[%s4672] ss:$4 sm:$0xff] %v4446
        %s4674 = scalar_lea.vmem [#allocation1], 3
        %4675 = vst [vmem:[%s4674] ss:$4 sm:$0xff] %v4454
        %v4676 = vld.sshfl [vmem:[#allocation1] sm:$0xff pattern:$0x73625140]
        %4677 = vrot.lane.b32.xlu0 %v4676, 64
        %v4678 = vpop.permute.xlu0 %4677
        %4684 = vst [vmem:[#allocation1] ss:$4 sm:$0xff] %v4432
        %s4685 = scalar_lea.vmem [#allocation1], 1
        %4686 = vst [vmem:[%s4685] ss:$4 sm:$0xff] %v4440
        %s4687 = scalar_lea.vmem [#allocation1], 2
        %4688 = vst [vmem:[%s4687] ss:$4 sm:$0xff] %v4448
        %s4689 = scalar_lea.vmem [#allocation1], 3
        %4690 = vst [vmem:[%s4689] ss:$4 sm:$0xff] %v4456
        %v4691 = vld.sshfl [vmem:[#allocation1] sm:$0xff pattern:$0x73625140]
        %4692 = vrot.lane.b32.xlu0 %v4691, 96
        %v4693 = vpop.permute.xlu0 %4692
        %4699 = vst [vmem:[#allocation1] ss:$4 sm:$0xff] %v4462
        %s4700 = scalar_lea.vmem [#allocation1], 1
        %4701 = vst [vmem:[%s4700] ss:$4 sm:$0xff] %v4470
        %s4702 = scalar_lea.vmem [#allocation1], 2
        %4703 = vst [vmem:[%s4702] ss:$4 sm:$0xff] %v4478
        %s4704 = scalar_lea.vmem [#allocation1], 3
        %4705 = vst [vmem:[%s4704] ss:$4 sm:$0xff] %v4486
        %v4706 = vld.sshfl [vmem:[#allocation1] sm:$0xff pattern:$0x73625140]
        %4712 = vst [vmem:[#allocation1] ss:$4 sm:$0xff] %v4464
        %s4713 = scalar_lea.vmem [#allocation1], 1
        %4714 = vst [vmem:[%s4713] ss:$4 sm:$0xff] %v4472
        %s4715 = scalar_lea.vmem [#allocation1], 2
        %4716 = vst [vmem:[%s4715] ss:$4 sm:$0xff] %v4480
        %s4717 = scalar_lea.vmem [#allocation1], 3
        %4718 = vst [vmem:[%s4717] ss:$4 sm:$0xff] %v4488
        %v4719 = vld.sshfl [vmem:[#allocation1] sm:$0xff pattern:$0x73625140]
        %4720 = vrot.lane.b32.xlu0 %v4719, 32
        %v4721 = vpop.permute.xlu0 %4720
        %4727 = vst [vmem:[#allocation1] ss:$4 sm:$0xff] %v4494
        %s4728 = scalar_lea.vmem [#allocation1], 1
        %4729 = vst [vmem:[%s4728] ss:$4 sm:$0xff] %v4502
        %s4730 = scalar_lea.vmem [#allocation1], 2
        %4731 = vst [vmem:[%s4730] ss:$4 sm:$0xff] %v4510
        %s4732 = scalar_lea.vmem [#allocation1], 3
        %4733 = vst [vmem:[%s4732] ss:$4 sm:$0xff] %v4518
        %v4734 = vld.sshfl [vmem:[#allocation1] sm:$0xff pattern:$0x73625140]
        %4735 = vrot.lane.b32.xlu0 %v4734, 64
        %v4736 = vpop.permute.xlu0 %4735
        %4742 = vst [vmem:[#allocation1] ss:$4 sm:$0xff] %v4496
        %s4743 = scalar_lea.vmem [#allocation1], 1
        %4744 = vst [vmem:[%s4743] ss:$4 sm:$0xff] %v4504
        %s4745 = scalar_lea.vmem [#allocation1], 2
        %4746 = vst [vmem:[%s4745] ss:$4 sm:$0xff] %v4512
        %s4747 = scalar_lea.vmem [#allocation1], 3
        %4748 = vst [vmem:[%s4747] ss:$4 sm:$0xff] %v4520
        %v4749 = vld.sshfl [vmem:[#allocation1] sm:$0xff pattern:$0x73625140]
        %4750 = vrot.lane.b32.xlu0 %v4749, 96
        %v4751 = vpop.permute.xlu0 %4750
        %vm4753 = vcmask 261120
        %v4754 = vsel %vm4753, %v4532, %v4547
        %vm4755 = vcmask 523264
        %v4756 = vsel %vm4755, %v4754, %v4562
        %vm4757 = vcmask 785408
        %v4758 = vsel %vm4757, %v4756, %v4577
        %v4759 = vsel %vm4753, %v4590, %v4605
        %v4760 = vsel %vm4755, %v4759, %v4620
        %v4761 = vsel %vm4757, %v4760, %v4635
        %v4762 = vsel %vm4753, %v4648, %v4663
        %v4763 = vsel %vm4755, %v4762, %v4678
        %v4764 = vsel %vm4757, %v4763, %v4693
        %v4765 = vsel %vm4753, %v4706, %v4721
        %v4766 = vsel %vm4755, %v4765, %v4736
        %v4767 = vsel %vm4757, %v4766, %v4751
        %4768 = vst [vmem:[%s262] sm:$0xff] %v4758
        %4769 = vst [vmem:[%s262 + $0x8] sm:$0xff] %v4761
        %4770 = vst [vmem:[%s262 + $0x10] sm:$0xff] %v4764
        %4771 = vst [vmem:[%s262 + $0x18] sm:$0xff] %v4767
        %4836 = vrot.lane.b32.xlu0 %v3561, 96
        %v4837 = vpop.permute.xlu0 %4836
        %4838 = vrot.lane.b32.xlu0 %v3562, 96
        %v4839 = vpop.permute.xlu0 %4838
        %4840 = vrot.lane.b32.xlu0 %v3563, 96
        %v4841 = vpop.permute.xlu0 %4840
        %4842 = vrot.lane.b32.xlu0 %v3564, 96
        %v4843 = vpop.permute.xlu0 %4842
        %4844 = vrot.lane.b32.xlu0 %v3565, 96
        %v4845 = vpop.permute.xlu0 %4844
        %4846 = vrot.lane.b32.xlu0 %v3566, 96
        %v4847 = vpop.permute.xlu0 %4846
        %4848 = vrot.lane.b32.xlu0 %v3567, 96
        %v4849 = vpop.permute.xlu0 %4848
        %4850 = vrot.lane.b32.xlu0 %v3568, 96
        %v4851 = vpop.permute.xlu0 %4850
        %4852 = vrot.lane.b32.xlu0 %v3569, 96
        %v4853 = vpop.permute.xlu0 %4852
        %4854 = vrot.lane.b32.xlu0 %v3570, 96
        %v4855 = vpop.permute.xlu0 %4854
        %4856 = vrot.lane.b32.xlu0 %v3571, 96
        %v4857 = vpop.permute.xlu0 %4856
        %4858 = vrot.lane.b32.xlu0 %v3572, 96
        %v4859 = vpop.permute.xlu0 %4858
        %4860 = vrot.lane.b32.xlu0 %v3573, 96
        %v4861 = vpop.permute.xlu0 %4860
        %4862 = vrot.lane.b32.xlu0 %v3574, 96
        %v4863 = vpop.permute.xlu0 %4862
        %4864 = vrot.lane.b32.xlu0 %v3575, 96
        %v4865 = vpop.permute.xlu0 %4864
        %4866 = vrot.lane.b32.xlu0 %v3576, 96
        %v4867 = vpop.permute.xlu0 %4866
        %4868 = vrot.lane.b32.xlu0 %v3577, 96
        %v4869 = vpop.permute.xlu0 %4868
        %4870 = vrot.lane.b32.xlu0 %v3578, 96
        %v4871 = vpop.permute.xlu0 %4870
        %4872 = vrot.lane.b32.xlu0 %v3579, 96
        %v4873 = vpop.permute.xlu0 %4872
        %4874 = vrot.lane.b32.xlu0 %v3580, 96
        %v4875 = vpop.permute.xlu0 %4874
        %4876 = vrot.lane.b32.xlu0 %v3581, 96
        %v4877 = vpop.permute.xlu0 %4876
        %4878 = vrot.lane.b32.xlu0 %v3582, 96
        %v4879 = vpop.permute.xlu0 %4878
        %4880 = vrot.lane.b32.xlu0 %v3583, 96
        %v4881 = vpop.permute.xlu0 %4880
        %4882 = vrot.lane.b32.xlu0 %v3584, 96
        %v4883 = vpop.permute.xlu0 %4882
        %4884 = vrot.lane.b32.xlu0 %v3585, 96
        %v4885 = vpop.permute.xlu0 %4884
        %4886 = vrot.lane.b32.xlu0 %v3586, 96
        %v4887 = vpop.permute.xlu0 %4886
        %4888 = vrot.lane.b32.xlu0 %v3587, 96
        %v4889 = vpop.permute.xlu0 %4888
        %4890 = vrot.lane.b32.xlu0 %v3588, 96
        %v4891 = vpop.permute.xlu0 %4890
        %4892 = vrot.lane.b32.xlu0 %v3589, 96
        %v4893 = vpop.permute.xlu0 %4892
        %4894 = vrot.lane.b32.xlu0 %v3590, 96
        %v4895 = vpop.permute.xlu0 %4894
        %4896 = vrot.lane.b32.xlu0 %v3591, 96
        %v4897 = vpop.permute.xlu0 %4896
        %4898 = vrot.lane.b32.xlu0 %v3592, 96
        %v4899 = vpop.permute.xlu0 %4898
        %4900 = vrot.lane.b32.xlu0 %v3593, 96
        %v4901 = vpop.permute.xlu0 %4900
        %4902 = vrot.lane.b32.xlu0 %v3594, 96
        %v4903 = vpop.permute.xlu0 %4902
        %4904 = vrot.lane.b32.xlu0 %v3595, 96
        %v4905 = vpop.permute.xlu0 %4904
        %4906 = vrot.lane.b32.xlu0 %v3596, 96
        %v4907 = vpop.permute.xlu0 %4906
        %4908 = vrot.lane.b32.xlu0 %v3597, 96
        %v4909 = vpop.permute.xlu0 %4908
        %4910 = vrot.lane.b32.xlu0 %v3598, 96
        %v4911 = vpop.permute.xlu0 %4910
        %4912 = vrot.lane.b32.xlu0 %v3599, 96
        %v4913 = vpop.permute.xlu0 %4912
        %4914 = vrot.lane.b32.xlu0 %v3600, 96
        %v4915 = vpop.permute.xlu0 %4914
        %4916 = vrot.lane.b32.xlu0 %v3601, 96
        %v4917 = vpop.permute.xlu0 %4916
        %4918 = vrot.lane.b32.xlu0 %v3602, 96
        %v4919 = vpop.permute.xlu0 %4918
        %4920 = vrot.lane.b32.xlu0 %v3603, 96
        %v4921 = vpop.permute.xlu0 %4920
        %4922 = vrot.lane.b32.xlu0 %v3604, 96
        %v4923 = vpop.permute.xlu0 %4922
        %4924 = vrot.lane.b32.xlu0 %v3605, 96
        %v4925 = vpop.permute.xlu0 %4924
        %4926 = vrot.lane.b32.xlu0 %v3606, 96
        %v4927 = vpop.permute.xlu0 %4926
        %4928 = vrot.lane.b32.xlu0 %v3607, 96
        %v4929 = vpop.permute.xlu0 %4928
        %4930 = vrot.lane.b32.xlu0 %v3608, 96
        %v4931 = vpop.permute.xlu0 %4930
        %4932 = vrot.lane.b32.xlu0 %v3609, 96
        %v4933 = vpop.permute.xlu0 %4932
        %4934 = vrot.lane.b32.xlu0 %v3610, 96
        %v4935 = vpop.permute.xlu0 %4934
        %4936 = vrot.lane.b32.xlu0 %v3611, 96
        %v4937 = vpop.permute.xlu0 %4936
        %4938 = vrot.lane.b32.xlu0 %v3612, 96
        %v4939 = vpop.permute.xlu0 %4938
        %4940 = vrot.lane.b32.xlu0 %v3613, 96
        %v4941 = vpop.permute.xlu0 %4940
        %4942 = vrot.lane.b32.xlu0 %v3614, 96
        %v4943 = vpop.permute.xlu0 %4942
        %4944 = vrot.lane.b32.xlu0 %v3615, 96
        %v4945 = vpop.permute.xlu0 %4944
        %4946 = vrot.lane.b32.xlu0 %v3616, 96
        %v4947 = vpop.permute.xlu0 %4946
        %4948 = vrot.lane.b32.xlu0 %v3617, 96
        %v4949 = vpop.permute.xlu0 %4948
        %4950 = vrot.lane.b32.xlu0 %v3618, 96
        %v4951 = vpop.permute.xlu0 %4950
        %4952 = vrot.lane.b32.xlu0 %v3619, 96
        %v4953 = vpop.permute.xlu0 %4952
        %4954 = vrot.lane.b32.xlu0 %v3620, 96
        %v4955 = vpop.permute.xlu0 %4954
        %4956 = vrot.lane.b32.xlu0 %v3621, 96
        %v4957 = vpop.permute.xlu0 %4956
        %4958 = vrot.lane.b32.xlu0 %v3622, 96
        %v4959 = vpop.permute.xlu0 %4958
        %4960 = vrot.lane.b32.xlu0 %v3623, 96
        %v4961 = vpop.permute.xlu0 %4960
        %4962 = vrot.lane.b32.xlu0 %v3624, 96
        %v4963 = vpop.permute.xlu0 %4962
        %v5028 = vrot.slane %v4853, 4
        %v5029 = vsel %vm2441, %v5028, %v4837
        %v5031 = vunpack.c.l.s4 1934713408
        %v5032 = vunpack.c.0.s8 %v5031
        %v5033 = vperm.slane %v5029, %v5032
        %v5034 = vrot.slane %v5033, 4
        %v5035 = vsel %vm2441, 0.0, %v5034
        %v5036 = vrot.slane %v4885, 4
        %v5037 = vsel %vm2441, %v5036, %v4869
        %v5039 = vunpack.c.l.s4 1934713408
        %v5040 = vunpack.c.0.s8 %v5039
        %v5041 = vperm.slane %v5037, %v5040
        %v5042 = vrot.slane %v5041, 4
        %v5043 = vsel %vm2441, 0.0, %v5042
        %v5044 = vrot.slane %v4917, 4
        %v5045 = vsel %vm2441, %v5044, %v4901
        %v5047 = vunpack.c.l.s4 1934713408
        %v5048 = vunpack.c.0.s8 %v5047
        %v5049 = vperm.slane %v5045, %v5048
        %v5050 = vrot.slane %v5049, 4
        %v5051 = vsel %vm2441, 0.0, %v5050
        %v5052 = vrot.slane %v4949, 4
        %v5053 = vsel %vm2441, %v5052, %v4933
        %v5055 = vunpack.c.l.s4 1934713408
        %v5056 = vunpack.c.0.s8 %v5055
        %v5057 = vperm.slane %v5053, %v5056
        %v5058 = vrot.slane %v5057, 4
        %v5059 = vsel %vm2441, 0.0, %v5058
        %v5060 = vrot.slane %v4855, 4
        %v5061 = vsel %vm2441, %v5060, %v4839
        %v5063 = vunpack.c.l.s4 1934713408
        %v5064 = vunpack.c.0.s8 %v5063
        %v5065 = vperm.slane %v5061, %v5064
        %v5066 = vrot.slane %v5065, 4
        %v5067 = vsel %vm2441, 0.0, %v5066
        %v5068 = vrot.slane %v4887, 4
        %v5069 = vsel %vm2441, %v5068, %v4871
        %v5071 = vunpack.c.l.s4 1934713408
        %v5072 = vunpack.c.0.s8 %v5071
        %v5073 = vperm.slane %v5069, %v5072
        %v5074 = vrot.slane %v5073, 4
        %v5075 = vsel %vm2441, 0.0, %v5074
        %v5076 = vrot.slane %v4919, 4
        %v5077 = vsel %vm2441, %v5076, %v4903
        %v5079 = vunpack.c.l.s4 1934713408
        %v5080 = vunpack.c.0.s8 %v5079
        %v5081 = vperm.slane %v5077, %v5080
        %v5082 = vrot.slane %v5081, 4
        %v5083 = vsel %vm2441, 0.0, %v5082
        %v5084 = vrot.slane %v4951, 4
        %v5085 = vsel %vm2441, %v5084, %v4935
        %v5087 = vunpack.c.l.s4 1934713408
        %v5088 = vunpack.c.0.s8 %v5087
        %v5089 = vperm.slane %v5085, %v5088
        %v5090 = vrot.slane %v5089, 4
        %v5091 = vsel %vm2441, 0.0, %v5090
        %v5092 = vrot.slane %v4857, 4
        %v5093 = vsel %vm2441, %v5092, %v4841
        %v5095 = vunpack.c.l.s4 1934713408
        %v5096 = vunpack.c.0.s8 %v5095
        %v5097 = vperm.slane %v5093, %v5096
        %v5098 = vrot.slane %v5097, 4
        %v5099 = vsel %vm2441, 0.0, %v5098
        %v5100 = vrot.slane %v4889, 4
        %v5101 = vsel %vm2441, %v5100, %v4873
        %v5103 = vunpack.c.l.s4 1934713408
        %v5104 = vunpack.c.0.s8 %v5103
        %v5105 = vperm.slane %v5101, %v5104
        %v5106 = vrot.slane %v5105, 4
        %v5107 = vsel %vm2441, 0.0, %v5106
        %v5108 = vrot.slane %v4921, 4
        %v5109 = vsel %vm2441, %v5108, %v4905
        %v5111 = vunpack.c.l.s4 1934713408
        %v5112 = vunpack.c.0.s8 %v5111
        %v5113 = vperm.slane %v5109, %v5112
        %v5114 = vrot.slane %v5113, 4
        %v5115 = vsel %vm2441, 0.0, %v5114
        %v5116 = vrot.slane %v4953, 4
        %v5117 = vsel %vm2441, %v5116, %v4937
        %v5119 = vunpack.c.l.s4 1934713408
        %v5120 = vunpack.c.0.s8 %v5119
        %v5121 = vperm.slane %v5117, %v5120
        %v5122 = vrot.slane %v5121, 4
        %v5123 = vsel %vm2441, 0.0, %v5122
        %v5124 = vrot.slane %v4859, 4
        %v5125 = vsel %vm2441, %v5124, %v4843
        %v5127 = vunpack.c.l.s4 1934713408
        %v5128 = vunpack.c.0.s8 %v5127
        %v5129 = vperm.slane %v5125, %v5128
        %v5130 = vrot.slane %v5129, 4
        %v5131 = vsel %vm2441, 0.0, %v5130
        %v5132 = vrot.slane %v4891, 4
        %v5133 = vsel %vm2441, %v5132, %v4875
        %v5135 = vunpack.c.l.s4 1934713408
        %v5136 = vunpack.c.0.s8 %v5135
        %v5137 = vperm.slane %v5133, %v5136
        %v5138 = vrot.slane %v5137, 4
        %v5139 = vsel %vm2441, 0.0, %v5138
        %v5140 = vrot.slane %v4923, 4
        %v5141 = vsel %vm2441, %v5140, %v4907
        %v5143 = vunpack.c.l.s4 1934713408
        %v5144 = vunpack.c.0.s8 %v5143
        %v5145 = vperm.slane %v5141, %v5144
        %v5146 = vrot.slane %v5145, 4
        %v5147 = vsel %vm2441, 0.0, %v5146
        %v5148 = vrot.slane %v4955, 4
        %v5149 = vsel %vm2441, %v5148, %v4939
        %v5151 = vunpack.c.l.s4 1934713408
        %v5152 = vunpack.c.0.s8 %v5151
        %v5153 = vperm.slane %v5149, %v5152
        %v5154 = vrot.slane %v5153, 4
        %v5155 = vsel %vm2441, 0.0, %v5154
        %v5156 = vrot.slane %v4861, 4
        %v5157 = vsel %vm2441, %v5156, %v4845
        %v5159 = vunpack.c.l.s4 1934713408
        %v5160 = vunpack.c.0.s8 %v5159
        %v5161 = vperm.slane %v5157, %v5160
        %v5162 = vrot.slane %v5161, 4
        %v5163 = vsel %vm2441, 0.0, %v5162
        %v5164 = vrot.slane %v4893, 4
        %v5165 = vsel %vm2441, %v5164, %v4877
        %v5167 = vunpack.c.l.s4 1934713408
        %v5168 = vunpack.c.0.s8 %v5167
        %v5169 = vperm.slane %v5165, %v5168
        %v5170 = vrot.slane %v5169, 4
        %v5171 = vsel %vm2441, 0.0, %v5170
        %v5172 = vrot.slane %v4925, 4
        %v5173 = vsel %vm2441, %v5172, %v4909
        %v5175 = vunpack.c.l.s4 1934713408
        %v5176 = vunpack.c.0.s8 %v5175
        %v5177 = vperm.slane %v5173, %v5176
        %v5178 = vrot.slane %v5177, 4
        %v5179 = vsel %vm2441, 0.0, %v5178
        %v5180 = vrot.slane %v4957, 4
        %v5181 = vsel %vm2441, %v5180, %v4941
        %v5183 = vunpack.c.l.s4 1934713408
        %v5184 = vunpack.c.0.s8 %v5183
        %v5185 = vperm.slane %v5181, %v5184
        %v5186 = vrot.slane %v5185, 4
        %v5187 = vsel %vm2441, 0.0, %v5186
        %v5188 = vrot.slane %v4863, 4
        %v5189 = vsel %vm2441, %v5188, %v4847
        %v5191 = vunpack.c.l.s4 1934713408
        %v5192 = vunpack.c.0.s8 %v5191
        %v5193 = vperm.slane %v5189, %v5192
        %v5194 = vrot.slane %v5193, 4
        %v5195 = vsel %vm2441, 0.0, %v5194
        %v5196 = vrot.slane %v4895, 4
        %v5197 = vsel %vm2441, %v5196, %v4879
        %v5199 = vunpack.c.l.s4 1934713408
        %v5200 = vunpack.c.0.s8 %v5199
        %v5201 = vperm.slane %v5197, %v5200
        %v5202 = vrot.slane %v5201, 4
        %v5203 = vsel %vm2441, 0.0, %v5202
        %v5204 = vrot.slane %v4927, 4
        %v5205 = vsel %vm2441, %v5204, %v4911
        %v5207 = vunpack.c.l.s4 1934713408
        %v5208 = vunpack.c.0.s8 %v5207
        %v5209 = vperm.slane %v5205, %v5208
        %v5210 = vrot.slane %v5209, 4
        %v5211 = vsel %vm2441, 0.0, %v5210
        %v5212 = vrot.slane %v4959, 4
        %v5213 = vsel %vm2441, %v5212, %v4943
        %v5215 = vunpack.c.l.s4 1934713408
        %v5216 = vunpack.c.0.s8 %v5215
        %v5217 = vperm.slane %v5213, %v5216
        %v5218 = vrot.slane %v5217, 4
        %v5219 = vsel %vm2441, 0.0, %v5218
        %v5220 = vrot.slane %v4865, 4
        %v5221 = vsel %vm2441, %v5220, %v4849
        %v5223 = vunpack.c.l.s4 1934713408
        %v5224 = vunpack.c.0.s8 %v5223
        %v5225 = vperm.slane %v5221, %v5224
        %v5226 = vrot.slane %v5225, 4
        %v5227 = vsel %vm2441, 0.0, %v5226
        %v5228 = vrot.slane %v4897, 4
        %v5229 = vsel %vm2441, %v5228, %v4881
        %v5231 = vunpack.c.l.s4 1934713408
        %v5232 = vunpack.c.0.s8 %v5231
        %v5233 = vperm.slane %v5229, %v5232
        %v5234 = vrot.slane %v5233, 4
        %v5235 = vsel %vm2441, 0.0, %v5234
        %v5236 = vrot.slane %v4929, 4
        %v5237 = vsel %vm2441, %v5236, %v4913
        %v5239 = vunpack.c.l.s4 1934713408
        %v5240 = vunpack.c.0.s8 %v5239
        %v5241 = vperm.slane %v5237, %v5240
        %v5242 = vrot.slane %v5241, 4
        %v5243 = vsel %vm2441, 0.0, %v5242
        %v5244 = vrot.slane %v4961, 4
        %v5245 = vsel %vm2441, %v5244, %v4945
        %v5247 = vunpack.c.l.s4 1934713408
        %v5248 = vunpack.c.0.s8 %v5247
        %v5249 = vperm.slane %v5245, %v5248
        %v5250 = vrot.slane %v5249, 4
        %v5251 = vsel %vm2441, 0.0, %v5250
        %v5252 = vrot.slane %v4867, 4
        %v5253 = vsel %vm2441, %v5252, %v4851
        %v5255 = vunpack.c.l.s4 1934713408
        %v5256 = vunpack.c.0.s8 %v5255
        %v5257 = vperm.slane %v5253, %v5256
        %v5258 = vrot.slane %v5257, 4
        %v5259 = vsel %vm2441, 0.0, %v5258
        %v5260 = vrot.slane %v4899, 4
        %v5261 = vsel %vm2441, %v5260, %v4883
        %v5263 = vunpack.c.l.s4 1934713408
        %v5264 = vunpack.c.0.s8 %v5263
        %v5265 = vperm.slane %v5261, %v5264
        %v5266 = vrot.slane %v5265, 4
        %v5267 = vsel %vm2441, 0.0, %v5266
        %v5268 = vrot.slane %v4931, 4
        %v5269 = vsel %vm2441, %v5268, %v4915
        %v5271 = vunpack.c.l.s4 1934713408
        %v5272 = vunpack.c.0.s8 %v5271
        %v5273 = vperm.slane %v5269, %v5272
        %v5274 = vrot.slane %v5273, 4
        %v5275 = vsel %vm2441, 0.0, %v5274
        %v5276 = vrot.slane %v4963, 4
        %v5277 = vsel %vm2441, %v5276, %v4947
        %v5279 = vunpack.c.l.s4 1934713408
        %v5280 = vunpack.c.0.s8 %v5279
        %v5281 = vperm.slane %v5277, %v5280
        %v5282 = vrot.slane %v5281, 4
        %v5283 = vsel %vm2441, 0.0, %v5282
        %5288 = vst [vmem:[#allocation1] ss:$4 sm:$0xff] %v5033
        %s5289 = scalar_lea.vmem [#allocation1], 1
        %5290 = vst [vmem:[%s5289] ss:$4 sm:$0xff] %v5041
        %s5291 = scalar_lea.vmem [#allocation1], 2
        %5292 = vst [vmem:[%s5291] ss:$4 sm:$0xff] %v5049
        %s5293 = scalar_lea.vmem [#allocation1], 3
        %5294 = vst [vmem:[%s5293] ss:$4 sm:$0xff] %v5057
        %v5295 = vld.sshfl [vmem:[#allocation1] sm:$0xff pattern:$0x73625140]
        %5301 = vst [vmem:[#allocation1] ss:$4 sm:$0xff] %v5035
        %s5302 = scalar_lea.vmem [#allocation1], 1
        %5303 = vst [vmem:[%s5302] ss:$4 sm:$0xff] %v5043
        %s5304 = scalar_lea.vmem [#allocation1], 2
        %5305 = vst [vmem:[%s5304] ss:$4 sm:$0xff] %v5051
        %s5306 = scalar_lea.vmem [#allocation1], 3
        %5307 = vst [vmem:[%s5306] ss:$4 sm:$0xff] %v5059
        %v5308 = vld.sshfl [vmem:[#allocation1] sm:$0xff pattern:$0x73625140]
        %5309 = vrot.lane.b32.xlu0 %v5308, 32
        %v5310 = vpop.permute.xlu0 %5309
        %5316 = vst [vmem:[#allocation1] ss:$4 sm:$0xff] %v5065
        %s5317 = scalar_lea.vmem [#allocation1], 1
        %5318 = vst [vmem:[%s5317] ss:$4 sm:$0xff] %v5073
        %s5319 = scalar_lea.vmem [#allocation1], 2
        %5320 = vst [vmem:[%s5319] ss:$4 sm:$0xff] %v5081
        %s5321 = scalar_lea.vmem [#allocation1], 3
        %5322 = vst [vmem:[%s5321] ss:$4 sm:$0xff] %v5089
        %v5323 = vld.sshfl [vmem:[#allocation1] sm:$0xff pattern:$0x73625140]
        %5324 = vrot.lane.b32.xlu0 %v5323, 64
        %v5325 = vpop.permute.xlu0 %5324
        %5331 = vst [vmem:[#allocation1] ss:$4 sm:$0xff] %v5067
        %s5332 = scalar_lea.vmem [#allocation1], 1
        %5333 = vst [vmem:[%s5332] ss:$4 sm:$0xff] %v5075
        %s5334 = scalar_lea.vmem [#allocation1], 2
        %5335 = vst [vmem:[%s5334] ss:$4 sm:$0xff] %v5083
        %s5336 = scalar_lea.vmem [#allocation1], 3
        %5337 = vst [vmem:[%s5336] ss:$4 sm:$0xff] %v5091
        %v5338 = vld.sshfl [vmem:[#allocation1] sm:$0xff pattern:$0x73625140]
        %5339 = vrot.lane.b32.xlu0 %v5338, 96
        %v5340 = vpop.permute.xlu0 %5339
        %5346 = vst [vmem:[#allocation1] ss:$4 sm:$0xff] %v5097
        %s5347 = scalar_lea.vmem [#allocation1], 1
        %5348 = vst [vmem:[%s5347] ss:$4 sm:$0xff] %v5105
        %s5349 = scalar_lea.vmem [#allocation1], 2
        %5350 = vst [vmem:[%s5349] ss:$4 sm:$0xff] %v5113
        %s5351 = scalar_lea.vmem [#allocation1], 3
        %5352 = vst [vmem:[%s5351] ss:$4 sm:$0xff] %v5121
        %v5353 = vld.sshfl [vmem:[#allocation1] sm:$0xff pattern:$0x73625140]
        %5359 = vst [vmem:[#allocation1] ss:$4 sm:$0xff] %v5099
        %s5360 = scalar_lea.vmem [#allocation1], 1
        %5361 = vst [vmem:[%s5360] ss:$4 sm:$0xff] %v5107
        %s5362 = scalar_lea.vmem [#allocation1], 2
        %5363 = vst [vmem:[%s5362] ss:$4 sm:$0xff] %v5115
        %s5364 = scalar_lea.vmem [#allocation1], 3
        %5365 = vst [vmem:[%s5364] ss:$4 sm:$0xff] %v5123
        %v5366 = vld.sshfl [vmem:[#allocation1] sm:$0xff pattern:$0x73625140]
        %5367 = vrot.lane.b32.xlu0 %v5366, 32
        %v5368 = vpop.permute.xlu0 %5367
        %5374 = vst [vmem:[#allocation1] ss:$4 sm:$0xff] %v5129
        %s5375 = scalar_lea.vmem [#allocation1], 1
        %5376 = vst [vmem:[%s5375] ss:$4 sm:$0xff] %v5137
        %s5377 = scalar_lea.vmem [#allocation1], 2
        %5378 = vst [vmem:[%s5377] ss:$4 sm:$0xff] %v5145
        %s5379 = scalar_lea.vmem [#allocation1], 3
        %5380 = vst [vmem:[%s5379] ss:$4 sm:$0xff] %v5153
        %v5381 = vld.sshfl [vmem:[#allocation1] sm:$0xff pattern:$0x73625140]
        %5382 = vrot.lane.b32.xlu0 %v5381, 64
        %v5383 = vpop.permute.xlu0 %5382
        %5389 = vst [vmem:[#allocation1] ss:$4 sm:$0xff] %v5131
        %s5390 = scalar_lea.vmem [#allocation1], 1
        %5391 = vst [vmem:[%s5390] ss:$4 sm:$0xff] %v5139
        %s5392 = scalar_lea.vmem [#allocation1], 2
        %5393 = vst [vmem:[%s5392] ss:$4 sm:$0xff] %v5147
        %s5394 = scalar_lea.vmem [#allocation1], 3
        %5395 = vst [vmem:[%s5394] ss:$4 sm:$0xff] %v5155
        %v5396 = vld.sshfl [vmem:[#allocation1] sm:$0xff pattern:$0x73625140]
        %5397 = vrot.lane.b32.xlu0 %v5396, 96
        %v5398 = vpop.permute.xlu0 %5397
        %5404 = vst [vmem:[#allocation1] ss:$4 sm:$0xff] %v5161
        %s5405 = scalar_lea.vmem [#allocation1], 1
        %5406 = vst [vmem:[%s5405] ss:$4 sm:$0xff] %v5169
        %s5407 = scalar_lea.vmem [#allocation1], 2
        %5408 = vst [vmem:[%s5407] ss:$4 sm:$0xff] %v5177
        %s5409 = scalar_lea.vmem [#allocation1], 3
        %5410 = vst [vmem:[%s5409] ss:$4 sm:$0xff] %v5185
        %v5411 = vld.sshfl [vmem:[#allocation1] sm:$0xff pattern:$0x73625140]
        %5417 = vst [vmem:[#allocation1] ss:$4 sm:$0xff] %v5163
        %s5418 = scalar_lea.vmem [#allocation1], 1
        %5419 = vst [vmem:[%s5418] ss:$4 sm:$0xff] %v5171
        %s5420 = scalar_lea.vmem [#allocation1], 2
        %5421 = vst [vmem:[%s5420] ss:$4 sm:$0xff] %v5179
        %s5422 = scalar_lea.vmem [#allocation1], 3
        %5423 = vst [vmem:[%s5422] ss:$4 sm:$0xff] %v5187
        %v5424 = vld.sshfl [vmem:[#allocation1] sm:$0xff pattern:$0x73625140]
        %5425 = vrot.lane.b32.xlu0 %v5424, 32
        %v5426 = vpop.permute.xlu0 %5425
        %5432 = vst [vmem:[#allocation1] ss:$4 sm:$0xff] %v5193
        %s5433 = scalar_lea.vmem [#allocation1], 1
        %5434 = vst [vmem:[%s5433] ss:$4 sm:$0xff] %v5201
        %s5435 = scalar_lea.vmem [#allocation1], 2
        %5436 = vst [vmem:[%s5435] ss:$4 sm:$0xff] %v5209
        %s5437 = scalar_lea.vmem [#allocation1], 3
        %5438 = vst [vmem:[%s5437] ss:$4 sm:$0xff] %v5217
        %v5439 = vld.sshfl [vmem:[#allocation1] sm:$0xff pattern:$0x73625140]
        %5440 = vrot.lane.b32.xlu0 %v5439, 64
        %v5441 = vpop.permute.xlu0 %5440
        %5447 = vst [vmem:[#allocation1] ss:$4 sm:$0xff] %v5195
        %s5448 = scalar_lea.vmem [#allocation1], 1
        %5449 = vst [vmem:[%s5448] ss:$4 sm:$0xff] %v5203
        %s5450 = scalar_lea.vmem [#allocation1], 2
        %5451 = vst [vmem:[%s5450] ss:$4 sm:$0xff] %v5211
        %s5452 = scalar_lea.vmem [#allocation1], 3
        %5453 = vst [vmem:[%s5452] ss:$4 sm:$0xff] %v5219
        %v5454 = vld.sshfl [vmem:[#allocation1] sm:$0xff pattern:$0x73625140]
        %5455 = vrot.lane.b32.xlu0 %v5454, 96
        %v5456 = vpop.permute.xlu0 %5455
        %5462 = vst [vmem:[#allocation1] ss:$4 sm:$0xff] %v5225
        %s5463 = scalar_lea.vmem [#allocation1], 1
        %5464 = vst [vmem:[%s5463] ss:$4 sm:$0xff] %v5233
        %s5465 = scalar_lea.vmem [#allocation1], 2
        %5466 = vst [vmem:[%s5465] ss:$4 sm:$0xff] %v5241
        %s5467 = scalar_lea.vmem [#allocation1], 3
        %5468 = vst [vmem:[%s5467] ss:$4 sm:$0xff] %v5249
        %v5469 = vld.sshfl [vmem:[#allocation1] sm:$0xff pattern:$0x73625140]
        %5475 = vst [vmem:[#allocation1] ss:$4 sm:$0xff] %v5227
        %s5476 = scalar_lea.vmem [#allocation1], 1
        %5477 = vst [vmem:[%s5476] ss:$4 sm:$0xff] %v5235
        %s5478 = scalar_lea.vmem [#allocation1], 2
        %5479 = vst [vmem:[%s5478] ss:$4 sm:$0xff] %v5243
        %s5480 = scalar_lea.vmem [#allocation1], 3
        %5481 = vst [vmem:[%s5480] ss:$4 sm:$0xff] %v5251
        %v5482 = vld.sshfl [vmem:[#allocation1] sm:$0xff pattern:$0x73625140]
        %5483 = vrot.lane.b32.xlu0 %v5482, 32
        %v5484 = vpop.permute.xlu0 %5483
        %5490 = vst [vmem:[#allocation1] ss:$4 sm:$0xff] %v5257
        %s5491 = scalar_lea.vmem [#allocation1], 1
        %5492 = vst [vmem:[%s5491] ss:$4 sm:$0xff] %v5265
        %s5493 = scalar_lea.vmem [#allocation1], 2
        %5494 = vst [vmem:[%s5493] ss:$4 sm:$0xff] %v5273
        %s5495 = scalar_lea.vmem [#allocation1], 3
        %5496 = vst [vmem:[%s5495] ss:$4 sm:$0xff] %v5281
        %v5497 = vld.sshfl [vmem:[#allocation1] sm:$0xff pattern:$0x73625140]
        %5498 = vrot.lane.b32.xlu0 %v5497, 64
        %v5499 = vpop.permute.xlu0 %5498
        %5505 = vst [vmem:[#allocation1] ss:$4 sm:$0xff] %v5259
        %s5506 = scalar_lea.vmem [#allocation1], 1
        %5507 = vst [vmem:[%s5506] ss:$4 sm:$0xff] %v5267
        %s5508 = scalar_lea.vmem [#allocation1], 2
        %5509 = vst [vmem:[%s5508] ss:$4 sm:$0xff] %v5275
        %s5510 = scalar_lea.vmem [#allocation1], 3
        %5511 = vst [vmem:[%s5510] ss:$4 sm:$0xff] %v5283
        %v5512 = vld.sshfl [vmem:[#allocation1] sm:$0xff pattern:$0x73625140]
        %5513 = vrot.lane.b32.xlu0 %v5512, 96
        %v5514 = vpop.permute.xlu0 %5513
        %v5516 = vsel %vm4753, %v5295, %v5310
        %v5517 = vsel %vm4755, %v5516, %v5325
        %v5518 = vsel %vm4757, %v5517, %v5340
        %v5519 = vsel %vm4753, %v5353, %v5368
        %v5520 = vsel %vm4755, %v5519, %v5383
        %v5521 = vsel %vm4757, %v5520, %v5398
        %v5522 = vsel %vm4753, %v5411, %v5426
        %v5523 = vsel %vm4755, %v5522, %v5441
        %v5524 = vsel %vm4757, %v5523, %v5456
        %v5525 = vsel %vm4753, %v5469, %v5484
        %v5526 = vsel %vm4755, %v5525, %v5499
        %v5527 = vsel %vm4757, %v5526, %v5514
        %5528 = vst [vmem:[%s269] sm:$0xff] %v5518
        %5529 = vst [vmem:[%s269 + $0x8] sm:$0xff] %v5521
        %5530 = vst [vmem:[%s269 + $0x10] sm:$0xff] %v5524
        %5531 = vst [vmem:[%s269 + $0x18] sm:$0xff] %v5527
        %s5532 = sand.u32 %s141, 1
        %s5533 = scalar_lea.sflag [#allocation3], %s5532
        %s5534 = sand.u32 %s141, 1
        %s5535 = smul.addr %s5534, 32
        %s5536 = scalar_lea.vmem [#allocation2], %s5535
        %s5537 = sand.u32 %s169, 1
        %s5538 = scalar_lea.sflag [#allocation5], %s5537
        %s5539 = sand.u32 %s169, 1
        %s5540 = smul.addr %s5539, 32
        %s5541 = scalar_lea.vmem [#allocation4], %s5540
        // Predicated region
        $region37: #{tpu_custom_call.1} parent=35 // pred_check
          %p5542 = pneg %p151
        $region38: #{tpu_custom_call.1} parent=35 // pred_check_branch
          %5544 = sbr.rel (%p5542) target = $region40
        $region39: #{tpu_custom_call.1} parent=35 // pred_region
          %5546 = vsyncadd %s5533, 0
          %s5547 = smul.addr %s28, 4
          %s5548 = smul.addr %s27, 8
          %s5549 = sadd.s32 %s5547, %s5548
          %s5550 = smul.addr %s5549, 8
          %s5551 = scalar_lea.hbm %s4, %s5550
          %s5553 = sshll.u32 %s5536, 4
          %s5554 = int_to_ptr.vmem [resolvable:$true] %s5553
          %s5555 = sshll.u32 %s5551, 4
          %s5556 = int_to_ptr.hbm [resolvable:$true] %s5555
          %5558 = dma.vmem_to_hbm [thread:$0]  %s5554, 512, %s5556, %s5533
        $region40: #{tpu_custom_call.1} parent=35 // pred_fallthru
          _
        // Predicated region
        $region41: #{tpu_custom_call.1} parent=35 // pred_check
          %p5559 = pneg %p179
        $region42: #{tpu_custom_call.1} parent=35 // pred_check_branch
          %5561 = sbr.rel (%p5559) target = $region44
        $region43: #{tpu_custom_call.1} parent=35 // pred_region
          %5563 = vsyncadd %s5538, 0
          %s5564 = smul.addr %s28, 4
          %s5565 = smul.addr %s27, 8
          %s5566 = sadd.s32 %s5564, %s5565
          %s5567 = smul.addr %s5566, 8
          %s5568 = scalar_lea.hbm %s5, %s5567
          %s5570 = sshll.u32 %s5541, 4
          %s5571 = int_to_ptr.vmem [resolvable:$true] %s5570
          %s5572 = sshll.u32 %s5568, 4
          %s5573 = int_to_ptr.hbm [resolvable:$true] %s5572
          %5575 = dma.vmem_to_hbm [thread:$0]  %s5571, 512, %s5573, %s5538
        $region44: #{tpu_custom_call.1} parent=35 // pred_fallthru
          _
      $region36: #{tpu_custom_call.1} parent=5 // pred_fallthru
        _
      %p5576 = scmp.le.s32.totalorder 2, %s18
      // Predicated region
      $region45: #{tpu_custom_call.1} parent=5 // pred_check
        %p5577 = pneg %p5576
      $region46: #{tpu_custom_call.1} parent=5 // pred_check_branch
        %5579 = sbr.rel (%p5577) target = $region48
      $region47: #{tpu_custom_call.1} parent=5 // pred_region
        %s5580 = ssub.s32 %s18, 2
        // Predicated region
        $region49: #{tpu_custom_call.1} parent=47 // pred_check
          %p5581 = pneg %p157
        $region50: #{tpu_custom_call.1} parent=47 // pred_check_branch
          %5583 = sbr.rel (%p5581) target = $region52
        $region51: #{tpu_custom_call.1} parent=47 // pred_region
          %s5584 = sand.u32 %s142, 1
          %s5585 = scalar_lea.sflag [#allocation3], %s5584
          %s5586 = sand.u32 %s142, 1
          %s5587 = smul.addr %s5586, 32
          %s5588 = scalar_lea.vmem [#allocation2], %s5587
          %5590 = dma.done %s5585, 512
        $region52: #{tpu_custom_call.1} parent=47 // pred_fallthru
          _
        // Predicated region
        $region53: #{tpu_custom_call.1} parent=47 // pred_check
          %p5591 = pneg %p185
        $region54: #{tpu_custom_call.1} parent=47 // pred_check_branch
          %5593 = sbr.rel (%p5591) target = $region56
        $region55: #{tpu_custom_call.1} parent=47 // pred_region
          %s5594 = sand.u32 %s170, 1
          %s5595 = scalar_lea.sflag [#allocation5], %s5594
          %s5596 = sand.u32 %s170, 1
          %s5597 = smul.addr %s5596, 32
          %s5598 = scalar_lea.vmem [#allocation4], %s5597
          %5600 = dma.done %s5595, 512
        $region56: #{tpu_custom_call.1} parent=47 // pred_fallthru
          _
      $region48: #{tpu_custom_call.1} parent=5 // pred_fallthru
        _
    $region6: #{tpu_custom_call.1} parent=1 // loop_footer
      %s22 = sadd.s32 1, %s18
    $region7: #{tpu_custom_call.1} parent=1 // loop_footer_branch
      %17 = sbr.rel target = $region3
    $region8: #{tpu_custom_call.1} parent=1 // loop_exit
      _
    %5601 = vsyncpa [#allocation3], 1
    %s5602 = scalar_lea.sflag [#allocation3], 1
    %5603 = vsyncpa %s5602, 1
    %5604 = vsyncpa [#allocation5], 1
    %s5605 = scalar_lea.sflag [#allocation5], 1
    %5606 = vsyncpa %s5605, 1

</llo_original>
